<compile_context>
chip_gen: v5e
topology: v5e:2x2
jax: 0.10.0
libtpu: 0.0.40
codegen_flags: <defaults>
</compile_context>

<pallas_src>
import functools
import math

import jax
import jax.numpy as jnp
from jax.experimental import pallas as pl
from jax.experimental.pallas import tpu as pltpu


# --------------------------------------------------------------------------- kernel

def _ln(x, g, b):
    mu = jnp.mean(x, axis=-1, keepdims=True)
    var = jnp.mean(jnp.square(x - mu), axis=-1, keepdims=True)
    return (x - mu) * jax.lax.rsqrt(var + 1e-5) * g + b


def _fused_forward_kernel(
    # blocked inputs (auto-pipelined; per-layer weights stacked on a leading L axis)
    x_ref, ew_ref, bias_ref, pe_ref,
    wqkv_ref, bqkv_ref, wo_ref, bo_ref, ln1g_ref, ln1b_ref,
    w1_ref, b1_ref, w2_ref, b2_ref, ln2g_ref, ln2b_ref,
    gcnb_ref, catb_ref, clsb1_ref, clsb2_ref, invc_ref,
    # epilogue-only matrices: left in HBM (memory_space=pl.ANY), DMA'd on last step
    gmat_hbm, gmatT_hbm, adj_hbm, gcnw_hbm, wcath_hbm, wcats_hbm,
    sumw_hbm, clsw1_hbm, clsw2_hbm,
    # output + VMEM-resident activation scratch
    out_ref, h_ref,
    *, B, S, H):
    """Grid axis = transformer layer index. h_ref (VMEM, f32) carries activations."""
    l = pl.program_id(0)
    nl = pl.num_programs(0)
    D = h_ref.shape[-1]
    Dh = D // H
    BS = B * S
    scale = 1.0 / math.sqrt(Dh)

    # ---- layer 0 only: token embedding (bias-free linear), kept resident in VMEM ----
    @pl.when(l == 0)
    def _():
        h_ref[...] = jnp.dot(x_ref[...], ew_ref[...],
                             preferred_element_type=jnp.float32)

    h = h_ref[...]                                                  # (BS, D) f32
    hb = h.astype(jnp.bfloat16)

    # ---- fused QKV projection: one bf16 (D, 3D) matmul, result stays in vregs ----
    qkv = jnp.dot(hb, wqkv_ref[0],
                  preferred_element_type=jnp.float32) + bqkv_ref[0]  # (BS, 3D) f32
    qkv = qkv.reshape(B, S, 3 * D)                                   # leading-dim split

    bias = bias_ref[...]                                             # (B, 1, S) f32
    pe = pe_ref[...].astype(jnp.float32)                             # (B, S, S)

    # ---- attention: per-head static value slices; head merge fused into out-proj ----
    attn = None
    for hh in range(H):
        lo = hh * Dh
        qh = qkv[:, :, lo:lo + Dh].astype(jnp.bfloat16)
        kh = qkv[:, :, D + lo:D + lo + Dh].astype(jnp.bfloat16)
        vh = qkv[:, :, 2 * D + lo:2 * D + lo + Dh].astype(jnp.bfloat16)
        s = jnp.einsum('bqd,bkd->bqk', qh, kh,
                       preferred_element_type=jnp.float32) * scale + bias
        s = s - jnp.max(s, axis=-1, keepdims=True)
        # softmax * diffusion-kernel, renormalized == exp(s)*pe renormalized (exact,
        # single normalization).
        w = jnp.exp(s) * pe
        w = w * pl.reciprocal(jnp.sum(w, axis=-1, keepdims=True) + 1e-6)
        oh = jnp.einsum('bqk,bkd->bqd', w.astype(jnp.bfloat16), vh,
                        preferred_element_type=jnp.float32)          # (B, S, Dh)
        # concat_h(o_h) @ Wo == sum_h o_h @ Wo_h  -> no lane concat
        part = jnp.dot(oh.reshape(BS, Dh).astype(jnp.bfloat16), wo_ref[0, hh],
                       preferred_element_type=jnp.float32)           # (BS, D)
        attn = part if attn is None else attn + part
    attn = attn + bo_ref[0]

    h = _ln(h + attn, ln1g_ref[0], ln1b_ref[0])                      # residual + LN
    ff = jnp.maximum(
        jnp.dot(h.astype(jnp.bfloat16), w1_ref[0],
                preferred_element_type=jnp.float32) + b1_ref[0], 0.0)
    ff = jnp.dot(ff.astype(jnp.bfloat16), w2_ref[0],
                 preferred_element_type=jnp.float32) + b2_ref[0]
    h = _ln(h + ff, ln2g_ref[0], ln2b_ref[0])
    h_ref[...] = h                                                   # carry to next layer

    # ---- last layer only: gather + GCN filter + scatter + linear_cat + pool + cls ----
    @pl.when(l == nl - 1)
    def _():
        NP = gmat_hbm.shape[0]          # padded node count
        CP = out_ref.shape[-1]          # lane-padded class count
        hb16 = h.astype(jnp.bfloat16)

        def epilogue(gmat_b, gmatT_b, adj_b, gcnw_b, wcath_b, wcats_b,
                     sumw_b, clsw1_b, clsw2_b, sems):
            copies = [
                pltpu.make_async_copy(gmat_hbm, gmat_b, sems.at[0]),
                pltpu.make_async_copy(gmatT_hbm, gmatT_b, sems.at[1]),
                pltpu.make_async_copy(adj_hbm, adj_b, sems.at[2]),
                pltpu.make_async_copy(gcnw_hbm, gcnw_b, sems.at[3]),
                pltpu.make_async_copy(wcath_hbm, wcath_b, sems.at[4]),
                pltpu.make_async_copy(wcats_hbm, wcats_b, sems.at[5]),
                pltpu.make_async_copy(sumw_hbm, sumw_b, sems.at[6]),
                pltpu.make_async_copy(clsw1_hbm, clsw1_b, sems.at[7]),
                pltpu.make_async_copy(clsw2_hbm, clsw2_b, sems.at[8]),
            ]
            for c in copies:
                c.start()
            for c in copies:
                c.wait()

            # gather "real" node features: one-hot matmul (NP, BS) @ (BS, D)
            xc = jnp.dot(gmat_b[...], hb16, preferred_element_type=jnp.float32)
            # filter approximation: GCNConv  relu(A_norm @ (xc W) + b)
            xw = jnp.dot(xc.astype(jnp.bfloat16), gcnw_b[...],
                         preferred_element_type=jnp.float32)
            xg = jnp.maximum(
                jnp.dot(adj_b[...], xw.astype(jnp.bfloat16),
                        preferred_element_type=jnp.float32) + gcnb_ref[...], 0.0)
            # scatter back to token grid (padded tokens / padded nodes -> 0)
            scat = jnp.dot(gmatT_b[...], xg.astype(jnp.bfloat16),
                           preferred_element_type=jnp.float32)        # (BS, D)
            # linear_cat(concat(h, filtered)) == two matmuls + bias
            hcat = (jnp.dot(hb16, wcath_b[...], preferred_element_type=jnp.float32)
                    + jnp.dot(scat.astype(jnp.bfloat16), wcats_b[...],
                              preferred_element_type=jnp.float32)
                    + catb_ref[...])                                  # (BS, D)
            # masked mean pool over tokens: 0/1 block-diag sum matmul, f32 1/count scale
            pooled = jnp.dot(sumw_b[...], hcat.astype(jnp.bfloat16),
                             preferred_element_type=jnp.float32) * invc_ref[...]
            # classifier: Linear -> LeakyReLU -> Linear (lane-padded output)
            z = jnp.dot(pooled.astype(jnp.bfloat16), clsw1_b[...],
                        preferred_element_type=jnp.float32) + clsb1_ref[...]
            z = jnp.where(z > 0, z, 0.01 * z)
            z = jnp.dot(z.astype(jnp.bfloat16), clsw2_b[...],
                        preferred_element_type=jnp.float32) + clsb2_ref[...]
            out_ref[...] = z.astype(out_ref.dtype)

        D_ = D
        pl.run_scoped(
            epilogue,
            pltpu.VMEM((NP, BS), jnp.bfloat16),
            pltpu.VMEM((BS, NP), jnp.bfloat16),
            pltpu.VMEM((NP, NP), jnp.bfloat16),
            pltpu.VMEM((D_, D_), jnp.bfloat16),
            pltpu.VMEM((D_, D_), jnp.bfloat16),
            pltpu.VMEM((D_, D_), jnp.bfloat16),
            pltpu.VMEM((B, BS), jnp.bfloat16),
            pltpu.VMEM((D_, D_), jnp.bfloat16),
            pltpu.VMEM((D_, CP), jnp.bfloat16),
            pltpu.SemaphoreType.DMA((9,)),
        )


# ------------------------------------------------------------------------ glue / model

def build_norm_adj(edge_index, num_nodes):
    """Dense symmetric-normalized adjacency with self loops (GCNConv)."""
    src, dst = edge_index[0], edge_index[1]
    a = jnp.zeros((num_nodes, num_nodes), jnp.float32)
    a = a.at[dst, src].set(1.0)
    a = a + jnp.eye(num_nodes, dtype=jnp.float32)
    deg = jnp.sum(a, axis=1)
    dinv = jax.lax.rsqrt(jnp.maximum(deg, 1e-12))
    return dinv[:, None] * a * dinv[None, :]


def init_params(key, in_size, d_model, nb_heads, dff, nb_layers, nb_class):
    assert d_model % nb_heads == 0
    D, L, Dh = d_model, nb_layers, d_model // nb_heads

    def nrm(k, shape, scale=0.1, dtype=jnp.bfloat16):
        return (scale * jax.random.normal(k, shape)).astype(dtype)

    keys = iter(jax.random.split(key, 32))
    params = {
        "nb_heads": nb_heads,
        # matmul operands in bf16; biases / LN params in f32
        "embed_w": nrm(next(keys), (in_size, D)),
        "wqkv": nrm(next(keys), (L, D, 3 * D)),
        "bqkv": nrm(next(keys), (L, 1, 3 * D), dtype=jnp.float32),
        "wo": nrm(next(keys), (L, nb_heads, Dh, D)),   # per-head out-proj slabs
        "bo": nrm(next(keys), (L, 1, D), dtype=jnp.float32),
        "ln1_g": jnp.ones((L, 1, D), jnp.float32),
        "ln1_b": jnp.zeros((L, 1, D), jnp.float32),
        "w1": nrm(next(keys), (L, D, dff)),
        "b1": nrm(next(keys), (L, 1, dff), dtype=jnp.float32),
        "w2": nrm(next(keys), (L, dff, D)),
        "b2": nrm(next(keys), (L, 1, D), dtype=jnp.float32),
        "ln2_g": jnp.ones((L, 1, D), jnp.float32),
        "ln2_b": jnp.zeros((L, 1, D), jnp.float32),
        # epilogue: GCN filter approximation + linear_cat + classifier
        "gcn_w": nrm(next(keys), (D, D)),
        "gcn_b": nrm(next(keys), (1, D), dtype=jnp.float32),
        "wcat_h": nrm(next(keys), (D, D)),
        "wcat_s": nrm(next(keys), (D, D)),
        "cat_b": nrm(next(keys), (1, D), dtype=jnp.float32),
        "cls_w1": nrm(next(keys), (D, D)),
        "cls_b1": nrm(next(keys), (1, D), dtype=jnp.float32),
        "cls_w2": nrm(next(keys), (D, nb_class)),
        "cls_b2": nrm(next(keys), (1, nb_class), dtype=jnp.float32),
    }
    return params


def diff_graph_transformer_gcn(params, x, edge_index, batch, feature_indices, masks, pe):
    B, S, in_size = x.shape
    D = params["embed_w"].shape[1]
    H = int(params["nb_heads"])
    L = params["wqkv"].shape[0]
    F = params["w1"].shape[2]
    C = params["cls_w2"].shape[1]
    N = feature_indices.shape[0]
    BS = B * S
    CP = 128                            # lane-dense classifier output
    NP = ((N + 15) // 16) * 16          # sublane-friendly node padding (bf16 tiles)

    # -------- cheap one-time preprocessing (index matrices / masks), XLA-side --------
    x2 = x.reshape(BS, in_size).astype(jnp.bfloat16)
    bias = jnp.where(masks, -1e9, 0.0).astype(jnp.float32).reshape(B, 1, S)
    pe16 = pe.astype(jnp.bfloat16)

    # one-hot gather / scatter between real nodes and the padded token grid
    flat_idx = feature_indices[:, 0] * S + feature_indices[:, 1]
    gmat = (flat_idx[:, None] == jnp.arange(BS)[None, :]).astype(jnp.bfloat16)  # (N, BS)
    gmat = jnp.pad(gmat, ((0, NP - N), (0, 0)))
    gmatT = gmat.T                                                              # (BS, NP)

    a_norm = jnp.pad(build_norm_adj(edge_index, N),
                     ((0, NP - N), (0, NP - N))).astype(jnp.bfloat16)           # (NP, NP)

    # masked mean pool = 0/1 block-diag sum matmul (exact in bf16) + f32 1/count
    maskf = (~masks).astype(jnp.float32)
    inv_cnt = 1.0 / jnp.maximum(jnp.sum(maskf, axis=1, keepdims=True), 1.0)     # (B, 1)
    block_diag = ((jnp.arange(BS)[None, :] // S)
                  == jnp.arange(B)[:, None]).astype(jnp.float32)                # (B, BS)
    sumw = (block_diag * maskf.reshape(1, BS)).astype(jnp.bfloat16)             # (B, BS)

    # lane-pad classifier output to CP columns (sliced back after the kernel)
    cls_w2p = jnp.pad(params["cls_w2"], ((0, 0), (0, CP - C)))
    cls_b2p = jnp.pad(params["cls_b2"], ((0, 0), (0, CP - C)))

    # -------- single fused pallas_call --------
    c2 = lambda l: (0, 0)
    c3 = lambda l: (0, 0, 0)
    s3 = lambda l: (l, 0, 0)
    s4 = lambda l: (l, 0, 0, 0)
    anyspec = pl.BlockSpec(memory_space=pl.ANY)

    in_specs = [
        pl.BlockSpec((BS, in_size), c2),        # x2
        pl.BlockSpec((in_size, D), c2),         # embed_w
        pl.BlockSpec((B, 1, S), c3),            # bias
        pl.BlockSpec((B, S, S), c3),            # pe (bf16)
        pl.BlockSpec((1, D, 3 * D), s3),        # wqkv
        pl.BlockSpec((1, 1, 3 * D), s3),        # bqkv
        pl.BlockSpec((1, H, D // H, D), s4),    # wo (per-head)
        pl.BlockSpec((1, 1, D), s3),            # bo
        pl.BlockSpec((1, 1, D), s3),            # ln1_g
        pl.BlockSpec((1, 1, D), s3),            # ln1_b
        pl.BlockSpec((1, D, F), s3),            # w1
        pl.BlockSpec((1, 1, F), s3),            # b1
        pl.BlockSpec((1, F, D), s3),            # w2
        pl.BlockSpec((1, 1, D), s3),            # b2
        pl.BlockSpec((1, 1, D), s3),            # ln2_g
        pl.BlockSpec((1, 1, D), s3),            # ln2_b
        pl.BlockSpec((1, D), c2),               # gcn_b
        pl.BlockSpec((1, D), c2),               # cat_b
        pl.BlockSpec((1, D), c2),               # cls_b1
        pl.BlockSpec((1, CP), c2),              # cls_b2 (padded)
        pl.BlockSpec((B, 1), c2),               # inv_cnt
        anyspec, anyspec, anyspec, anyspec, anyspec, anyspec,   # gmat, gmatT, adj, gcn_w, wcat_h, wcat_s
        anyspec, anyspec, anyspec,                              # sumw, cls_w1, cls_w2p
    ]

    out = pl.pallas_call(
        functools.partial(_fused_forward_kernel, B=B, S=S, H=H),
        out_shape=jax.ShapeDtypeStruct((B, CP), jnp.float32),
        grid=(L,),
        in_specs=in_specs,
        out_specs=pl.BlockSpec((B, CP), c2),
        scratch_shapes=[pltpu.VMEM((BS, D), jnp.float32)],       # resident activations h
        compiler_params=pltpu.CompilerParams(
            # layers carry state through the VMEM scratch -> serial grid axis.
            dimension_semantics=("arbitrary",),
            vmem_limit_bytes=48 * 1024 * 1024,
        ),
    )(x2, params["embed_w"], bias, pe16,
      params["wqkv"], params["bqkv"], params["wo"], params["bo"],
      params["ln1_g"], params["ln1_b"],
      params["w1"], params["b1"], params["w2"], params["b2"],
      params["ln2_g"], params["ln2_b"],
      params["gcn_b"], params["cat_b"], params["cls_b1"], cls_b2p, inv_cnt,
      gmat, gmatT, a_norm, params["gcn_w"], params["wcat_h"], params["wcat_s"],
      sumw, params["cls_w1"], cls_w2p)

    logits = out[:, :C]               # drop lane padding
    return logits


# ----------------------------------------------------------------------------- driver

if __name__ == "__main__":
    key = jax.random.PRNGKey(0)
    B, S, in_size = 2, 8, 6
    d_model, nb_heads, dff, nb_layers, nb_class = 32, 4, 64, 2, 3

    kx, kpe, kp = jax.random.split(key, 3)
    x = jax.random.normal(kx, (B, S, in_size), jnp.float32)
    # diffusion kernel positional encoding (positive, per-graph S x S)
    pe = jax.random.uniform(kpe, (B, S, S), jnp.float32, 0.1, 1.0)
    # key-padding mask: True = padded. graph 0 has 8 nodes, graph 1 has 6 nodes.
    masks = jnp.array([[False] * 8, [False] * 6 + [True] * 2])
    n0, n1 = 8, 6
    feature_indices = jnp.array(
        [[0, i] for i in range(n0)] + [[1, i] for i in range(n1)], jnp.int32)   # (14, 2)
    batch = jnp.array([0] * n0 + [1] * n1, jnp.int32)                           # (14,)
    edges = []
    for i in range(n0 - 1):
        edges += [(i, i + 1), (i + 1, i)]
    for i in range(n1 - 1):
        edges += [(n0 + i, n0 + i + 1), (n0 + i + 1, n0 + i)]
    edge_index = jnp.array(edges, jnp.int32).T                                   # (2, 24)

    params = init_params(kp, in_size, d_model, nb_heads, dff, nb_layers, nb_class)

    logits = diff_graph_transformer_gcn(params, x, edge_index, batch,
                                        feature_indices, masks, pe)
    probs = jax.nn.sigmoid(logits)         # module also returns sigmoid(cls_out)
    jax.block_until_ready((logits, probs))
    assert logits.shape == (B, nb_class)
    print("KERNEL_OK")
</pallas_src>

<mosaic_0001>
module attributes {stable_mosaic.version = 11 : i64} {
  func.func @_fused_forward_kernel(%arg0: i32, %arg1: memref<16x6xbf16, #tpu.memory_space<vmem>>, %arg2: memref<6x32xbf16, #tpu.memory_space<vmem>>, %arg3: memref<2x1x8xf32, #tpu.memory_space<vmem>>, %arg4: memref<2x8x8xbf16, #tpu.memory_space<vmem>>, %arg5: memref<1x32x96xbf16, #tpu.memory_space<vmem>>, %arg6: memref<1x1x96xf32, #tpu.memory_space<vmem>>, %arg7: memref<1x4x8x32xbf16, #tpu.memory_space<vmem>>, %arg8: memref<1x1x32xf32, #tpu.memory_space<vmem>>, %arg9: memref<1x1x32xf32, #tpu.memory_space<vmem>>, %arg10: memref<1x1x32xf32, #tpu.memory_space<vmem>>, %arg11: memref<1x32x64xbf16, #tpu.memory_space<vmem>>, %arg12: memref<1x1x64xf32, #tpu.memory_space<vmem>>, %arg13: memref<1x64x32xbf16, #tpu.memory_space<vmem>>, %arg14: memref<1x1x32xf32, #tpu.memory_space<vmem>>, %arg15: memref<1x1x32xf32, #tpu.memory_space<vmem>>, %arg16: memref<1x1x32xf32, #tpu.memory_space<vmem>>, %arg17: memref<1x32xf32, #tpu.memory_space<vmem>>, %arg18: memref<1x32xf32, #tpu.memory_space<vmem>>, %arg19: memref<1x32xf32, #tpu.memory_space<vmem>>, %arg20: memref<1x128xf32, #tpu.memory_space<vmem>>, %arg21: memref<2x1xf32, #tpu.memory_space<vmem>>, %arg22: memref<16x16xbf16, #tpu.memory_space<any>>, %arg23: memref<16x16xbf16, #tpu.memory_space<any>>, %arg24: memref<16x16xbf16, #tpu.memory_space<any>>, %arg25: memref<32x32xbf16, #tpu.memory_space<any>>, %arg26: memref<32x32xbf16, #tpu.memory_space<any>>, %arg27: memref<32x32xbf16, #tpu.memory_space<any>>, %arg28: memref<2x16xbf16, #tpu.memory_space<any>>, %arg29: memref<32x32xbf16, #tpu.memory_space<any>>, %arg30: memref<32x128xbf16, #tpu.memory_space<any>>, %arg31: memref<2x128xf32, #tpu.memory_space<vmem>>, %arg32: memref<16x32xf32, #tpu.memory_space<vmem>>) attributes {dimension_semantics = [#tpu.dimension_semantics<arbitrary>], iteration_bounds = array<i64: 2>, scalar_prefetch = 0 : i64, scratch_operands = 1 : i64, tpu.core_type = #tpu.core_type<tc>, window_params = [{pipeline_mode = #tpu.pipeline_mode<synchronous>, transform_indices = @transform_0, window_bounds = array<i64: 16, 6>}, {pipeline_mode = #tpu.pipeline_mode<synchronous>, transform_indices = @transform_1, window_bounds = array<i64: 6, 32>}, {pipeline_mode = #tpu.pipeline_mode<synchronous>, transform_indices = @transform_2, window_bounds = array<i64: 2, 1, 8>}, {pipeline_mode = #tpu.pipeline_mode<synchronous>, transform_indices = @transform_3, window_bounds = array<i64: 2, 8, 8>}, {transform_indices = @transform_4, window_bounds = array<i64: 1, 32, 96>}, {transform_indices = @transform_5, window_bounds = array<i64: 1, 1, 96>}, {transform_indices = @transform_6, window_bounds = array<i64: 1, 4, 8, 32>}, {transform_indices = @transform_7, window_bounds = array<i64: 1, 1, 32>}, {transform_indices = @transform_8, window_bounds = array<i64: 1, 1, 32>}, {transform_indices = @transform_9, window_bounds = array<i64: 1, 1, 32>}, {transform_indices = @transform_10, window_bounds = array<i64: 1, 32, 64>}, {transform_indices = @transform_11, window_bounds = array<i64: 1, 1, 64>}, {transform_indices = @transform_12, window_bounds = array<i64: 1, 64, 32>}, {transform_indices = @transform_13, window_bounds = array<i64: 1, 1, 32>}, {transform_indices = @transform_14, window_bounds = array<i64: 1, 1, 32>}, {transform_indices = @transform_15, window_bounds = array<i64: 1, 1, 32>}, {pipeline_mode = #tpu.pipeline_mode<synchronous>, transform_indices = @transform_16, window_bounds = array<i64: 1, 32>}, {pipeline_mode = #tpu.pipeline_mode<synchronous>, transform_indices = @transform_17, window_bounds = array<i64: 1, 32>}, {pipeline_mode = #tpu.pipeline_mode<synchronous>, transform_indices = @transform_18, window_bounds = array<i64: 1, 32>}, {pipeline_mode = #tpu.pipeline_mode<synchronous>, transform_indices = @transform_19, window_bounds = array<i64: 1, 128>}, {pipeline_mode = #tpu.pipeline_mode<synchronous>, transform_indices = @transform_20, window_bounds = array<i64: 2, 1>}, {}, {}, {}, {}, {}, {}, {}, {}, {}, {pipeline_mode = #tpu.pipeline_mode<synchronous>, transform_indices = @transform_30, window_bounds = array<i64: 2, 128>}]} {
    %c0_i32 = arith.constant 0 : i32
    %0 = arith.cmpi eq, %arg0, %c0_i32 : i32
    %1 = arith.extui %0 : i1 to i32
    %c0_i32_0 = arith.constant 0 : i32
    %2 = arith.cmpi ne, %1, %c0_i32_0 : i32
    scf.if %2 {
      %c0_98 = arith.constant 0 : index
      %c0_99 = arith.constant 0 : index
      %223 = vector.load %arg1[%c0_98, %c0_99] : memref<16x6xbf16, #tpu.memory_space<vmem>>, vector<16x6xbf16>
      %c0_100 = arith.constant 0 : index
      %c0_101 = arith.constant 0 : index
      %224 = vector.load %arg2[%c0_100, %c0_101] : memref<6x32xbf16, #tpu.memory_space<vmem>>, vector<6x32xbf16>
      %cst_102 = arith.constant dense<0.000000e+00> : vector<16x32xf32>
      %225 = tpu.matmul %223, %224, %cst_102 {dimension_numbers = #tpu.dot_dimension_numbers<[1], [0], [0], [1], [0, 0, 1, 1], [], []>} : vector<16x6xbf16>, vector<6x32xbf16>, vector<16x32xf32> -> vector<16x32xf32>
      %c0_103 = arith.constant 0 : index
      %c0_104 = arith.constant 0 : index
      %226 = vector.load %arg32[%c0_103, %c0_104] : memref<16x32xf32, #tpu.memory_space<vmem>>, vector<16x32xf32>
      tpu.vector_store %arg32[%c0_103, %c0_104], %225 {strides = array<i32>} : memref<16x32xf32, #tpu.memory_space<vmem>>, vector<16x32xf32>,
    } else {
    }
    %c0 = arith.constant 0 : index
    %c0_1 = arith.constant 0 : index
    %3 = vector.load %arg32[%c0, %c0_1] : memref<16x32xf32, #tpu.memory_space<vmem>>, vector<16x32xf32>
    %4 = arith.truncf %3 : vector<16x32xf32> to vector<16x32xbf16>
    %c0_2 = arith.constant 0 : index
    %c0_3 = arith.constant 0 : index
    %c0_4 = arith.constant 0 : index
    %5 = vector.load %arg5[%c0_2, %c0_3, %c0_4] : memref<1x32x96xbf16, #tpu.memory_space<vmem>>, vector<1x32x96xbf16>
    %6 = vector.shape_cast %5 : vector<1x32x96xbf16> to vector<32x96xbf16>
    %cst = arith.constant dense<0.000000e+00> : vector<16x96xf32>
    %7 = tpu.matmul %4, %6, %cst {dimension_numbers = #tpu.dot_dimension_numbers<[1], [0], [0], [1], [0, 0, 1, 1], [], []>} : vector<16x32xbf16>, vector<32x96xbf16>, vector<16x96xf32> -> vector<16x96xf32>
    %c0_5 = arith.constant 0 : index
    %c0_6 = arith.constant 0 : index
    %c0_7 = arith.constant 0 : index
    %8 = vector.load %arg6[%c0_5, %c0_6, %c0_7] : memref<1x1x96xf32, #tpu.memory_space<vmem>>, vector<1x1x96xf32>
    %9 = vector.shape_cast %8 : vector<1x1x96xf32> to vector<1x96xf32>
    %10 = vector.broadcast %9 : vector<1x96xf32> to vector<16x96xf32>
    %11 = arith.addf %7, %10 : vector<16x96xf32>
    %12 = vector.shape_cast %11 : vector<16x96xf32> to vector<2x8x96xf32>
    %c0_8 = arith.constant 0 : index
    %c0_9 = arith.constant 0 : index
    %c0_10 = arith.constant 0 : index
    %13 = vector.load %arg3[%c0_8, %c0_9, %c0_10] : memref<2x1x8xf32, #tpu.memory_space<vmem>>, vector<2x1x8xf32>
    %c0_11 = arith.constant 0 : index
    %c0_12 = arith.constant 0 : index
    %c0_13 = arith.constant 0 : index
    %14 = vector.load %arg4[%c0_11, %c0_12, %c0_13] : memref<2x8x8xbf16, #tpu.memory_space<vmem>>, vector<2x8x8xbf16>
    %15 = arith.extf %14 : vector<2x8x8xbf16> to vector<2x8x8xf32>
    %16 = vector.extract_strided_slice %12 {offsets = [0, 0, 0], sizes = [2, 8, 8], strides = [1, 1, 1]} : vector<2x8x96xf32> to vector<2x8x8xf32>
    %17 = arith.truncf %16 : vector<2x8x8xf32> to vector<2x8x8xbf16>
    %18 = vector.extract_strided_slice %12 {offsets = [0, 0, 32], sizes = [2, 8, 8], strides = [1, 1, 1]} : vector<2x8x96xf32> to vector<2x8x8xf32>
    %19 = arith.truncf %18 : vector<2x8x8xf32> to vector<2x8x8xbf16>
    %20 = vector.extract_strided_slice %12 {offsets = [0, 0, 64], sizes = [2, 8, 8], strides = [1, 1, 1]} : vector<2x8x96xf32> to vector<2x8x8xf32>
    %21 = arith.truncf %20 : vector<2x8x8xf32> to vector<2x8x8xbf16>
    "tpu.trace_start"() <{level = 10 : i32, message = "bqd,bkd->bqk"}> : () -> ()
    %cst_14 = arith.constant dense<0.000000e+00> : vector<2x8x8xf32>
    %22 = tpu.matmul %17, %19, %cst_14 {dimension_numbers = #tpu.dot_dimension_numbers<[2], [2], [1], [1], [0, 0, 0, 1, 1, 1], [0], [0]>} : vector<2x8x8xbf16>, vector<2x8x8xbf16>, vector<2x8x8xf32> -> vector<2x8x8xf32>
    "tpu.trace_stop"() : () -> ()
    %cst_15 = arith.constant 0.353553385 : f32
    %23 = vector.broadcast %cst_15 : f32 to vector<2x8x8xf32>
    %24 = arith.mulf %22, %23 : vector<2x8x8xf32>
    %25 = vector.broadcast %13 : vector<2x1x8xf32> to vector<2x8x8xf32>
    %26 = arith.addf %24, %25 : vector<2x8x8xf32>
    %cst_16 = arith.constant dense<0xFF800000> : vector<2x8xf32>
    %27 = vector.multi_reduction <maximumf>, %26, %cst_16 [2] : vector<2x8x8xf32> to vector<2x8xf32>
    %28 = vector.shape_cast %27 : vector<2x8xf32> to vector<2x8x1xf32>
    %29 = vector.broadcast %28 : vector<2x8x1xf32> to vector<2x8x8xf32>
    %30 = arith.subf %26, %29 : vector<2x8x8xf32>
    %31 = math.exp %30 : vector<2x8x8xf32>
    %32 = arith.mulf %31, %15 : vector<2x8x8xf32>
    %cst_17 = arith.constant dense<0.000000e+00> : vector<2x8xf32>
    %33 = vector.multi_reduction <add>, %32, %cst_17 [2] : vector<2x8x8xf32> to vector<2x8xf32>
    %34 = vector.shape_cast %33 : vector<2x8xf32> to vector<2x8x1xf32>
    %cst_18 = arith.constant 9.99999997E-7 : f32
    %35 = vector.broadcast %cst_18 : f32 to vector<2x8x1xf32>
    %36 = arith.addf %34, %35 : vector<2x8x1xf32>
    %37 = tpu.reciprocal %36 : vector<2x8x1xf32> -> vector<2x8x1xf32>
    %38 = vector.broadcast %37 : vector<2x8x1xf32> to vector<2x8x8xf32>
    %39 = arith.mulf %32, %38 : vector<2x8x8xf32>
    %40 = arith.truncf %39 : vector<2x8x8xf32> to vector<2x8x8xbf16>
    "tpu.trace_start"() <{level = 10 : i32, message = "bqk,bkd->bqd"}> : () -> ()
    %cst_19 = arith.constant dense<0.000000e+00> : vector<2x8x8xf32>
    %41 = tpu.matmul %40, %21, %cst_19 {dimension_numbers = #tpu.dot_dimension_numbers<[2], [1], [1], [2], [0, 0, 0, 1, 1, 2], [0], [0]>} : vector<2x8x8xbf16>, vector<2x8x8xbf16>, vector<2x8x8xf32> -> vector<2x8x8xf32>
    "tpu.trace_stop"() : () -> ()
    %42 = vector.shape_cast %41 : vector<2x8x8xf32> to vector<16x8xf32>
    %43 = arith.truncf %42 : vector<16x8xf32> to vector<16x8xbf16>
    %c0_20 = arith.constant 0 : index
    %c0_21 = arith.constant 0 : index
    %c0_22 = arith.constant 0 : index
    %c0_23 = arith.constant 0 : index
    %44 = vector.load %arg7[%c0_20, %c0_21, %c0_22, %c0_23] : memref<1x4x8x32xbf16, #tpu.memory_space<vmem>>, vector<1x1x8x32xbf16>
    %45 = vector.shape_cast %44 : vector<1x1x8x32xbf16> to vector<8x32xbf16>
    %cst_24 = arith.constant dense<0.000000e+00> : vector<16x32xf32>
    %46 = tpu.matmul %43, %45, %cst_24 {dimension_numbers = #tpu.dot_dimension_numbers<[1], [0], [0], [1], [0, 0, 1, 1], [], []>} : vector<16x8xbf16>, vector<8x32xbf16>, vector<16x32xf32> -> vector<16x32xf32>
    %47 = vector.extract_strided_slice %12 {offsets = [0, 0, 8], sizes = [2, 8, 8], strides = [1, 1, 1]} : vector<2x8x96xf32> to vector<2x8x8xf32>
    %48 = arith.truncf %47 : vector<2x8x8xf32> to vector<2x8x8xbf16>
    %49 = vector.extract_strided_slice %12 {offsets = [0, 0, 40], sizes = [2, 8, 8], strides = [1, 1, 1]} : vector<2x8x96xf32> to vector<2x8x8xf32>
    %50 = arith.truncf %49 : vector<2x8x8xf32> to vector<2x8x8xbf16>
    %51 = vector.extract_strided_slice %12 {offsets = [0, 0, 72], sizes = [2, 8, 8], strides = [1, 1, 1]} : vector<2x8x96xf32> to vector<2x8x8xf32>
    %52 = arith.truncf %51 : vector<2x8x8xf32> to vector<2x8x8xbf16>
    "tpu.trace_start"() <{level = 10 : i32, message = "bqd,bkd->bqk"}> : () -> ()
    %cst_25 = arith.constant dense<0.000000e+00> : vector<2x8x8xf32>
    %53 = tpu.matmul %48, %50, %cst_25 {dimension_numbers = #tpu.dot_dimension_numbers<[2], [2], [1], [1], [0, 0, 0, 1, 1, 1], [0], [0]>} : vector<2x8x8xbf16>, vector<2x8x8xbf16>, vector<2x8x8xf32> -> vector<2x8x8xf32>
    "tpu.trace_stop"() : () -> ()
    %cst_26 = arith.constant 0.353553385 : f32
    %54 = vector.broadcast %cst_26 : f32 to vector<2x8x8xf32>
    %55 = arith.mulf %53, %54 : vector<2x8x8xf32>
    %56 = vector.broadcast %13 : vector<2x1x8xf32> to vector<2x8x8xf32>
    %57 = arith.addf %55, %56 : vector<2x8x8xf32>
    %cst_27 = arith.constant dense<0xFF800000> : vector<2x8xf32>
    %58 = vector.multi_reduction <maximumf>, %57, %cst_27 [2] : vector<2x8x8xf32> to vector<2x8xf32>
    %59 = vector.shape_cast %58 : vector<2x8xf32> to vector<2x8x1xf32>
    %60 = vector.broadcast %59 : vector<2x8x1xf32> to vector<2x8x8xf32>
    %61 = arith.subf %57, %60 : vector<2x8x8xf32>
    %62 = math.exp %61 : vector<2x8x8xf32>
    %63 = arith.mulf %62, %15 : vector<2x8x8xf32>
    %cst_28 = arith.constant dense<0.000000e+00> : vector<2x8xf32>
    %64 = vector.multi_reduction <add>, %63, %cst_28 [2] : vector<2x8x8xf32> to vector<2x8xf32>
    %65 = vector.shape_cast %64 : vector<2x8xf32> to vector<2x8x1xf32>
    %cst_29 = arith.constant 9.99999997E-7 : f32
    %66 = vector.broadcast %cst_29 : f32 to vector<2x8x1xf32>
    %67 = arith.addf %65, %66 : vector<2x8x1xf32>
    %68 = tpu.reciprocal %67 : vector<2x8x1xf32> -> vector<2x8x1xf32>
    %69 = vector.broadcast %68 : vector<2x8x1xf32> to vector<2x8x8xf32>
    %70 = arith.mulf %63, %69 : vector<2x8x8xf32>
    %71 = arith.truncf %70 : vector<2x8x8xf32> to vector<2x8x8xbf16>
    "tpu.trace_start"() <{level = 10 : i32, message = "bqk,bkd->bqd"}> : () -> ()
    %cst_30 = arith.constant dense<0.000000e+00> : vector<2x8x8xf32>
    %72 = tpu.matmul %71, %52, %cst_30 {dimension_numbers = #tpu.dot_dimension_numbers<[2], [1], [1], [2], [0, 0, 0, 1, 1, 2], [0], [0]>} : vector<2x8x8xbf16>, vector<2x8x8xbf16>, vector<2x8x8xf32> -> vector<2x8x8xf32>
    "tpu.trace_stop"() : () -> ()
    %73 = vector.shape_cast %72 : vector<2x8x8xf32> to vector<16x8xf32>
    %74 = arith.truncf %73 : vector<16x8xf32> to vector<16x8xbf16>
    %c0_31 = arith.constant 0 : index
    %c1 = arith.constant 1 : index
    %c0_32 = arith.constant 0 : index
    %c0_33 = arith.constant 0 : index
    %75 = vector.load %arg7[%c0_31, %c1, %c0_32, %c0_33] : memref<1x4x8x32xbf16, #tpu.memory_space<vmem>>, vector<1x1x8x32xbf16>
    %76 = vector.shape_cast %75 : vector<1x1x8x32xbf16> to vector<8x32xbf16>
    %cst_34 = arith.constant dense<0.000000e+00> : vector<16x32xf32>
    %77 = tpu.matmul %74, %76, %cst_34 {dimension_numbers = #tpu.dot_dimension_numbers<[1], [0], [0], [1], [0, 0, 1, 1], [], []>} : vector<16x8xbf16>, vector<8x32xbf16>, vector<16x32xf32> -> vector<16x32xf32>
    %78 = arith.addf %46, %77 : vector<16x32xf32>
    %79 = vector.extract_strided_slice %12 {offsets = [0, 0, 16], sizes = [2, 8, 8], strides = [1, 1, 1]} : vector<2x8x96xf32> to vector<2x8x8xf32>
    %80 = arith.truncf %79 : vector<2x8x8xf32> to vector<2x8x8xbf16>
    %81 = vector.extract_strided_slice %12 {offsets = [0, 0, 48], sizes = [2, 8, 8], strides = [1, 1, 1]} : vector<2x8x96xf32> to vector<2x8x8xf32>
    %82 = arith.truncf %81 : vector<2x8x8xf32> to vector<2x8x8xbf16>
    %83 = vector.extract_strided_slice %12 {offsets = [0, 0, 80], sizes = [2, 8, 8], strides = [1, 1, 1]} : vector<2x8x96xf32> to vector<2x8x8xf32>
    %84 = arith.truncf %83 : vector<2x8x8xf32> to vector<2x8x8xbf16>
    "tpu.trace_start"() <{level = 10 : i32, message = "bqd,bkd->bqk"}> : () -> ()
    %cst_35 = arith.constant dense<0.000000e+00> : vector<2x8x8xf32>
    %85 = tpu.matmul %80, %82, %cst_35 {dimension_numbers = #tpu.dot_dimension_numbers<[2], [2], [1], [1], [0, 0, 0, 1, 1, 1], [0], [0]>} : vector<2x8x8xbf16>, vector<2x8x8xbf16>, vector<2x8x8xf32> -> vector<2x8x8xf32>
    "tpu.trace_stop"() : () -> ()
    %cst_36 = arith.constant 0.353553385 : f32
    %86 = vector.broadcast %cst_36 : f32 to vector<2x8x8xf32>
    %87 = arith.mulf %85, %86 : vector<2x8x8xf32>
    %88 = vector.broadcast %13 : vector<2x1x8xf32> to vector<2x8x8xf32>
    %89 = arith.addf %87, %88 : vector<2x8x8xf32>
    %cst_37 = arith.constant dense<0xFF800000> : vector<2x8xf32>
    %90 = vector.multi_reduction <maximumf>, %89, %cst_37 [2] : vector<2x8x8xf32> to vector<2x8xf32>
    %91 = vector.shape_cast %90 : vector<2x8xf32> to vector<2x8x1xf32>
    %92 = vector.broadcast %91 : vector<2x8x1xf32> to vector<2x8x8xf32>
    %93 = arith.subf %89, %92 : vector<2x8x8xf32>
    %94 = math.exp %93 : vector<2x8x8xf32>
    %95 = arith.mulf %94, %15 : vector<2x8x8xf32>
    %cst_38 = arith.constant dense<0.000000e+00> : vector<2x8xf32>
    %96 = vector.multi_reduction <add>, %95, %cst_38 [2] : vector<2x8x8xf32> to vector<2x8xf32>
    %97 = vector.shape_cast %96 : vector<2x8xf32> to vector<2x8x1xf32>
    %cst_39 = arith.constant 9.99999997E-7 : f32
    %98 = vector.broadcast %cst_39 : f32 to vector<2x8x1xf32>
    %99 = arith.addf %97, %98 : vector<2x8x1xf32>
    %100 = tpu.reciprocal %99 : vector<2x8x1xf32> -> vector<2x8x1xf32>
    %101 = vector.broadcast %100 : vector<2x8x1xf32> to vector<2x8x8xf32>
    %102 = arith.mulf %95, %101 : vector<2x8x8xf32>
    %103 = arith.truncf %102 : vector<2x8x8xf32> to vector<2x8x8xbf16>
    "tpu.trace_start"() <{level = 10 : i32, message = "bqk,bkd->bqd"}> : () -> ()
    %cst_40 = arith.constant dense<0.000000e+00> : vector<2x8x8xf32>
    %104 = tpu.matmul %103, %84, %cst_40 {dimension_numbers = #tpu.dot_dimension_numbers<[2], [1], [1], [2], [0, 0, 0, 1, 1, 2], [0], [0]>} : vector<2x8x8xbf16>, vector<2x8x8xbf16>, vector<2x8x8xf32> -> vector<2x8x8xf32>
    "tpu.trace_stop"() : () -> ()
    %105 = vector.shape_cast %104 : vector<2x8x8xf32> to vector<16x8xf32>
    %106 = arith.truncf %105 : vector<16x8xf32> to vector<16x8xbf16>
    %c0_41 = arith.constant 0 : index
    %c2 = arith.constant 2 : index
    %c0_42 = arith.constant 0 : index
    %c0_43 = arith.constant 0 : index
    %107 = vector.load %arg7[%c0_41, %c2, %c0_42, %c0_43] : memref<1x4x8x32xbf16, #tpu.memory_space<vmem>>, vector<1x1x8x32xbf16>
    %108 = vector.shape_cast %107 : vector<1x1x8x32xbf16> to vector<8x32xbf16>
    %cst_44 = arith.constant dense<0.000000e+00> : vector<16x32xf32>
    %109 = tpu.matmul %106, %108, %cst_44 {dimension_numbers = #tpu.dot_dimension_numbers<[1], [0], [0], [1], [0, 0, 1, 1], [], []>} : vector<16x8xbf16>, vector<8x32xbf16>, vector<16x32xf32> -> vector<16x32xf32>
    %110 = arith.addf %78, %109 : vector<16x32xf32>
    %111 = vector.extract_strided_slice %12 {offsets = [0, 0, 24], sizes = [2, 8, 8], strides = [1, 1, 1]} : vector<2x8x96xf32> to vector<2x8x8xf32>
    %112 = arith.truncf %111 : vector<2x8x8xf32> to vector<2x8x8xbf16>
    %113 = vector.extract_strided_slice %12 {offsets = [0, 0, 56], sizes = [2, 8, 8], strides = [1, 1, 1]} : vector<2x8x96xf32> to vector<2x8x8xf32>
    %114 = arith.truncf %113 : vector<2x8x8xf32> to vector<2x8x8xbf16>
    %115 = vector.extract_strided_slice %12 {offsets = [0, 0, 88], sizes = [2, 8, 8], strides = [1, 1, 1]} : vector<2x8x96xf32> to vector<2x8x8xf32>
    %116 = arith.truncf %115 : vector<2x8x8xf32> to vector<2x8x8xbf16>
    "tpu.trace_start"() <{level = 10 : i32, message = "bqd,bkd->bqk"}> : () -> ()
    %cst_45 = arith.constant dense<0.000000e+00> : vector<2x8x8xf32>
    %117 = tpu.matmul %112, %114, %cst_45 {dimension_numbers = #tpu.dot_dimension_numbers<[2], [2], [1], [1], [0, 0, 0, 1, 1, 1], [0], [0]>} : vector<2x8x8xbf16>, vector<2x8x8xbf16>, vector<2x8x8xf32> -> vector<2x8x8xf32>
    "tpu.trace_stop"() : () -> ()
    %cst_46 = arith.constant 0.353553385 : f32
    %118 = vector.broadcast %cst_46 : f32 to vector<2x8x8xf32>
    %119 = arith.mulf %117, %118 : vector<2x8x8xf32>
    %120 = vector.broadcast %13 : vector<2x1x8xf32> to vector<2x8x8xf32>
    %121 = arith.addf %119, %120 : vector<2x8x8xf32>
    %cst_47 = arith.constant dense<0xFF800000> : vector<2x8xf32>
    %122 = vector.multi_reduction <maximumf>, %121, %cst_47 [2] : vector<2x8x8xf32> to vector<2x8xf32>
    %123 = vector.shape_cast %122 : vector<2x8xf32> to vector<2x8x1xf32>
    %124 = vector.broadcast %123 : vector<2x8x1xf32> to vector<2x8x8xf32>
    %125 = arith.subf %121, %124 : vector<2x8x8xf32>
    %126 = math.exp %125 : vector<2x8x8xf32>
    %127 = arith.mulf %126, %15 : vector<2x8x8xf32>
    %cst_48 = arith.constant dense<0.000000e+00> : vector<2x8xf32>
    %128 = vector.multi_reduction <add>, %127, %cst_48 [2] : vector<2x8x8xf32> to vector<2x8xf32>
    %129 = vector.shape_cast %128 : vector<2x8xf32> to vector<2x8x1xf32>
    %cst_49 = arith.constant 9.99999997E-7 : f32
    %130 = vector.broadcast %cst_49 : f32 to vector<2x8x1xf32>
    %131 = arith.addf %129, %130 : vector<2x8x1xf32>
    %132 = tpu.reciprocal %131 : vector<2x8x1xf32> -> vector<2x8x1xf32>
    %133 = vector.broadcast %132 : vector<2x8x1xf32> to vector<2x8x8xf32>
    %134 = arith.mulf %127, %133 : vector<2x8x8xf32>
    %135 = arith.truncf %134 : vector<2x8x8xf32> to vector<2x8x8xbf16>
    "tpu.trace_start"() <{level = 10 : i32, message = "bqk,bkd->bqd"}> : () -> ()
    %cst_50 = arith.constant dense<0.000000e+00> : vector<2x8x8xf32>
    %136 = tpu.matmul %135, %116, %cst_50 {dimension_numbers = #tpu.dot_dimension_numbers<[2], [1], [1], [2], [0, 0, 0, 1, 1, 2], [0], [0]>} : vector<2x8x8xbf16>, vector<2x8x8xbf16>, vector<2x8x8xf32> -> vector<2x8x8xf32>
    "tpu.trace_stop"() : () -> ()
    %137 = vector.shape_cast %136 : vector<2x8x8xf32> to vector<16x8xf32>
    %138 = arith.truncf %137 : vector<16x8xf32> to vector<16x8xbf16>
    %c0_51 = arith.constant 0 : index
    %c3 = arith.constant 3 : index
    %c0_52 = arith.constant 0 : index
    %c0_53 = arith.constant 0 : index
    %139 = vector.load %arg7[%c0_51, %c3, %c0_52, %c0_53] : memref<1x4x8x32xbf16, #tpu.memory_space<vmem>>, vector<1x1x8x32xbf16>
    %140 = vector.shape_cast %139 : vector<1x1x8x32xbf16> to vector<8x32xbf16>
    %cst_54 = arith.constant dense<0.000000e+00> : vector<16x32xf32>
    %141 = tpu.matmul %138, %140, %cst_54 {dimension_numbers = #tpu.dot_dimension_numbers<[1], [0], [0], [1], [0, 0, 1, 1], [], []>} : vector<16x8xbf16>, vector<8x32xbf16>, vector<16x32xf32> -> vector<16x32xf32>
    %142 = arith.addf %110, %141 : vector<16x32xf32>
    %c0_55 = arith.constant 0 : index
    %c0_56 = arith.constant 0 : index
    %c0_57 = arith.constant 0 : index
    %143 = vector.load %arg8[%c0_55, %c0_56, %c0_57] : memref<1x1x32xf32, #tpu.memory_space<vmem>>, vector<1x1x32xf32>
    %144 = vector.shape_cast %143 : vector<1x1x32xf32> to vector<1x32xf32>
    %145 = vector.broadcast %144 : vector<1x32xf32> to vector<16x32xf32>
    %146 = arith.addf %142, %145 : vector<16x32xf32>
    %147 = arith.addf %3, %146 : vector<16x32xf32>
    %c0_58 = arith.constant 0 : index
    %c0_59 = arith.constant 0 : index
    %c0_60 = arith.constant 0 : index
    %148 = vector.load %arg9[%c0_58, %c0_59, %c0_60] : memref<1x1x32xf32, #tpu.memory_space<vmem>>, vector<1x1x32xf32>
    %149 = vector.shape_cast %148 : vector<1x1x32xf32> to vector<1x32xf32>
    %c0_61 = arith.constant 0 : index
    %c0_62 = arith.constant 0 : index
    %c0_63 = arith.constant 0 : index
    %150 = vector.load %arg10[%c0_61, %c0_62, %c0_63] : memref<1x1x32xf32, #tpu.memory_space<vmem>>, vector<1x1x32xf32>
    %151 = vector.shape_cast %150 : vector<1x1x32xf32> to vector<1x32xf32>
    %cst_64 = arith.constant dense<0.000000e+00> : vector<16xf32>
    %152 = vector.multi_reduction <add>, %147, %cst_64 [1] : vector<16x32xf32> to vector<16xf32>
    %153 = vector.shape_cast %152 : vector<16xf32> to vector<16x1xf32>
    %cst_65 = arith.constant 3.200000e+01 : f32
    %154 = vector.broadcast %cst_65 : f32 to vector<16x1xf32>
    %155 = arith.divf %153, %154 : vector<16x1xf32>
    %156 = vector.broadcast %155 : vector<16x1xf32> to vector<16x32xf32>
    %157 = arith.subf %147, %156 : vector<16x32xf32>
    %158 = arith.mulf %157, %157 : vector<16x32xf32>
    %cst_66 = arith.constant dense<0.000000e+00> : vector<16xf32>
    %159 = vector.multi_reduction <add>, %158, %cst_66 [1] : vector<16x32xf32> to vector<16xf32>
    %160 = vector.shape_cast %159 : vector<16xf32> to vector<16x1xf32>
    %cst_67 = arith.constant 3.200000e+01 : f32
    %161 = vector.broadcast %cst_67 : f32 to vector<16x1xf32>
    %162 = arith.divf %160, %161 : vector<16x1xf32>
    %163 = vector.broadcast %155 : vector<16x1xf32> to vector<16x32xf32>
    %164 = arith.subf %147, %163 : vector<16x32xf32>
    %cst_68 = arith.constant 9.99999974E-6 : f32
    %165 = vector.broadcast %cst_68 : f32 to vector<16x1xf32>
    %166 = arith.addf %162, %165 : vector<16x1xf32>
    %167 = math.rsqrt %166 : vector<16x1xf32>
    %168 = vector.broadcast %167 : vector<16x1xf32> to vector<16x32xf32>
    %169 = arith.mulf %164, %168 : vector<16x32xf32>
    %170 = vector.broadcast %149 : vector<1x32xf32> to vector<16x32xf32>
    %171 = arith.mulf %169, %170 : vector<16x32xf32>
    %172 = vector.broadcast %151 : vector<1x32xf32> to vector<16x32xf32>
    %173 = arith.addf %171, %172 : vector<16x32xf32>
    %174 = arith.truncf %173 : vector<16x32xf32> to vector<16x32xbf16>
    %c0_69 = arith.constant 0 : index
    %c0_70 = arith.constant 0 : index
    %c0_71 = arith.constant 0 : index
    %175 = vector.load %arg11[%c0_69, %c0_70, %c0_71] : memref<1x32x64xbf16, #tpu.memory_space<vmem>>, vector<1x32x64xbf16>
    %176 = vector.shape_cast %175 : vector<1x32x64xbf16> to vector<32x64xbf16>
    %cst_72 = arith.constant dense<0.000000e+00> : vector<16x64xf32>
    %177 = tpu.matmul %174, %176, %cst_72 {dimension_numbers = #tpu.dot_dimension_numbers<[1], [0], [0], [1], [0, 0, 1, 1], [], []>} : vector<16x32xbf16>, vector<32x64xbf16>, vector<16x64xf32> -> vector<16x64xf32>
    %c0_73 = arith.constant 0 : index
    %c0_74 = arith.constant 0 : index
    %c0_75 = arith.constant 0 : index
    %178 = vector.load %arg12[%c0_73, %c0_74, %c0_75] : memref<1x1x64xf32, #tpu.memory_space<vmem>>, vector<1x1x64xf32>
    %179 = vector.shape_cast %178 : vector<1x1x64xf32> to vector<1x64xf32>
    %180 = vector.broadcast %179 : vector<1x64xf32> to vector<16x64xf32>
    %181 = arith.addf %177, %180 : vector<16x64xf32>
    %cst_76 = arith.constant 0.000000e+00 : f32
    %182 = vector.broadcast %cst_76 : f32 to vector<16x64xf32>
    %183 = arith.maximumf %181, %182 : vector<16x64xf32>
    %184 = arith.truncf %183 : vector<16x64xf32> to vector<16x64xbf16>
    %c0_77 = arith.constant 0 : index
    %c0_78 = arith.constant 0 : index
    %c0_79 = arith.constant 0 : index
    %185 = vector.load %arg13[%c0_77, %c0_78, %c0_79] : memref<1x64x32xbf16, #tpu.memory_space<vmem>>, vector<1x64x32xbf16>
    %186 = vector.shape_cast %185 : vector<1x64x32xbf16> to vector<64x32xbf16>
    %cst_80 = arith.constant dense<0.000000e+00> : vector<16x32xf32>
    %187 = tpu.matmul %184, %186, %cst_80 {dimension_numbers = #tpu.dot_dimension_numbers<[1], [0], [0], [1], [0, 0, 1, 1], [], []>} : vector<16x64xbf16>, vector<64x32xbf16>, vector<16x32xf32> -> vector<16x32xf32>
    %c0_81 = arith.constant 0 : index
    %c0_82 = arith.constant 0 : index
    %c0_83 = arith.constant 0 : index
    %188 = vector.load %arg14[%c0_81, %c0_82, %c0_83] : memref<1x1x32xf32, #tpu.memory_space<vmem>>, vector<1x1x32xf32>
    %189 = vector.shape_cast %188 : vector<1x1x32xf32> to vector<1x32xf32>
    %190 = vector.broadcast %189 : vector<1x32xf32> to vector<16x32xf32>
    %191 = arith.addf %187, %190 : vector<16x32xf32>
    %192 = arith.addf %173, %191 : vector<16x32xf32>
    %c0_84 = arith.constant 0 : index
    %c0_85 = arith.constant 0 : index
    %c0_86 = arith.constant 0 : index
    %193 = vector.load %arg15[%c0_84, %c0_85, %c0_86] : memref<1x1x32xf32, #tpu.memory_space<vmem>>, vector<1x1x32xf32>
    %194 = vector.shape_cast %193 : vector<1x1x32xf32> to vector<1x32xf32>
    %c0_87 = arith.constant 0 : index
    %c0_88 = arith.constant 0 : index
    %c0_89 = arith.constant 0 : index
    %195 = vector.load %arg16[%c0_87, %c0_88, %c0_89] : memref<1x1x32xf32, #tpu.memory_space<vmem>>, vector<1x1x32xf32>
    %196 = vector.shape_cast %195 : vector<1x1x32xf32> to vector<1x32xf32>
    %cst_90 = arith.constant dense<0.000000e+00> : vector<16xf32>
    %197 = vector.multi_reduction <add>, %192, %cst_90 [1] : vector<16x32xf32> to vector<16xf32>
    %198 = vector.shape_cast %197 : vector<16xf32> to vector<16x1xf32>
    %cst_91 = arith.constant 3.200000e+01 : f32
    %199 = vector.broadcast %cst_91 : f32 to vector<16x1xf32>
    %200 = arith.divf %198, %199 : vector<16x1xf32>
    %201 = vector.broadcast %200 : vector<16x1xf32> to vector<16x32xf32>
    %202 = arith.subf %192, %201 : vector<16x32xf32>
    %203 = arith.mulf %202, %202 : vector<16x32xf32>
    %cst_92 = arith.constant dense<0.000000e+00> : vector<16xf32>
    %204 = vector.multi_reduction <add>, %203, %cst_92 [1] : vector<16x32xf32> to vector<16xf32>
    %205 = vector.shape_cast %204 : vector<16xf32> to vector<16x1xf32>
    %cst_93 = arith.constant 3.200000e+01 : f32
    %206 = vector.broadcast %cst_93 : f32 to vector<16x1xf32>
    %207 = arith.divf %205, %206 : vector<16x1xf32>
    %208 = vector.broadcast %200 : vector<16x1xf32> to vector<16x32xf32>
    %209 = arith.subf %192, %208 : vector<16x32xf32>
    %cst_94 = arith.constant 9.99999974E-6 : f32
    %210 = vector.broadcast %cst_94 : f32 to vector<16x1xf32>
    %211 = arith.addf %207, %210 : vector<16x1xf32>
    %212 = math.rsqrt %211 : vector<16x1xf32>
    %213 = vector.broadcast %212 : vector<16x1xf32> to vector<16x32xf32>
    %214 = arith.mulf %209, %213 : vector<16x32xf32>
    %215 = vector.broadcast %194 : vector<1x32xf32> to vector<16x32xf32>
    %216 = arith.mulf %214, %215 : vector<16x32xf32>
    %217 = vector.broadcast %196 : vector<1x32xf32> to vector<16x32xf32>
    %218 = arith.addf %216, %217 : vector<16x32xf32>
    %c0_95 = arith.constant 0 : index
    %c0_96 = arith.constant 0 : index
    %219 = vector.load %arg32[%c0_95, %c0_96] : memref<16x32xf32, #tpu.memory_space<vmem>>, vector<16x32xf32>
    tpu.vector_store %arg32[%c0_95, %c0_96], %218 {strides = array<i32>} : memref<16x32xf32, #tpu.memory_space<vmem>>, vector<16x32xf32>,
    %c1_i32 = arith.constant 1 : i32
    %220 = arith.cmpi eq, %arg0, %c1_i32 : i32
    %221 = arith.extui %220 : i1 to i32
    %c0_i32_97 = arith.constant 0 : i32
    %222 = arith.cmpi ne, %221, %c0_i32_97 : i32
    scf.if %222 {
      %223 = arith.truncf %218 : vector<16x32xf32> to vector<16x32xbf16>
      "tpu.region"() ({
        %alloca = memref.alloca() : memref<16x16xbf16, #tpu.memory_space<vmem>>
        %alloca_98 = memref.alloca() : memref<16x16xbf16, #tpu.memory_space<vmem>>
        %alloca_99 = memref.alloca() : memref<16x16xbf16, #tpu.memory_space<vmem>>
        %alloca_100 = memref.alloca() : memref<32x32xbf16, #tpu.memory_space<vmem>>
        %alloca_101 = memref.alloca() : memref<32x32xbf16, #tpu.memory_space<vmem>>
        %alloca_102 = memref.alloca() : memref<32x32xbf16, #tpu.memory_space<vmem>>
        %alloca_103 = memref.alloca() : memref<2x16xbf16, #tpu.memory_space<vmem>>
        %alloca_104 = memref.alloca() : memref<32x32xbf16, #tpu.memory_space<vmem>>
        %alloca_105 = memref.alloca() : memref<32x128xbf16, #tpu.memory_space<vmem>>
        %224 = tpu.sem_alloc : memref<9x!tpu.dma_semaphore, #tpu.memory_space<semaphore_mem>>
        %c0_i32_106 = arith.constant 0 : i32
        %225 = tpu.memref_slice %224[%c0_i32_106] : memref<9x!tpu.dma_semaphore, #tpu.memory_space<semaphore_mem>> -> memref<1x!tpu.dma_semaphore, #tpu.memory_space<semaphore_mem>>
        %226 = tpu.memref_squeeze %225 : memref<1x!tpu.dma_semaphore, #tpu.memory_space<semaphore_mem>> -> memref<!tpu.dma_semaphore, #tpu.memory_space<semaphore_mem>>
        tpu.enqueue_dma source(%arg22 : memref<16x16xbf16, #tpu.memory_space<any>>) target(%alloca : memref<16x16xbf16, #tpu.memory_space<vmem>>) target_semaphore(%226 : memref<!tpu.dma_semaphore, #tpu.memory_space<semaphore_mem>>)
        %c1_i32_107 = arith.constant 1 : i32
        %227 = tpu.memref_slice %224[%c1_i32_107] : memref<9x!tpu.dma_semaphore, #tpu.memory_space<semaphore_mem>> -> memref<1x!tpu.dma_semaphore, #tpu.memory_space<semaphore_mem>>
        %228 = tpu.memref_squeeze %227 : memref<1x!tpu.dma_semaphore, #tpu.memory_space<semaphore_mem>> -> memref<!tpu.dma_semaphore, #tpu.memory_space<semaphore_mem>>
        tpu.enqueue_dma source(%arg23 : memref<16x16xbf16, #tpu.memory_space<any>>) target(%alloca_98 : memref<16x16xbf16, #tpu.memory_space<vmem>>) target_semaphore(%228 : memref<!tpu.dma_semaphore, #tpu.memory_space<semaphore_mem>>)
        %c2_i32 = arith.constant 2 : i32
        %229 = tpu.memref_slice %224[%c2_i32] : memref<9x!tpu.dma_semaphore, #tpu.memory_space<semaphore_mem>> -> memref<1x!tpu.dma_semaphore, #tpu.memory_space<semaphore_mem>>
        %230 = tpu.memref_squeeze %229 : memref<1x!tpu.dma_semaphore, #tpu.memory_space<semaphore_mem>> -> memref<!tpu.dma_semaphore, #tpu.memory_space<semaphore_mem>>
        tpu.enqueue_dma source(%arg24 : memref<16x16xbf16, #tpu.memory_space<any>>) target(%alloca_99 : memref<16x16xbf16, #tpu.memory_space<vmem>>) target_semaphore(%230 : memref<!tpu.dma_semaphore, #tpu.memory_space<semaphore_mem>>)
        %c3_i32 = arith.constant 3 : i32
        %231 = tpu.memref_slice %224[%c3_i32] : memref<9x!tpu.dma_semaphore, #tpu.memory_space<semaphore_mem>> -> memref<1x!tpu.dma_semaphore, #tpu.memory_space<semaphore_mem>>
        %232 = tpu.memref_squeeze %231 : memref<1x!tpu.dma_semaphore, #tpu.memory_space<semaphore_mem>> -> memref<!tpu.dma_semaphore, #tpu.memory_space<semaphore_mem>>
        tpu.enqueue_dma source(%arg25 : memref<32x32xbf16, #tpu.memory_space<any>>) target(%alloca_100 : memref<32x32xbf16, #tpu.memory_space<vmem>>) target_semaphore(%232 : memref<!tpu.dma_semaphore, #tpu.memory_space<semaphore_mem>>)
        %c4_i32 = arith.constant 4 : i32
        %233 = tpu.memref_slice %224[%c4_i32] : memref<9x!tpu.dma_semaphore, #tpu.memory_space<semaphore_mem>> -> memref<1x!tpu.dma_semaphore, #tpu.memory_space<semaphore_mem>>
        %234 = tpu.memref_squeeze %233 : memref<1x!tpu.dma_semaphore, #tpu.memory_space<semaphore_mem>> -> memref<!tpu.dma_semaphore, #tpu.memory_space<semaphore_mem>>
        tpu.enqueue_dma source(%arg26 : memref<32x32xbf16, #tpu.memory_space<any>>) target(%alloca_101 : memref<32x32xbf16, #tpu.memory_space<vmem>>) target_semaphore(%234 : memref<!tpu.dma_semaphore, #tpu.memory_space<semaphore_mem>>)
        %c5_i32 = arith.constant 5 : i32
        %235 = tpu.memref_slice %224[%c5_i32] : memref<9x!tpu.dma_semaphore, #tpu.memory_space<semaphore_mem>> -> memref<1x!tpu.dma_semaphore, #tpu.memory_space<semaphore_mem>>
        %236 = tpu.memref_squeeze %235 : memref<1x!tpu.dma_semaphore, #tpu.memory_space<semaphore_mem>> -> memref<!tpu.dma_semaphore, #tpu.memory_space<semaphore_mem>>
        tpu.enqueue_dma source(%arg27 : memref<32x32xbf16, #tpu.memory_space<any>>) target(%alloca_102 : memref<32x32xbf16, #tpu.memory_space<vmem>>) target_semaphore(%236 : memref<!tpu.dma_semaphore, #tpu.memory_space<semaphore_mem>>)
        %c6_i32 = arith.constant 6 : i32
        %237 = tpu.memref_slice %224[%c6_i32] : memref<9x!tpu.dma_semaphore, #tpu.memory_space<semaphore_mem>> -> memref<1x!tpu.dma_semaphore, #tpu.memory_space<semaphore_mem>>
        %238 = tpu.memref_squeeze %237 : memref<1x!tpu.dma_semaphore, #tpu.memory_space<semaphore_mem>> -> memref<!tpu.dma_semaphore, #tpu.memory_space<semaphore_mem>>
        tpu.enqueue_dma source(%arg28 : memref<2x16xbf16, #tpu.memory_space<any>>) target(%alloca_103 : memref<2x16xbf16, #tpu.memory_space<vmem>>) target_semaphore(%238 : memref<!tpu.dma_semaphore, #tpu.memory_space<semaphore_mem>>)
        %c7_i32 = arith.constant 7 : i32
        %239 = tpu.memref_slice %224[%c7_i32] : memref<9x!tpu.dma_semaphore, #tpu.memory_space<semaphore_mem>> -> memref<1x!tpu.dma_semaphore, #tpu.memory_space<semaphore_mem>>
        %240 = tpu.memref_squeeze %239 : memref<1x!tpu.dma_semaphore, #tpu.memory_space<semaphore_mem>> -> memref<!tpu.dma_semaphore, #tpu.memory_space<semaphore_mem>>
        tpu.enqueue_dma source(%arg29 : memref<32x32xbf16, #tpu.memory_space<any>>) target(%alloca_104 : memref<32x32xbf16, #tpu.memory_space<vmem>>) target_semaphore(%240 : memref<!tpu.dma_semaphore, #tpu.memory_space<semaphore_mem>>)
        %c8_i32 = arith.constant 8 : i32
        %241 = tpu.memref_slice %224[%c8_i32] : memref<9x!tpu.dma_semaphore, #tpu.memory_space<semaphore_mem>> -> memref<1x!tpu.dma_semaphore, #tpu.memory_space<semaphore_mem>>
        %242 = tpu.memref_squeeze %241 : memref<1x!tpu.dma_semaphore, #tpu.memory_space<semaphore_mem>> -> memref<!tpu.dma_semaphore, #tpu.memory_space<semaphore_mem>>
        tpu.enqueue_dma source(%arg30 : memref<32x128xbf16, #tpu.memory_space<any>>) target(%alloca_105 : memref<32x128xbf16, #tpu.memory_space<vmem>>) target_semaphore(%242 : memref<!tpu.dma_semaphore, #tpu.memory_space<semaphore_mem>>)
        %c0_i32_108 = arith.constant 0 : i32
        %243 = tpu.memref_slice %224[%c0_i32_108] : memref<9x!tpu.dma_semaphore, #tpu.memory_space<semaphore_mem>> -> memref<1x!tpu.dma_semaphore, #tpu.memory_space<semaphore_mem>>
        %244 = tpu.memref_squeeze %243 : memref<1x!tpu.dma_semaphore, #tpu.memory_space<semaphore_mem>> -> memref<!tpu.dma_semaphore, #tpu.memory_space<semaphore_mem>>
        tpu.wait_dma2 semaphore(%244 : memref<!tpu.dma_semaphore, #tpu.memory_space<semaphore_mem>>) src(%arg22 : memref<16x16xbf16, #tpu.memory_space<any>>) dst(%alloca : memref<16x16xbf16, #tpu.memory_space<vmem>>)
        %c1_i32_109 = arith.constant 1 : i32
        %245 = tpu.memref_slice %224[%c1_i32_109] : memref<9x!tpu.dma_semaphore, #tpu.memory_space<semaphore_mem>> -> memref<1x!tpu.dma_semaphore, #tpu.memory_space<semaphore_mem>>
        %246 = tpu.memref_squeeze %245 : memref<1x!tpu.dma_semaphore, #tpu.memory_space<semaphore_mem>> -> memref<!tpu.dma_semaphore, #tpu.memory_space<semaphore_mem>>
        tpu.wait_dma2 semaphore(%246 : memref<!tpu.dma_semaphore, #tpu.memory_space<semaphore_mem>>) src(%arg23 : memref<16x16xbf16, #tpu.memory_space<any>>) dst(%alloca_98 : memref<16x16xbf16, #tpu.memory_space<vmem>>)
        %c2_i32_110 = arith.constant 2 : i32
        %247 = tpu.memref_slice %224[%c2_i32_110] : memref<9x!tpu.dma_semaphore, #tpu.memory_space<semaphore_mem>> -> memref<1x!tpu.dma_semaphore, #tpu.memory_space<semaphore_mem>>
        %248 = tpu.memref_squeeze %247 : memref<1x!tpu.dma_semaphore, #tpu.memory_space<semaphore_mem>> -> memref<!tpu.dma_semaphore, #tpu.memory_space<semaphore_mem>>
        tpu.wait_dma2 semaphore(%248 : memref<!tpu.dma_semaphore, #tpu.memory_space<semaphore_mem>>) src(%arg24 : memref<16x16xbf16, #tpu.memory_space<any>>) dst(%alloca_99 : memref<16x16xbf16, #tpu.memory_space<vmem>>)
        %c3_i32_111 = arith.constant 3 : i32
        %249 = tpu.memref_slice %224[%c3_i32_111] : memref<9x!tpu.dma_semaphore, #tpu.memory_space<semaphore_mem>> -> memref<1x!tpu.dma_semaphore, #tpu.memory_space<semaphore_mem>>
        %250 = tpu.memref_squeeze %249 : memref<1x!tpu.dma_semaphore, #tpu.memory_space<semaphore_mem>> -> memref<!tpu.dma_semaphore, #tpu.memory_space<semaphore_mem>>
        tpu.wait_dma2 semaphore(%250 : memref<!tpu.dma_semaphore, #tpu.memory_space<semaphore_mem>>) src(%arg25 : memref<32x32xbf16, #tpu.memory_space<any>>) dst(%alloca_100 : memref<32x32xbf16, #tpu.memory_space<vmem>>)
        %c4_i32_112 = arith.constant 4 : i32
        %251 = tpu.memref_slice %224[%c4_i32_112] : memref<9x!tpu.dma_semaphore, #tpu.memory_space<semaphore_mem>> -> memref<1x!tpu.dma_semaphore, #tpu.memory_space<semaphore_mem>>
        %252 = tpu.memref_squeeze %251 : memref<1x!tpu.dma_semaphore, #tpu.memory_space<semaphore_mem>> -> memref<!tpu.dma_semaphore, #tpu.memory_space<semaphore_mem>>
        tpu.wait_dma2 semaphore(%252 : memref<!tpu.dma_semaphore, #tpu.memory_space<semaphore_mem>>) src(%arg26 : memref<32x32xbf16, #tpu.memory_space<any>>) dst(%alloca_101 : memref<32x32xbf16, #tpu.memory_space<vmem>>)
        %c5_i32_113 = arith.constant 5 : i32
        %253 = tpu.memref_slice %224[%c5_i32_113] : memref<9x!tpu.dma_semaphore, #tpu.memory_space<semaphore_mem>> -> memref<1x!tpu.dma_semaphore, #tpu.memory_space<semaphore_mem>>
        %254 = tpu.memref_squeeze %253 : memref<1x!tpu.dma_semaphore, #tpu.memory_space<semaphore_mem>> -> memref<!tpu.dma_semaphore, #tpu.memory_space<semaphore_mem>>
        tpu.wait_dma2 semaphore(%254 : memref<!tpu.dma_semaphore, #tpu.memory_space<semaphore_mem>>) src(%arg27 : memref<32x32xbf16, #tpu.memory_space<any>>) dst(%alloca_102 : memref<32x32xbf16, #tpu.memory_space<vmem>>)
        %c6_i32_114 = arith.constant 6 : i32
        %255 = tpu.memref_slice %224[%c6_i32_114] : memref<9x!tpu.dma_semaphore, #tpu.memory_space<semaphore_mem>> -> memref<1x!tpu.dma_semaphore, #tpu.memory_space<semaphore_mem>>
        %256 = tpu.memref_squeeze %255 : memref<1x!tpu.dma_semaphore, #tpu.memory_space<semaphore_mem>> -> memref<!tpu.dma_semaphore, #tpu.memory_space<semaphore_mem>>
        tpu.wait_dma2 semaphore(%256 : memref<!tpu.dma_semaphore, #tpu.memory_space<semaphore_mem>>) src(%arg28 : memref<2x16xbf16, #tpu.memory_space<any>>) dst(%alloca_103 : memref<2x16xbf16, #tpu.memory_space<vmem>>)
        %c7_i32_115 = arith.constant 7 : i32
        %257 = tpu.memref_slice %224[%c7_i32_115] : memref<9x!tpu.dma_semaphore, #tpu.memory_space<semaphore_mem>> -> memref<1x!tpu.dma_semaphore, #tpu.memory_space<semaphore_mem>>
        %258 = tpu.memref_squeeze %257 : memref<1x!tpu.dma_semaphore, #tpu.memory_space<semaphore_mem>> -> memref<!tpu.dma_semaphore, #tpu.memory_space<semaphore_mem>>
        tpu.wait_dma2 semaphore(%258 : memref<!tpu.dma_semaphore, #tpu.memory_space<semaphore_mem>>) src(%arg29 : memref<32x32xbf16, #tpu.memory_space<any>>) dst(%alloca_104 : memref<32x32xbf16, #tpu.memory_space<vmem>>)
        %c8_i32_116 = arith.constant 8 : i32
        %259 = tpu.memref_slice %224[%c8_i32_116] : memref<9x!tpu.dma_semaphore, #tpu.memory_space<semaphore_mem>> -> memref<1x!tpu.dma_semaphore, #tpu.memory_space<semaphore_mem>>
        %260 = tpu.memref_squeeze %259 : memref<1x!tpu.dma_semaphore, #tpu.memory_space<semaphore_mem>> -> memref<!tpu.dma_semaphore, #tpu.memory_space<semaphore_mem>>
        tpu.wait_dma2 semaphore(%260 : memref<!tpu.dma_semaphore, #tpu.memory_space<semaphore_mem>>) src(%arg30 : memref<32x128xbf16, #tpu.memory_space<any>>) dst(%alloca_105 : memref<32x128xbf16, #tpu.memory_space<vmem>>)
        %c0_117 = arith.constant 0 : index
        %c0_118 = arith.constant 0 : index
        %261 = vector.load %alloca[%c0_117, %c0_118] : memref<16x16xbf16, #tpu.memory_space<vmem>>, vector<16x16xbf16>
        %cst_119 = arith.constant dense<0.000000e+00> : vector<16x32xf32>
        %262 = tpu.matmul %261, %223, %cst_119 {dimension_numbers = #tpu.dot_dimension_numbers<[1], [0], [0], [1], [0, 0, 1, 1], [], []>} : vector<16x16xbf16>, vector<16x32xbf16>, vector<16x32xf32> -> vector<16x32xf32>
        %263 = arith.truncf %262 : vector<16x32xf32> to vector<16x32xbf16>
        %c0_120 = arith.constant 0 : index
        %c0_121 = arith.constant 0 : index
        %264 = vector.load %alloca_100[%c0_120, %c0_121] : memref<32x32xbf16, #tpu.memory_space<vmem>>, vector<32x32xbf16>
        %cst_122 = arith.constant dense<0.000000e+00> : vector<16x32xf32>
        %265 = tpu.matmul %263, %264, %cst_122 {dimension_numbers = #tpu.dot_dimension_numbers<[1], [0], [0], [1], [0, 0, 1, 1], [], []>} : vector<16x32xbf16>, vector<32x32xbf16>, vector<16x32xf32> -> vector<16x32xf32>
        %c0_123 = arith.constant 0 : index
        %c0_124 = arith.constant 0 : index
        %266 = vector.load %alloca_99[%c0_123, %c0_124] : memref<16x16xbf16, #tpu.memory_space<vmem>>, vector<16x16xbf16>
        %267 = arith.truncf %265 : vector<16x32xf32> to vector<16x32xbf16>
        %cst_125 = arith.constant dense<0.000000e+00> : vector<16x32xf32>
        %268 = tpu.matmul %266, %267, %cst_125 {dimension_numbers = #tpu.dot_dimension_numbers<[1], [0], [0], [1], [0, 0, 1, 1], [], []>} : vector<16x16xbf16>, vector<16x32xbf16>, vector<16x32xf32> -> vector<16x32xf32>
        %c0_126 = arith.constant 0 : index
        %c0_127 = arith.constant 0 : index
        %269 = vector.load %arg17[%c0_126, %c0_127] : memref<1x32xf32, #tpu.memory_space<vmem>>, vector<1x32xf32>
        %270 = vector.broadcast %269 : vector<1x32xf32> to vector<16x32xf32>
        %271 = arith.addf %268, %270 : vector<16x32xf32>
        %cst_128 = arith.constant 0.000000e+00 : f32
        %272 = vector.broadcast %cst_128 : f32 to vector<16x32xf32>
        %273 = arith.maximumf %271, %272 : vector<16x32xf32>
        %c0_129 = arith.constant 0 : index
        %c0_130 = arith.constant 0 : index
        %274 = vector.load %alloca_98[%c0_129, %c0_130] : memref<16x16xbf16, #tpu.memory_space<vmem>>, vector<16x16xbf16>
        %275 = arith.truncf %273 : vector<16x32xf32> to vector<16x32xbf16>
        %cst_131 = arith.constant dense<0.000000e+00> : vector<16x32xf32>
        %276 = tpu.matmul %274, %275, %cst_131 {dimension_numbers = #tpu.dot_dimension_numbers<[1], [0], [0], [1], [0, 0, 1, 1], [], []>} : vector<16x16xbf16>, vector<16x32xbf16>, vector<16x32xf32> -> vector<16x32xf32>
        %c0_132 = arith.constant 0 : index
        %c0_133 = arith.constant 0 : index
        %277 = vector.load %alloca_101[%c0_132, %c0_133] : memref<32x32xbf16, #tpu.memory_space<vmem>>, vector<32x32xbf16>
        %cst_134 = arith.constant dense<0.000000e+00> : vector<16x32xf32>
        %278 = tpu.matmul %223, %277, %cst_134 {dimension_numbers = #tpu.dot_dimension_numbers<[1], [0], [0], [1], [0, 0, 1, 1], [], []>} : vector<16x32xbf16>, vector<32x32xbf16>, vector<16x32xf32> -> vector<16x32xf32>
        %279 = arith.truncf %276 : vector<16x32xf32> to vector<16x32xbf16>
        %c0_135 = arith.constant 0 : index
        %c0_136 = arith.constant 0 : index
        %280 = vector.load %alloca_102[%c0_135, %c0_136] : memref<32x32xbf16, #tpu.memory_space<vmem>>, vector<32x32xbf16>
        %cst_137 = arith.constant dense<0.000000e+00> : vector<16x32xf32>
        %281 = tpu.matmul %279, %280, %cst_137 {dimension_numbers = #tpu.dot_dimension_numbers<[1], [0], [0], [1], [0, 0, 1, 1], [], []>} : vector<16x32xbf16>, vector<32x32xbf16>, vector<16x32xf32> -> vector<16x32xf32>
        %282 = arith.addf %278, %281 : vector<16x32xf32>
        %c0_138 = arith.constant 0 : index
        %c0_139 = arith.constant 0 : index
        %283 = vector.load %arg18[%c0_138, %c0_139] : memref<1x32xf32, #tpu.memory_space<vmem>>, vector<1x32xf32>
        %284 = vector.broadcast %283 : vector<1x32xf32> to vector<16x32xf32>
        %285 = arith.addf %282, %284 : vector<16x32xf32>
        %c0_140 = arith.constant 0 : index
        %c0_141 = arith.constant 0 : index
        %286 = vector.load %alloca_103[%c0_140, %c0_141] : memref<2x16xbf16, #tpu.memory_space<vmem>>, vector<2x16xbf16>
        %287 = arith.truncf %285 : vector<16x32xf32> to vector<16x32xbf16>
        %cst_142 = arith.constant dense<0.000000e+00> : vector<2x32xf32>
        %288 = tpu.matmul %286, %287, %cst_142 {dimension_numbers = #tpu.dot_dimension_numbers<[1], [0], [0], [1], [0, 0, 1, 1], [], []>} : vector<2x16xbf16>, vector<16x32xbf16>, vector<2x32xf32> -> vector<2x32xf32>
        %c0_143 = arith.constant 0 : index
        %c0_144 = arith.constant 0 : index
        %289 = vector.load %arg21[%c0_143, %c0_144] : memref<2x1xf32, #tpu.memory_space<vmem>>, vector<2x1xf32>
        %290 = vector.broadcast %289 : vector<2x1xf32> to vector<2x32xf32>
        %291 = arith.mulf %288, %290 : vector<2x32xf32>
        %292 = arith.truncf %291 : vector<2x32xf32> to vector<2x32xbf16>
        %c0_145 = arith.constant 0 : index
        %c0_146 = arith.constant 0 : index
        %293 = vector.load %alloca_104[%c0_145, %c0_146] : memref<32x32xbf16, #tpu.memory_space<vmem>>, vector<32x32xbf16>
        %cst_147 = arith.constant dense<0.000000e+00> : vector<2x32xf32>
        %294 = tpu.matmul %292, %293, %cst_147 {dimension_numbers = #tpu.dot_dimension_numbers<[1], [0], [0], [1], [0, 0, 1, 1], [], []>} : vector<2x32xbf16>, vector<32x32xbf16>, vector<2x32xf32> -> vector<2x32xf32>
        %c0_148 = arith.constant 0 : index
        %c0_149 = arith.constant 0 : index
        %295 = vector.load %arg19[%c0_148, %c0_149] : memref<1x32xf32, #tpu.memory_space<vmem>>, vector<1x32xf32>
        %296 = vector.broadcast %295 : vector<1x32xf32> to vector<2x32xf32>
        %297 = arith.addf %294, %296 : vector<2x32xf32>
        %cst_150 = arith.constant 0.000000e+00 : f32
        %298 = vector.broadcast %cst_150 : f32 to vector<2x32xf32>
        %299 = arith.cmpf ogt, %297, %298 : vector<2x32xf32>
        %cst_151 = arith.constant 0.00999999977 : f32
        %300 = vector.broadcast %cst_151 : f32 to vector<2x32xf32>
        %301 = arith.mulf %300, %297 : vector<2x32xf32>
        %302 = arith.select %299, %297, %301 : vector<2x32xi1>, vector<2x32xf32>
        %303 = arith.truncf %302 : vector<2x32xf32> to vector<2x32xbf16>
        %c0_152 = arith.constant 0 : index
        %c0_153 = arith.constant 0 : index
        %304 = vector.load %alloca_105[%c0_152, %c0_153] : memref<32x128xbf16, #tpu.memory_space<vmem>>, vector<32x128xbf16>
        %cst_154 = arith.constant dense<0.000000e+00> : vector<2x128xf32>
        %305 = tpu.matmul %303, %304, %cst_154 {dimension_numbers = #tpu.dot_dimension_numbers<[1], [0], [0], [1], [0, 0, 1, 1], [], []>} : vector<2x32xbf16>, vector<32x128xbf16>, vector<2x128xf32> -> vector<2x128xf32>
        %c0_155 = arith.constant 0 : index
        %c0_156 = arith.constant 0 : index
        %306 = vector.load %arg20[%c0_155, %c0_156] : memref<1x128xf32, #tpu.memory_space<vmem>>, vector<1x128xf32>
        %307 = vector.broadcast %306 : vector<1x128xf32> to vector<2x128xf32>
        %308 = arith.addf %305, %307 : vector<2x128xf32>
        %c0_157 = arith.constant 0 : index
        %c0_158 = arith.constant 0 : index
        %309 = vector.load %arg31[%c0_157, %c0_158] : memref<2x128xf32, #tpu.memory_space<vmem>>, vector<2x128xf32>
        tpu.vector_store %arg31[%c0_157, %c0_158], %308 {strides = array<i32>} : memref<2x128xf32, #tpu.memory_space<vmem>>, vector<2x128xf32>,
        tpu.yield
      }) : () -> ()
    } else {
    }
    return
  }
  func.func @transform_0(%arg0: i32) -> (i32, i32) {
    %c0_i32 = arith.constant 0 : i32
    %c0_i32_0 = arith.constant 0 : i32
    %c0_i32_1 = arith.constant 0 : i32
    return %c0_i32, %c0_i32_0 : i32, i32
  }
  func.func @transform_1(%arg0: i32) -> (i32, i32) {
    %c0_i32 = arith.constant 0 : i32
    %c0_i32_0 = arith.constant 0 : i32
    %c0_i32_1 = arith.constant 0 : i32
    return %c0_i32, %c0_i32_0 : i32, i32
  }
  func.func @transform_2(%arg0: i32) -> (i32, i32, i32) {
    %c0_i32 = arith.constant 0 : i32
    %c0_i32_0 = arith.constant 0 : i32
    %c0_i32_1 = arith.constant 0 : i32
    %c0_i32_2 = arith.constant 0 : i32
    return %c0_i32, %c0_i32_0, %c0_i32_1 : i32, i32, i32
  }
  func.func @transform_3(%arg0: i32) -> (i32, i32, i32) {
    %c0_i32 = arith.constant 0 : i32
    %c0_i32_0 = arith.constant 0 : i32
    %c0_i32_1 = arith.constant 0 : i32
    %c0_i32_2 = arith.constant 0 : i32
    return %c0_i32, %c0_i32_0, %c0_i32_1 : i32, i32, i32
  }
  func.func @transform_4(%arg0: i32) -> (i32, i32, i32) {
    %c0_i32 = arith.constant 0 : i32
    %c0_i32_0 = arith.constant 0 : i32
    %c0_i32_1 = arith.constant 0 : i32
    return %arg0, %c0_i32, %c0_i32_0 : i32, i32, i32
  }
  func.func @transform_5(%arg0: i32) -> (i32, i32, i32) {
    %c0_i32 = arith.constant 0 : i32
    %c0_i32_0 = arith.constant 0 : i32
    %c0_i32_1 = arith.constant 0 : i32
    return %arg0, %c0_i32, %c0_i32_0 : i32, i32, i32
  }
  func.func @transform_6(%arg0: i32) -> (i32, i32, i32, i32) {
    %c0_i32 = arith.constant 0 : i32
    %c0_i32_0 = arith.constant 0 : i32
    %c0_i32_1 = arith.constant 0 : i32
    %c0_i32_2 = arith.constant 0 : i32
    return %arg0, %c0_i32, %c0_i32_0, %c0_i32_1 : i32, i32, i32, i32
  }
  func.func @transform_7(%arg0: i32) -> (i32, i32, i32) {
    %c0_i32 = arith.constant 0 : i32
    %c0_i32_0 = arith.constant 0 : i32
    %c0_i32_1 = arith.constant 0 : i32
    return %arg0, %c0_i32, %c0_i32_0 : i32, i32, i32
  }
  func.func @transform_8(%arg0: i32) -> (i32, i32, i32) {
    %c0_i32 = arith.constant 0 : i32
    %c0_i32_0 = arith.constant 0 : i32
    %c0_i32_1 = arith.constant 0 : i32
    return %arg0, %c0_i32, %c0_i32_0 : i32, i32, i32
  }
  func.func @transform_9(%arg0: i32) -> (i32, i32, i32) {
    %c0_i32 = arith.constant 0 : i32
    %c0_i32_0 = arith.constant 0 : i32
    %c0_i32_1 = arith.constant 0 : i32
    return %arg0, %c0_i32, %c0_i32_0 : i32, i32, i32
  }
  func.func @transform_10(%arg0: i32) -> (i32, i32, i32) {
    %c0_i32 = arith.constant 0 : i32
    %c0_i32_0 = arith.constant 0 : i32
    %c0_i32_1 = arith.constant 0 : i32
    return %arg0, %c0_i32, %c0_i32_0 : i32, i32, i32
  }
  func.func @transform_11(%arg0: i32) -> (i32, i32, i32) {
    %c0_i32 = arith.constant 0 : i32
    %c0_i32_0 = arith.constant 0 : i32
    %c0_i32_1 = arith.constant 0 : i32
    return %arg0, %c0_i32, %c0_i32_0 : i32, i32, i32
  }
  func.func @transform_12(%arg0: i32) -> (i32, i32, i32) {
    %c0_i32 = arith.constant 0 : i32
    %c0_i32_0 = arith.constant 0 : i32
    %c0_i32_1 = arith.constant 0 : i32
    return %arg0, %c0_i32, %c0_i32_0 : i32, i32, i32
  }
  func.func @transform_13(%arg0: i32) -> (i32, i32, i32) {
    %c0_i32 = arith.constant 0 : i32
    %c0_i32_0 = arith.constant 0 : i32
    %c0_i32_1 = arith.constant 0 : i32
    return %arg0, %c0_i32, %c0_i32_0 : i32, i32, i32
  }
  func.func @transform_14(%arg0: i32) -> (i32, i32, i32) {
    %c0_i32 = arith.constant 0 : i32
    %c0_i32_0 = arith.constant 0 : i32
    %c0_i32_1 = arith.constant 0 : i32
    return %arg0, %c0_i32, %c0_i32_0 : i32, i32, i32
  }
  func.func @transform_15(%arg0: i32) -> (i32, i32, i32) {
    %c0_i32 = arith.constant 0 : i32
    %c0_i32_0 = arith.constant 0 : i32
    %c0_i32_1 = arith.constant 0 : i32
    return %arg0, %c0_i32, %c0_i32_0 : i32, i32, i32
  }
  func.func @transform_16(%arg0: i32) -> (i32, i32) {
    %c0_i32 = arith.constant 0 : i32
    %c0_i32_0 = arith.constant 0 : i32
    %c0_i32_1 = arith.constant 0 : i32
    return %c0_i32, %c0_i32_0 : i32, i32
  }
  func.func @transform_17(%arg0: i32) -> (i32, i32) {
    %c0_i32 = arith.constant 0 : i32
    %c0_i32_0 = arith.constant 0 : i32
    %c0_i32_1 = arith.constant 0 : i32
    return %c0_i32, %c0_i32_0 : i32, i32
  }
  func.func @transform_18(%arg0: i32) -> (i32, i32) {
    %c0_i32 = arith.constant 0 : i32
    %c0_i32_0 = arith.constant 0 : i32
    %c0_i32_1 = arith.constant 0 : i32
    return %c0_i32, %c0_i32_0 : i32, i32
  }
  func.func @transform_19(%arg0: i32) -> (i32, i32) {
    %c0_i32 = arith.constant 0 : i32
    %c0_i32_0 = arith.constant 0 : i32
    %c0_i32_1 = arith.constant 0 : i32
    return %c0_i32, %c0_i32_0 : i32, i32
  }
  func.func @transform_20(%arg0: i32) -> (i32, i32) {
    %c0_i32 = arith.constant 0 : i32
    %c0_i32_0 = arith.constant 0 : i32
    %c0_i32_1 = arith.constant 0 : i32
    return %c0_i32, %c0_i32_0 : i32, i32
  }
  func.func @transform_30(%arg0: i32) -> (i32, i32) {
    %c0_i32 = arith.constant 0 : i32
    %c0_i32_0 = arith.constant 0 : i32
    %c0_i32_1 = arith.constant 0 : i32
    return %c0_i32, %c0_i32_0 : i32, i32
  }
}

</mosaic_0001>

<llo_original>
// kernel: tpu_custom_call.1
$region0: #{tpu_custom_call.1}
  #allocation0 [shape = 'u32[]', space=smem, size = 0x4, offset = 0x4, fixed_abs, tag = 'smem constant byte address 0x4 - core index']
  #allocation1 [shape = 'u32[72,128]{1,0:T(1,128)}', space=vmem, size = 0x9000, scoped, tag = 'internal scratch']
  #allocation2 [shape = 'f32[16,32]{1,0:T(8,128)}', space=vmem, size = 0x2000, scoped, tag = 'scratch operand']
  #allocation32 [shape = 's32[]', space=sflag, size = 0x4, offset = 0, fixed_abs, tag = 'sflag constant byte address 0x0 - dummy sync flag']
  #allocation33 [shape = 's32[]', space=sflag, size = 0x4, offset = 0, fixed_abs, tag = 'sflag constant byte address 0x0 - dummy sync flag']
  #allocation34 [shape = 'u32[]', space=smem, size = 0x4, offset = 0x44, fixed_abs, tag = 'smem constant byte address 0x44 - assertion arg 0']
  #allocation35 [shape = 'u32[]', space=smem, size = 0x4, offset = 0x48, fixed_abs, tag = 'smem constant byte address 0x48 - assertion arg 1']
  #allocation36 [shape = 's32[]', space=sflag, size = 0x4, offset = 0, fixed_abs, tag = 'sflag constant byte address 0x0 - dummy sync flag']
  #allocation37 [shape = 's32[]', space=sflag, size = 0x4, offset = 0, fixed_abs, tag = 'sflag constant byte address 0x0 - dummy sync flag']
  #allocation38 [shape = 's32[]', space=sflag, size = 0x4, offset = 0, fixed_abs, tag = 'sflag constant byte address 0x0 - dummy sync flag']
  #allocation39 [shape = 's32[]', space=sflag, size = 0x4, offset = 0, fixed_abs, tag = 'sflag constant byte address 0x0 - dummy sync flag']
  #allocation40 [shape = 's32[]', space=sflag, size = 0x4, offset = 0, fixed_abs, tag = 'sflag constant byte address 0x0 - dummy sync flag']
  #allocation41 [shape = 's32[]', space=sflag, size = 0x4, offset = 0, fixed_abs, tag = 'sflag constant byte address 0x0 - dummy sync flag']
  #allocation42 [shape = 's32[]', space=sflag, size = 0x4, offset = 0, fixed_abs, tag = 'sflag constant byte address 0x0 - dummy sync flag']
  #allocation43 [shape = 's32[]', space=sflag, size = 0x4, offset = 0, fixed_abs, tag = 'sflag constant byte address 0x0 - dummy sync flag']
  #allocation44 [shape = 's32[]', space=sflag, size = 0x4, offset = 0, fixed_abs, tag = 'sflag constant byte address 0x0 - dummy sync flag']
  #allocation45 [shape = 's32[]', space=sflag, size = 0x4, offset = 0, fixed_abs, tag = 'sflag constant byte address 0x0 - dummy sync flag']
  #allocation46 [shape = 's32[]', space=sflag, size = 0x4, offset = 0, fixed_abs, tag = 'sflag constant byte address 0x0 - dummy sync flag']
  #allocation47 [shape = 's32[]', space=sflag, size = 0x4, offset = 0, fixed_abs, tag = 'sflag constant byte address 0x0 - dummy sync flag']
  #allocation48 [shape = 's32[]', space=sflag, size = 0x4, offset = 0, fixed_abs, tag = 'sflag constant byte address 0x0 - dummy sync flag']
  #allocation49 [shape = 's32[]', space=sflag, size = 0x4, offset = 0, fixed_abs, tag = 'sflag constant byte address 0x0 - dummy sync flag']
  %s0 = inlined_call_operand.smem [shape: u32[31], index: -1, kind: input, shape index: {}]
  %s1 = sld [smem:[%s0]]
  %s2 = scalar_lea.smem %s0, 1
  %s3 = sld [smem:[%s2]]
  %s4 = scalar_lea.smem %s0, 2
  %s5 = sld [smem:[%s4]]
  %s6 = scalar_lea.smem %s0, 3
  %s7 = sld [smem:[%s6]]
  %s8 = scalar_lea.smem %s0, 4
  %s9 = sld [smem:[%s8]]
  %s10 = scalar_lea.smem %s0, 5
  %s11 = sld [smem:[%s10]]
  %s12 = scalar_lea.smem %s0, 6
  %s13 = sld [smem:[%s12]]
  %s14 = scalar_lea.smem %s0, 7
  %s15 = sld [smem:[%s14]]
  %s16 = scalar_lea.smem %s0, 8
  %s17 = sld [smem:[%s16]]
  %s18 = scalar_lea.smem %s0, 9
  %s19 = sld [smem:[%s18]]
  %s20 = scalar_lea.smem %s0, 10
  %s21 = sld [smem:[%s20]]
  %s22 = scalar_lea.smem %s0, 11
  %s23 = sld [smem:[%s22]]
  %s24 = scalar_lea.smem %s0, 12
  %s25 = sld [smem:[%s24]]
  %s26 = scalar_lea.smem %s0, 13
  %s27 = sld [smem:[%s26]]
  %s28 = scalar_lea.smem %s0, 14
  %s29 = sld [smem:[%s28]]
  %s30 = scalar_lea.smem %s0, 15
  %s31 = sld [smem:[%s30]]
  %s32 = scalar_lea.smem %s0, 16
  %s33 = sld [smem:[%s32]]
  %s34 = scalar_lea.smem %s0, 17
  %s35 = sld [smem:[%s34]]
  %s36 = scalar_lea.smem %s0, 18
  %s37 = sld [smem:[%s36]]
  %s38 = scalar_lea.smem %s0, 19
  %s39 = sld [smem:[%s38]]
  %s40 = scalar_lea.smem %s0, 20
  %s41 = sld [smem:[%s40]]
  %s42 = scalar_lea.smem %s0, 21
  %s43 = sld [smem:[%s42]]
  %s44 = scalar_lea.smem %s0, 22
  %s45 = sld [smem:[%s44]]
  %s46 = scalar_lea.smem %s0, 23
  %s47 = sld [smem:[%s46]]
  %s48 = scalar_lea.smem %s0, 24
  %s49 = sld [smem:[%s48]]
  %s50 = scalar_lea.smem %s0, 25
  %s51 = sld [smem:[%s50]]
  %s52 = scalar_lea.smem %s0, 26
  %s53 = sld [smem:[%s52]]
  %s54 = scalar_lea.smem %s0, 27
  %s55 = sld [smem:[%s54]]
  %s56 = scalar_lea.smem %s0, 28
  %s57 = sld [smem:[%s56]]
  %s58 = scalar_lea.smem %s0, 29
  %s59 = sld [smem:[%s58]]
  %s60 = scalar_lea.smem %s0, 30
  %s61 = sld [smem:[%s60]]
  %s62 = sld [smem:[#allocation0]]
  $region247: #{tpu_custom_call.1} parent=0
    _
  %s64 = ssub.s32 1, %s62
  %s65 = scalar_select 0, %s64, %s62
  $region1: #{tpu_custom_call.1} parent=0
    #allocation3 [shape = 'u8[1024]{0}', space=vmem, size = 0x400, scoped, tag = 'input window, operand 5']
    #allocation4 [shape = 's32[2]{0}', space=sflag, size = 0x8, scoped, tag = 'scoped memory for tpu_custom_call.1']
    #allocation5 [shape = 's32[2]{0}', space=sflag, size = 0x8, scoped, tag = 'scoped memory for tpu_custom_call.1']
    #allocation6 [shape = 'u8[1024]{0}', space=vmem, size = 0x400, scoped, tag = 'input window, operand 7']
    #allocation7 [shape = 's32[2]{0}', space=sflag, size = 0x8, scoped, tag = 'scoped memory for tpu_custom_call.1']
    #allocation8 [shape = 'u8[1024]{0}', space=vmem, size = 0x400, scoped, tag = 'input window, operand 8']
    #allocation9 [shape = 'u8[1024]{0}', space=vmem, size = 0x400, scoped, tag = 'input window, operand 9']
    #allocation10 [shape = 's32[2]{0}', space=sflag, size = 0x8, scoped, tag = 'scoped memory for tpu_custom_call.1']
    #allocation11 [shape = 'u8[1024]{0}', space=vmem, size = 0x400, scoped, tag = 'input window, operand 11']
    #allocation12 [shape = 'u8[1024]{0}', space=vmem, size = 0x400, scoped, tag = 'input window, operand 13']
    #allocation13 [shape = 's32[2]{0}', space=sflag, size = 0x8, scoped, tag = 'scoped memory for tpu_custom_call.1']
    #allocation14 [shape = 'u8[1024]{0}', space=vmem, size = 0x400, scoped, tag = 'input window, operand 14']
    #allocation15 [shape = 'u8[1024]{0}', space=vmem, size = 0x400, scoped, tag = 'input window, operand 15']
    #allocation16 [shape = 's32[2]{0}', space=sflag, size = 0x8, scoped, tag = 'scoped memory for tpu_custom_call.1']
    #allocation17 [shape = 'u8[512]{0}', space=vmem, size = 0x400, scoped, tag = 'input window, operand 17, single buffered']
    #allocation18 [shape = 'u8[512]{0}', space=vmem, size = 0x400, scoped, tag = 'input window, operand 18, single buffered']
    #allocation19 [shape = 's32[1]{0}', space=sflag, size = 0x4, scoped, tag = 'scoped memory for tpu_custom_call.1']
    #allocation20 [shape = 'u8[512]{0}', space=vmem, size = 0x400, scoped, tag = 'input window, operand 19, single buffered']
    #allocation21 [shape = 'u8[1024]{0}', space=vmem, size = 0x400, scoped, tag = 'output window, operand 0, single buffered']
    %66 = vsyncpa [#allocation4], 0
    %s67 = scalar_lea.sflag [#allocation4], 1
    %68 = vsyncpa %s67, 0
    %69 = vsyncpa [#allocation7], 0
    %s70 = scalar_lea.sflag [#allocation7], 1
    %71 = vsyncpa %s70, 0
    %72 = vsyncpa [#allocation10], 0
    %s73 = scalar_lea.sflag [#allocation10], 1
    %74 = vsyncpa %s73, 0
    %75 = vsyncpa [#allocation13], 0
    %s76 = scalar_lea.sflag [#allocation13], 1
    %77 = vsyncpa %s76, 0
    %78 = vsyncpa [#allocation16], 0
    %s79 = scalar_lea.sflag [#allocation16], 1
    %80 = vsyncpa %s79, 0
    %81 = vsyncpa [#allocation19], 0
    %82 = vsyncpa [#allocation5], 0
    loop: start=0, step=1, limit=4
    $region2: #{tpu_custom_call.1} parent=1 // loop_pre_header
      _
    $region3: #{tpu_custom_call.1} parent=1 // loop_header
      %s84 = sphi 0, %s88
      %p85 = scmp.ge.s32.totalorder %s84, 4
      %s92 = sphi 0, %s92
      %s94 = sphi 0, %s92
      %s95 = sphi 0, %s94
      %s109 = sphi 0, %s95
      %s113 = sphi 0, %s113
      %s115 = sphi 0, %s113
      %s116 = sphi 0, %s115
      %s130 = sphi 0, %s116
      %s134 = sphi 0, %s134
      %s136 = sphi 0, %s134
      %s137 = sphi 0, %s136
      %s151 = sphi 0, %s137
      %s155 = sphi 0, %s155
      %s157 = sphi 0, %s155
      %s158 = sphi 0, %s157
      %s172 = sphi 0, %s158
      %s178 = sphi 0, %s180
      %s181 = sphi 0, %s178
      %s182 = sphi 0, %s181
      %s198 = sphi 0, %s182
      %s204 = sphi 0, %s206
      %s207 = sphi 0, %s204
      %s208 = sphi 0, %s207
      %s224 = sphi 0, %s208
      %s230 = sphi 0, %s232
      %s233 = sphi 0, %s230
      %s234 = sphi 0, %s233
      %s250 = sphi 0, %s234
      %s256 = sphi 0, %s258
      %s259 = sphi 0, %s256
      %s260 = sphi 0, %s259
      %s276 = sphi 0, %s260
      %s282 = sphi 0, %s284
      %s285 = sphi 0, %s282
      %s286 = sphi 0, %s285
      %s302 = sphi 0, %s286
      %s308 = sphi 0, %s310
      %s311 = sphi 0, %s308
      %s312 = sphi 0, %s311
      %s328 = sphi 0, %s312
      %s334 = sphi 0, %s336
      %s337 = sphi 0, %s334
      %s338 = sphi 0, %s337
      %s354 = sphi 0, %s338
      %s360 = sphi 0, %s362
      %s363 = sphi 0, %s360
      %s364 = sphi 0, %s363
      %s380 = sphi 0, %s364
      %s386 = sphi 0, %s388
      %s389 = sphi 0, %s386
      %s390 = sphi 0, %s389
      %s406 = sphi 0, %s390
      %s412 = sphi 0, %s414
      %s415 = sphi 0, %s412
      %s416 = sphi 0, %s415
      %s432 = sphi 0, %s416
      %s438 = sphi 0, %s440
      %s441 = sphi 0, %s438
      %s442 = sphi 0, %s441
      %s458 = sphi 0, %s442
      %s464 = sphi 0, %s466
      %s467 = sphi 0, %s464
      %s468 = sphi 0, %s467
      %s484 = sphi 0, %s468
      %s488 = sphi 0, %s488
      %s490 = sphi 0, %s488
      %s491 = sphi 0, %s490
      %s505 = sphi 0, %s491
      %s509 = sphi 0, %s509
      %s511 = sphi 0, %s509
      %s512 = sphi 0, %s511
      %s526 = sphi 0, %s512
      %s530 = sphi 0, %s530
      %s532 = sphi 0, %s530
      %s533 = sphi 0, %s532
      %s547 = sphi 0, %s533
      %s551 = sphi 0, %s551
      %s553 = sphi 0, %s551
      %s554 = sphi 0, %s553
      %s568 = sphi 0, %s554
      %s572 = sphi 0, %s572
      %s574 = sphi 0, %s572
      %s575 = sphi 0, %s574
      %s589 = sphi 0, %s575
      %s593 = sphi 0, %s593
      %s595 = sphi 0, %s593
      %s596 = sphi 0, %s595
      %s610 = sphi 0, %s596
    $region4: #{tpu_custom_call.1} parent=1 // loop_header_branch
      %87 = sbr.rel (%p85) target = $region8
    $region5: #{tpu_custom_call.1} parent=1 // loop_body
      %s89 = ssub.s32 %s84, 1
      %s90 = ssub.s32 %s84, 2
      %s91 = sadd.s32 %s84, 1
      %s93 = sadd.s32 %s92, 1
      %p96 = scmp.eq.s32.totalorder %s84, 1
      %p97 = scmp.ne.s32.totalorder %s92, %s94
      %p98 = scmp.eq.s32.totalorder %s84, 0
      %p99 = por %p97, %p98
      %p100 = scmp.ne.s32.totalorder %s92, %s94
      %p101 = scmp.eq.s32.totalorder %s89, 1
      %p102 = por %p100, %p101
      %p103 = scmp.ne.s32.totalorder %s94, %s95
      %p104 = scmp.eq.s32.totalorder %s89, 0
      %p105 = por %p103, %p104
      %p106 = scmp.ne.s32.totalorder %s94, %s95
      %p107 = scmp.eq.s32.totalorder %s90, 1
      %p108 = por %p106, %p107
      %p110 = scmp.ne.s32.totalorder %s95, %s109
      %p111 = scmp.eq.s32.totalorder %s90, 0
      %p112 = por %p110, %p111
      %s114 = sadd.s32 %s113, 1
      %p117 = scmp.eq.s32.totalorder %s84, 1
      %p118 = scmp.ne.s32.totalorder %s113, %s115
      %p119 = scmp.eq.s32.totalorder %s84, 0
      %p120 = por %p118, %p119
      %p121 = scmp.ne.s32.totalorder %s113, %s115
      %p122 = scmp.eq.s32.totalorder %s89, 1
      %p123 = por %p121, %p122
      %p124 = scmp.ne.s32.totalorder %s115, %s116
      %p125 = scmp.eq.s32.totalorder %s89, 0
      %p126 = por %p124, %p125
      %p127 = scmp.ne.s32.totalorder %s115, %s116
      %p128 = scmp.eq.s32.totalorder %s90, 1
      %p129 = por %p127, %p128
      %p131 = scmp.ne.s32.totalorder %s116, %s130
      %p132 = scmp.eq.s32.totalorder %s90, 0
      %p133 = por %p131, %p132
      %s135 = sadd.s32 %s134, 1
      %p138 = scmp.eq.s32.totalorder %s84, 1
      %p139 = scmp.ne.s32.totalorder %s134, %s136
      %p140 = scmp.eq.s32.totalorder %s84, 0
      %p141 = por %p139, %p140
      %p142 = scmp.ne.s32.totalorder %s134, %s136
      %p143 = scmp.eq.s32.totalorder %s89, 1
      %p144 = por %p142, %p143
      %p145 = scmp.ne.s32.totalorder %s136, %s137
      %p146 = scmp.eq.s32.totalorder %s89, 0
      %p147 = por %p145, %p146
      %p148 = scmp.ne.s32.totalorder %s136, %s137
      %p149 = scmp.eq.s32.totalorder %s90, 1
      %p150 = por %p148, %p149
      %p152 = scmp.ne.s32.totalorder %s137, %s151
      %p153 = scmp.eq.s32.totalorder %s90, 0
      %p154 = por %p152, %p153
      %s156 = sadd.s32 %s155, 1
      %p159 = scmp.eq.s32.totalorder %s84, 1
      %p160 = scmp.ne.s32.totalorder %s155, %s157
      %p161 = scmp.eq.s32.totalorder %s84, 0
      %p162 = por %p160, %p161
      %p163 = scmp.ne.s32.totalorder %s155, %s157
      %p164 = scmp.eq.s32.totalorder %s89, 1
      %p165 = por %p163, %p164
      %p166 = scmp.ne.s32.totalorder %s157, %s158
      %p167 = scmp.eq.s32.totalorder %s89, 0
      %p168 = por %p166, %p167
      %p169 = scmp.ne.s32.totalorder %s157, %s158
      %p170 = scmp.eq.s32.totalorder %s90, 1
      %p171 = por %p169, %p170
      %p173 = scmp.ne.s32.totalorder %s158, %s172
      %p174 = scmp.eq.s32.totalorder %s90, 0
      %p175 = por %p173, %p174
      %s176 = ssub.s32 %s84, %s91
      %p177 = scmp.eq.s32.totalorder %s176, 0
      %s179 = sadd.s32 %s178, 1
      %s180 = scalar_select %p177, %s178, %s179
      %p183 = pneg %p177
      %p184 = scmp.eq.s32.totalorder %s84, 1
      %p185 = por %p183, %p184
      %p186 = scmp.ne.s32.totalorder %s178, %s181
      %p187 = scmp.eq.s32.totalorder %s84, 0
      %p188 = por %p186, %p187
      %p189 = scmp.ne.s32.totalorder %s178, %s181
      %p190 = scmp.eq.s32.totalorder %s89, 1
      %p191 = por %p189, %p190
      %p192 = scmp.ne.s32.totalorder %s181, %s182
      %p193 = scmp.eq.s32.totalorder %s89, 0
      %p194 = por %p192, %p193
      %p195 = scmp.ne.s32.totalorder %s181, %s182
      %p196 = scmp.eq.s32.totalorder %s90, 1
      %p197 = por %p195, %p196
      %p199 = scmp.ne.s32.totalorder %s182, %s198
      %p200 = scmp.eq.s32.totalorder %s90, 0
      %p201 = por %p199, %p200
      %s202 = ssub.s32 %s84, %s91
      %p203 = scmp.eq.s32.totalorder %s202, 0
      %s205 = sadd.s32 %s204, 1
      %s206 = scalar_select %p203, %s204, %s205
      %p209 = pneg %p203
      %p210 = scmp.eq.s32.totalorder %s84, 1
      %p211 = por %p209, %p210
      %p212 = scmp.ne.s32.totalorder %s204, %s207
      %p213 = scmp.eq.s32.totalorder %s84, 0
      %p214 = por %p212, %p213
      %p215 = scmp.ne.s32.totalorder %s204, %s207
      %p216 = scmp.eq.s32.totalorder %s89, 1
      %p217 = por %p215, %p216
      %p218 = scmp.ne.s32.totalorder %s207, %s208
      %p219 = scmp.eq.s32.totalorder %s89, 0
      %p220 = por %p218, %p219
      %p221 = scmp.ne.s32.totalorder %s207, %s208
      %p222 = scmp.eq.s32.totalorder %s90, 1
      %p223 = por %p221, %p222
      %p225 = scmp.ne.s32.totalorder %s208, %s224
      %p226 = scmp.eq.s32.totalorder %s90, 0
      %p227 = por %p225, %p226
      %s228 = ssub.s32 %s84, %s91
      %p229 = scmp.eq.s32.totalorder %s228, 0
      %s231 = sadd.s32 %s230, 1
      %s232 = scalar_select %p229, %s230, %s231
      %p235 = pneg %p229
      %p236 = scmp.eq.s32.totalorder %s84, 1
      %p237 = por %p235, %p236
      %p238 = scmp.ne.s32.totalorder %s230, %s233
      %p239 = scmp.eq.s32.totalorder %s84, 0
      %p240 = por %p238, %p239
      %p241 = scmp.ne.s32.totalorder %s230, %s233
      %p242 = scmp.eq.s32.totalorder %s89, 1
      %p243 = por %p241, %p242
      %p244 = scmp.ne.s32.totalorder %s233, %s234
      %p245 = scmp.eq.s32.totalorder %s89, 0
      %p246 = por %p244, %p245
      %p247 = scmp.ne.s32.totalorder %s233, %s234
      %p248 = scmp.eq.s32.totalorder %s90, 1
      %p249 = por %p247, %p248
      %p251 = scmp.ne.s32.totalorder %s234, %s250
      %p252 = scmp.eq.s32.totalorder %s90, 0
      %p253 = por %p251, %p252
      %s254 = ssub.s32 %s84, %s91
      %p255 = scmp.eq.s32.totalorder %s254, 0
      %s257 = sadd.s32 %s256, 1
      %s258 = scalar_select %p255, %s256, %s257
      %p261 = pneg %p255
      %p262 = scmp.eq.s32.totalorder %s84, 1
      %p263 = por %p261, %p262
      %p264 = scmp.ne.s32.totalorder %s256, %s259
      %p265 = scmp.eq.s32.totalorder %s84, 0
      %p266 = por %p264, %p265
      %p267 = scmp.ne.s32.totalorder %s256, %s259
      %p268 = scmp.eq.s32.totalorder %s89, 1
      %p269 = por %p267, %p268
      %p270 = scmp.ne.s32.totalorder %s259, %s260
      %p271 = scmp.eq.s32.totalorder %s89, 0
      %p272 = por %p270, %p271
      %p273 = scmp.ne.s32.totalorder %s259, %s260
      %p274 = scmp.eq.s32.totalorder %s90, 1
      %p275 = por %p273, %p274
      %p277 = scmp.ne.s32.totalorder %s260, %s276
      %p278 = scmp.eq.s32.totalorder %s90, 0
      %p279 = por %p277, %p278
      %s280 = ssub.s32 %s84, %s91
      %p281 = scmp.eq.s32.totalorder %s280, 0
      %s283 = sadd.s32 %s282, 1
      %s284 = scalar_select %p281, %s282, %s283
      %p287 = pneg %p281
      %p288 = scmp.eq.s32.totalorder %s84, 1
      %p289 = por %p287, %p288
      %p290 = scmp.ne.s32.totalorder %s282, %s285
      %p291 = scmp.eq.s32.totalorder %s84, 0
      %p292 = por %p290, %p291
      %p293 = scmp.ne.s32.totalorder %s282, %s285
      %p294 = scmp.eq.s32.totalorder %s89, 1
      %p295 = por %p293, %p294
      %p296 = scmp.ne.s32.totalorder %s285, %s286
      %p297 = scmp.eq.s32.totalorder %s89, 0
      %p298 = por %p296, %p297
      %p299 = scmp.ne.s32.totalorder %s285, %s286
      %p300 = scmp.eq.s32.totalorder %s90, 1
      %p301 = por %p299, %p300
      %p303 = scmp.ne.s32.totalorder %s286, %s302
      %p304 = scmp.eq.s32.totalorder %s90, 0
      %p305 = por %p303, %p304
      %s306 = ssub.s32 %s84, %s91
      %p307 = scmp.eq.s32.totalorder %s306, 0
      %s309 = sadd.s32 %s308, 1
      %s310 = scalar_select %p307, %s308, %s309
      %p313 = pneg %p307
      %p314 = scmp.eq.s32.totalorder %s84, 1
      %p315 = por %p313, %p314
      %p316 = scmp.ne.s32.totalorder %s308, %s311
      %p317 = scmp.eq.s32.totalorder %s84, 0
      %p318 = por %p316, %p317
      %p319 = scmp.ne.s32.totalorder %s308, %s311
      %p320 = scmp.eq.s32.totalorder %s89, 1
      %p321 = por %p319, %p320
      %p322 = scmp.ne.s32.totalorder %s311, %s312
      %p323 = scmp.eq.s32.totalorder %s89, 0
      %p324 = por %p322, %p323
      %p325 = scmp.ne.s32.totalorder %s311, %s312
      %p326 = scmp.eq.s32.totalorder %s90, 1
      %p327 = por %p325, %p326
      %p329 = scmp.ne.s32.totalorder %s312, %s328
      %p330 = scmp.eq.s32.totalorder %s90, 0
      %p331 = por %p329, %p330
      %s332 = ssub.s32 %s84, %s91
      %p333 = scmp.eq.s32.totalorder %s332, 0
      %s335 = sadd.s32 %s334, 1
      %s336 = scalar_select %p333, %s334, %s335
      %p339 = pneg %p333
      %p340 = scmp.eq.s32.totalorder %s84, 1
      %p341 = por %p339, %p340
      %p342 = scmp.ne.s32.totalorder %s334, %s337
      %p343 = scmp.eq.s32.totalorder %s84, 0
      %p344 = por %p342, %p343
      %p345 = scmp.ne.s32.totalorder %s334, %s337
      %p346 = scmp.eq.s32.totalorder %s89, 1
      %p347 = por %p345, %p346
      %p348 = scmp.ne.s32.totalorder %s337, %s338
      %p349 = scmp.eq.s32.totalorder %s89, 0
      %p350 = por %p348, %p349
      %p351 = scmp.ne.s32.totalorder %s337, %s338
      %p352 = scmp.eq.s32.totalorder %s90, 1
      %p353 = por %p351, %p352
      %p355 = scmp.ne.s32.totalorder %s338, %s354
      %p356 = scmp.eq.s32.totalorder %s90, 0
      %p357 = por %p355, %p356
      %s358 = ssub.s32 %s84, %s91
      %p359 = scmp.eq.s32.totalorder %s358, 0
      %s361 = sadd.s32 %s360, 1
      %s362 = scalar_select %p359, %s360, %s361
      %p365 = pneg %p359
      %p366 = scmp.eq.s32.totalorder %s84, 1
      %p367 = por %p365, %p366
      %p368 = scmp.ne.s32.totalorder %s360, %s363
      %p369 = scmp.eq.s32.totalorder %s84, 0
      %p370 = por %p368, %p369
      %p371 = scmp.ne.s32.totalorder %s360, %s363
      %p372 = scmp.eq.s32.totalorder %s89, 1
      %p373 = por %p371, %p372
      %p374 = scmp.ne.s32.totalorder %s363, %s364
      %p375 = scmp.eq.s32.totalorder %s89, 0
      %p376 = por %p374, %p375
      %p377 = scmp.ne.s32.totalorder %s363, %s364
      %p378 = scmp.eq.s32.totalorder %s90, 1
      %p379 = por %p377, %p378
      %p381 = scmp.ne.s32.totalorder %s364, %s380
      %p382 = scmp.eq.s32.totalorder %s90, 0
      %p383 = por %p381, %p382
      %s384 = ssub.s32 %s84, %s91
      %p385 = scmp.eq.s32.totalorder %s384, 0
      %s387 = sadd.s32 %s386, 1
      %s388 = scalar_select %p385, %s386, %s387
      %p391 = pneg %p385
      %p392 = scmp.eq.s32.totalorder %s84, 1
      %p393 = por %p391, %p392
      %p394 = scmp.ne.s32.totalorder %s386, %s389
      %p395 = scmp.eq.s32.totalorder %s84, 0
      %p396 = por %p394, %p395
      %p397 = scmp.ne.s32.totalorder %s386, %s389
      %p398 = scmp.eq.s32.totalorder %s89, 1
      %p399 = por %p397, %p398
      %p400 = scmp.ne.s32.totalorder %s389, %s390
      %p401 = scmp.eq.s32.totalorder %s89, 0
      %p402 = por %p400, %p401
      %p403 = scmp.ne.s32.totalorder %s389, %s390
      %p404 = scmp.eq.s32.totalorder %s90, 1
      %p405 = por %p403, %p404
      %p407 = scmp.ne.s32.totalorder %s390, %s406
      %p408 = scmp.eq.s32.totalorder %s90, 0
      %p409 = por %p407, %p408
      %s410 = ssub.s32 %s84, %s91
      %p411 = scmp.eq.s32.totalorder %s410, 0
      %s413 = sadd.s32 %s412, 1
      %s414 = scalar_select %p411, %s412, %s413
      %p417 = pneg %p411
      %p418 = scmp.eq.s32.totalorder %s84, 1
      %p419 = por %p417, %p418
      %p420 = scmp.ne.s32.totalorder %s412, %s415
      %p421 = scmp.eq.s32.totalorder %s84, 0
      %p422 = por %p420, %p421
      %p423 = scmp.ne.s32.totalorder %s412, %s415
      %p424 = scmp.eq.s32.totalorder %s89, 1
      %p425 = por %p423, %p424
      %p426 = scmp.ne.s32.totalorder %s415, %s416
      %p427 = scmp.eq.s32.totalorder %s89, 0
      %p428 = por %p426, %p427
      %p429 = scmp.ne.s32.totalorder %s415, %s416
      %p430 = scmp.eq.s32.totalorder %s90, 1
      %p431 = por %p429, %p430
      %p433 = scmp.ne.s32.totalorder %s416, %s432
      %p434 = scmp.eq.s32.totalorder %s90, 0
      %p435 = por %p433, %p434
      %s436 = ssub.s32 %s84, %s91
      %p437 = scmp.eq.s32.totalorder %s436, 0
      %s439 = sadd.s32 %s438, 1
      %s440 = scalar_select %p437, %s438, %s439
      %p443 = pneg %p437
      %p444 = scmp.eq.s32.totalorder %s84, 1
      %p445 = por %p443, %p444
      %p446 = scmp.ne.s32.totalorder %s438, %s441
      %p447 = scmp.eq.s32.totalorder %s84, 0
      %p448 = por %p446, %p447
      %p449 = scmp.ne.s32.totalorder %s438, %s441
      %p450 = scmp.eq.s32.totalorder %s89, 1
      %p451 = por %p449, %p450
      %p452 = scmp.ne.s32.totalorder %s441, %s442
      %p453 = scmp.eq.s32.totalorder %s89, 0
      %p454 = por %p452, %p453
      %p455 = scmp.ne.s32.totalorder %s441, %s442
      %p456 = scmp.eq.s32.totalorder %s90, 1
      %p457 = por %p455, %p456
      %p459 = scmp.ne.s32.totalorder %s442, %s458
      %p460 = scmp.eq.s32.totalorder %s90, 0
      %p461 = por %p459, %p460
      %s462 = ssub.s32 %s84, %s91
      %p463 = scmp.eq.s32.totalorder %s462, 0
      %s465 = sadd.s32 %s464, 1
      %s466 = scalar_select %p463, %s464, %s465
      %p469 = pneg %p463
      %p470 = scmp.eq.s32.totalorder %s84, 1
      %p471 = por %p469, %p470
      %p472 = scmp.ne.s32.totalorder %s464, %s467
      %p473 = scmp.eq.s32.totalorder %s84, 0
      %p474 = por %p472, %p473
      %p475 = scmp.ne.s32.totalorder %s464, %s467
      %p476 = scmp.eq.s32.totalorder %s89, 1
      %p477 = por %p475, %p476
      %p478 = scmp.ne.s32.totalorder %s467, %s468
      %p479 = scmp.eq.s32.totalorder %s89, 0
      %p480 = por %p478, %p479
      %p481 = scmp.ne.s32.totalorder %s467, %s468
      %p482 = scmp.eq.s32.totalorder %s90, 1
      %p483 = por %p481, %p482
      %p485 = scmp.ne.s32.totalorder %s468, %s484
      %p486 = scmp.eq.s32.totalorder %s90, 0
      %p487 = por %p485, %p486
      %s489 = sadd.s32 %s488, 1
      %p492 = scmp.eq.s32.totalorder %s84, 1
      %p493 = scmp.ne.s32.totalorder %s488, %s490
      %p494 = scmp.eq.s32.totalorder %s84, 0
      %p495 = por %p493, %p494
      %p496 = scmp.ne.s32.totalorder %s488, %s490
      %p497 = scmp.eq.s32.totalorder %s89, 1
      %p498 = por %p496, %p497
      %p499 = scmp.ne.s32.totalorder %s490, %s491
      %p500 = scmp.eq.s32.totalorder %s89, 0
      %p501 = por %p499, %p500
      %p502 = scmp.ne.s32.totalorder %s490, %s491
      %p503 = scmp.eq.s32.totalorder %s90, 1
      %p504 = por %p502, %p503
      %p506 = scmp.ne.s32.totalorder %s491, %s505
      %p507 = scmp.eq.s32.totalorder %s90, 0
      %p508 = por %p506, %p507
      %s510 = sadd.s32 %s509, 1
      %p513 = scmp.eq.s32.totalorder %s84, 1
      %p514 = scmp.ne.s32.totalorder %s509, %s511
      %p515 = scmp.eq.s32.totalorder %s84, 0
      %p516 = por %p514, %p515
      %p517 = scmp.ne.s32.totalorder %s509, %s511
      %p518 = scmp.eq.s32.totalorder %s89, 1
      %p519 = por %p517, %p518
      %p520 = scmp.ne.s32.totalorder %s511, %s512
      %p521 = scmp.eq.s32.totalorder %s89, 0
      %p522 = por %p520, %p521
      %p523 = scmp.ne.s32.totalorder %s511, %s512
      %p524 = scmp.eq.s32.totalorder %s90, 1
      %p525 = por %p523, %p524
      %p527 = scmp.ne.s32.totalorder %s512, %s526
      %p528 = scmp.eq.s32.totalorder %s90, 0
      %p529 = por %p527, %p528
      %s531 = sadd.s32 %s530, 1
      %p534 = scmp.eq.s32.totalorder %s84, 1
      %p535 = scmp.ne.s32.totalorder %s530, %s532
      %p536 = scmp.eq.s32.totalorder %s84, 0
      %p537 = por %p535, %p536
      %p538 = scmp.ne.s32.totalorder %s530, %s532
      %p539 = scmp.eq.s32.totalorder %s89, 1
      %p540 = por %p538, %p539
      %p541 = scmp.ne.s32.totalorder %s532, %s533
      %p542 = scmp.eq.s32.totalorder %s89, 0
      %p543 = por %p541, %p542
      %p544 = scmp.ne.s32.totalorder %s532, %s533
      %p545 = scmp.eq.s32.totalorder %s90, 1
      %p546 = por %p544, %p545
      %p548 = scmp.ne.s32.totalorder %s533, %s547
      %p549 = scmp.eq.s32.totalorder %s90, 0
      %p550 = por %p548, %p549
      %s552 = sadd.s32 %s551, 1
      %p555 = scmp.eq.s32.totalorder %s84, 1
      %p556 = scmp.ne.s32.totalorder %s551, %s553
      %p557 = scmp.eq.s32.totalorder %s84, 0
      %p558 = por %p556, %p557
      %p559 = scmp.ne.s32.totalorder %s551, %s553
      %p560 = scmp.eq.s32.totalorder %s89, 1
      %p561 = por %p559, %p560
      %p562 = scmp.ne.s32.totalorder %s553, %s554
      %p563 = scmp.eq.s32.totalorder %s89, 0
      %p564 = por %p562, %p563
      %p565 = scmp.ne.s32.totalorder %s553, %s554
      %p566 = scmp.eq.s32.totalorder %s90, 1
      %p567 = por %p565, %p566
      %p569 = scmp.ne.s32.totalorder %s554, %s568
      %p570 = scmp.eq.s32.totalorder %s90, 0
      %p571 = por %p569, %p570
      %s573 = sadd.s32 %s572, 1
      %p576 = scmp.eq.s32.totalorder %s84, 1
      %p577 = scmp.ne.s32.totalorder %s572, %s574
      %p578 = scmp.eq.s32.totalorder %s84, 0
      %p579 = por %p577, %p578
      %p580 = scmp.ne.s32.totalorder %s572, %s574
      %p581 = scmp.eq.s32.totalorder %s89, 1
      %p582 = por %p580, %p581
      %p583 = scmp.ne.s32.totalorder %s574, %s575
      %p584 = scmp.eq.s32.totalorder %s89, 0
      %p585 = por %p583, %p584
      %p586 = scmp.ne.s32.totalorder %s574, %s575
      %p587 = scmp.eq.s32.totalorder %s90, 1
      %p588 = por %p586, %p587
      %p590 = scmp.ne.s32.totalorder %s575, %s589
      %p591 = scmp.eq.s32.totalorder %s90, 0
      %p592 = por %p590, %p591
      %s594 = sadd.s32 %s593, 1
      %p597 = scmp.eq.s32.totalorder %s84, 1
      %p598 = scmp.ne.s32.totalorder %s593, %s595
      %p599 = scmp.eq.s32.totalorder %s84, 0
      %p600 = por %p598, %p599
      %p601 = scmp.ne.s32.totalorder %s593, %s595
      %p602 = scmp.eq.s32.totalorder %s89, 1
      %p603 = por %p601, %p602
      %p604 = scmp.ne.s32.totalorder %s595, %s596
      %p605 = scmp.eq.s32.totalorder %s89, 0
      %p606 = por %p604, %p605
      %p607 = scmp.ne.s32.totalorder %s595, %s596
      %p608 = scmp.eq.s32.totalorder %s90, 1
      %p609 = por %p607, %p608
      %p611 = scmp.ne.s32.totalorder %s596, %s610
      %p612 = scmp.eq.s32.totalorder %s90, 0
      %p613 = por %p611, %p612
      %p614 = scmp.le.s32.totalorder 1, %s84
      %p615 = scmp.lt.s32.totalorder %s84, 3
      %p616 = pnand %p614, %p615
      %p617 = pneg %p616
      // Predicated region
      $region9: #{tpu_custom_call.1} parent=5 // pred_check
        _
      $region10: #{tpu_custom_call.1} parent=5 // pred_check_branch
        %619 = sbr.rel (%p616) target = $region12
      $region11: #{tpu_custom_call.1} parent=5 // pred_region
        %s620 = ssub.s32 %s84, 1
        // Predicated region
        $region13: #{tpu_custom_call.1} parent=11 // pred_check
          %p621 = pneg %p105
        $region14: #{tpu_custom_call.1} parent=11 // pred_check_branch
          %623 = sbr.rel (%p621) target = $region16
        $region15: #{tpu_custom_call.1} parent=11 // pred_region
          _
        $region16: #{tpu_custom_call.1} parent=11 // pred_fallthru
          _
        // Predicated region
        $region17: #{tpu_custom_call.1} parent=11 // pred_check
          %p624 = pneg %p126
        $region18: #{tpu_custom_call.1} parent=11 // pred_check_branch
          %626 = sbr.rel (%p624) target = $region20
        $region19: #{tpu_custom_call.1} parent=11 // pred_region
          _
        $region20: #{tpu_custom_call.1} parent=11 // pred_fallthru
          _
        // Predicated region
        $region21: #{tpu_custom_call.1} parent=11 // pred_check
          %p627 = pneg %p147
        $region22: #{tpu_custom_call.1} parent=11 // pred_check_branch
          %629 = sbr.rel (%p627) target = $region24
        $region23: #{tpu_custom_call.1} parent=11 // pred_region
          _
        $region24: #{tpu_custom_call.1} parent=11 // pred_fallthru
          _
        // Predicated region
        $region25: #{tpu_custom_call.1} parent=11 // pred_check
          %p630 = pneg %p168
        $region26: #{tpu_custom_call.1} parent=11 // pred_check_branch
          %632 = sbr.rel (%p630) target = $region28
        $region27: #{tpu_custom_call.1} parent=11 // pred_region
          _
        $region28: #{tpu_custom_call.1} parent=11 // pred_fallthru
          _
        // Predicated region
        $region29: #{tpu_custom_call.1} parent=11 // pred_check
          %p633 = pneg %p501
        $region30: #{tpu_custom_call.1} parent=11 // pred_check_branch
          %635 = sbr.rel (%p633) target = $region32
        $region31: #{tpu_custom_call.1} parent=11 // pred_region
          _
        $region32: #{tpu_custom_call.1} parent=11 // pred_fallthru
          _
        // Predicated region
        $region33: #{tpu_custom_call.1} parent=11 // pred_check
          %p636 = pneg %p522
        $region34: #{tpu_custom_call.1} parent=11 // pred_check_branch
          %638 = sbr.rel (%p636) target = $region36
        $region35: #{tpu_custom_call.1} parent=11 // pred_region
          %640 = vsyncadd [#allocation16], 0
          %s642 = sshll.u32 %s35, 4
          %s643 = int_to_ptr.hbm [resolvable:$true] %s642
          %s644 = sshll.u32 [#allocation17], 4
          %s645 = int_to_ptr.vmem [resolvable:$true] %s644
          %647 = dma.hbm_to_vmem [thread:$0]  %s643, 16, %s645, [#allocation16]
        $region36: #{tpu_custom_call.1} parent=11 // pred_fallthru
          _
        // Predicated region
        $region37: #{tpu_custom_call.1} parent=11 // pred_check
          %p648 = pneg %p543
        $region38: #{tpu_custom_call.1} parent=11 // pred_check_branch
          %650 = sbr.rel (%p648) target = $region40
        $region39: #{tpu_custom_call.1} parent=11 // pred_region
          %652 = vsyncadd [#allocation19], 0
          %s654 = sshll.u32 %s37, 4
          %s655 = int_to_ptr.hbm [resolvable:$true] %s654
          %s656 = sshll.u32 [#allocation18], 4
          %s657 = int_to_ptr.vmem [resolvable:$true] %s656
          %659 = dma.hbm_to_vmem [thread:$0]  %s655, 16, %s657, [#allocation19]
        $region40: #{tpu_custom_call.1} parent=11 // pred_fallthru
          _
        // Predicated region
        $region41: #{tpu_custom_call.1} parent=11 // pred_check
          %p660 = pneg %p564
        $region42: #{tpu_custom_call.1} parent=11 // pred_check_branch
          %662 = sbr.rel (%p660) target = $region44
        $region43: #{tpu_custom_call.1} parent=11 // pred_region
          %664 = vsyncadd [#allocation19], 0
          %s666 = sshll.u32 %s39, 4
          %s667 = int_to_ptr.hbm [resolvable:$true] %s666
          %s668 = sshll.u32 [#allocation20], 4
          %s669 = int_to_ptr.vmem [resolvable:$true] %s668
          %671 = dma.hbm_to_vmem [thread:$0]  %s667, 16, %s669, [#allocation19]
        $region44: #{tpu_custom_call.1} parent=11 // pred_fallthru
          _
        // Predicated region
        $region45: #{tpu_custom_call.1} parent=11 // pred_check
          %p672 = pneg %p585
        $region46: #{tpu_custom_call.1} parent=11 // pred_check_branch
          %674 = sbr.rel (%p672) target = $region48
        $region47: #{tpu_custom_call.1} parent=11 // pred_region
          _
        $region48: #{tpu_custom_call.1} parent=11 // pred_fallthru
          _
      $region12: #{tpu_custom_call.1} parent=5 // pred_fallthru
        _
      %p675 = scmp.lt.s32.totalorder %s84, 2
      // Predicated region
      $region49: #{tpu_custom_call.1} parent=5 // pred_check
        %p676 = pneg %p675
      $region50: #{tpu_custom_call.1} parent=5 // pred_check_branch
        %678 = sbr.rel (%p676) target = $region52
      $region51: #{tpu_custom_call.1} parent=5 // pred_region
        // Predicated region
        $region53: #{tpu_custom_call.1} parent=51 // pred_check
          %p679 = pneg %p188
        $region54: #{tpu_custom_call.1} parent=51 // pred_check_branch
          %681 = sbr.rel (%p679) target = $region56
        $region55: #{tpu_custom_call.1} parent=51 // pred_region
          %p682 = scmp.lt.s32.totalorder %s84, 1
          %s683 = scalar_select %p682, %s84, 1
          %s684 = smul.addr %s683, 4
          %s685 = smul.addr %s684, 4
          %s686 = scalar_lea.vmem %s9, %s685
        $region56: #{tpu_custom_call.1} parent=51 // pred_fallthru
          _
        // Predicated region
        $region57: #{tpu_custom_call.1} parent=51 // pred_check
          %p687 = pneg %p214
        $region58: #{tpu_custom_call.1} parent=51 // pred_check_branch
          %689 = sbr.rel (%p687) target = $region60
        $region59: #{tpu_custom_call.1} parent=51 // pred_region
          %s690 = sand.u32 %s204, 1
          %s691 = scalar_lea.sflag [#allocation4], %s690
          %s692 = sand.u32 %s204, 1
          %s693 = scalar_lea.vmem [#allocation3], %s692
          %695 = vsyncadd %s691, 0
          %s696 = scalar_lea.hbm %s11, %s84
          %s698 = sshll.u32 %s696, 4
          %s699 = int_to_ptr.hbm [resolvable:$true] %s698
          %s700 = sshll.u32 %s693, 4
          %s701 = int_to_ptr.vmem [resolvable:$true] %s700
          %703 = dma.hbm_to_vmem [thread:$0]  %s699, 16, %s701, %s691
        $region60: #{tpu_custom_call.1} parent=51 // pred_fallthru
          _
        // Predicated region
        $region61: #{tpu_custom_call.1} parent=51 // pred_check
          %p704 = pneg %p240
        $region62: #{tpu_custom_call.1} parent=51 // pred_check_branch
          %706 = sbr.rel (%p704) target = $region64
        $region63: #{tpu_custom_call.1} parent=51 // pred_region
          %p707 = scmp.lt.s32.totalorder %s84, 1
          %s708 = scalar_select %p707, %s84, 1
          %s709 = smul.addr %s708, 4
          %s710 = smul.addr %s709, 4
          %s711 = scalar_lea.vmem %s13, %s710
        $region64: #{tpu_custom_call.1} parent=51 // pred_fallthru
          _
        // Predicated region
        $region65: #{tpu_custom_call.1} parent=51 // pred_check
          %p712 = pneg %p266
        $region66: #{tpu_custom_call.1} parent=51 // pred_check_branch
          %714 = sbr.rel (%p712) target = $region68
        $region67: #{tpu_custom_call.1} parent=51 // pred_region
          %s715 = sand.u32 %s84, 1
          %s716 = scalar_lea.sflag [#allocation7], %s715
          %s717 = sand.u32 %s256, 1
          %s718 = scalar_lea.vmem [#allocation6], %s717
          %720 = vsyncadd %s716, 0
          %s721 = scalar_lea.hbm %s15, %s84
          %s723 = sshll.u32 %s721, 4
          %s724 = int_to_ptr.hbm [resolvable:$true] %s723
          %s725 = sshll.u32 %s718, 4
          %s726 = int_to_ptr.vmem [resolvable:$true] %s725
          %728 = dma.hbm_to_vmem [thread:$0]  %s724, 16, %s726, %s716
        $region68: #{tpu_custom_call.1} parent=51 // pred_fallthru
          _
        // Predicated region
        $region69: #{tpu_custom_call.1} parent=51 // pred_check
          %p729 = pneg %p292
        $region70: #{tpu_custom_call.1} parent=51 // pred_check_branch
          %731 = sbr.rel (%p729) target = $region72
        $region71: #{tpu_custom_call.1} parent=51 // pred_region
          %s732 = sand.u32 %s84, 1
          %s733 = scalar_lea.sflag [#allocation7], %s732
          %s734 = sand.u32 %s282, 1
          %s735 = scalar_lea.vmem [#allocation8], %s734
          %737 = vsyncadd %s733, 0
          %s738 = scalar_lea.hbm %s17, %s84
          %s740 = sshll.u32 %s738, 4
          %s741 = int_to_ptr.hbm [resolvable:$true] %s740
          %s742 = sshll.u32 %s735, 4
          %s743 = int_to_ptr.vmem [resolvable:$true] %s742
          %745 = dma.hbm_to_vmem [thread:$0]  %s741, 16, %s743, %s733
        $region72: #{tpu_custom_call.1} parent=51 // pred_fallthru
          _
        // Predicated region
        $region73: #{tpu_custom_call.1} parent=51 // pred_check
          %p746 = pneg %p318
        $region74: #{tpu_custom_call.1} parent=51 // pred_check_branch
          %748 = sbr.rel (%p746) target = $region76
        $region75: #{tpu_custom_call.1} parent=51 // pred_region
          %s749 = sand.u32 %s84, 1
          %s750 = scalar_lea.sflag [#allocation10], %s749
          %s751 = sand.u32 %s308, 1
          %s752 = scalar_lea.vmem [#allocation9], %s751
          %754 = vsyncadd %s750, 0
          %s755 = scalar_lea.hbm %s19, %s84
          %s757 = sshll.u32 %s755, 4
          %s758 = int_to_ptr.hbm [resolvable:$true] %s757
          %s759 = sshll.u32 %s752, 4
          %s760 = int_to_ptr.vmem [resolvable:$true] %s759
          %762 = dma.hbm_to_vmem [thread:$0]  %s758, 16, %s760, %s750
        $region76: #{tpu_custom_call.1} parent=51 // pred_fallthru
          _
        // Predicated region
        $region77: #{tpu_custom_call.1} parent=51 // pred_check
          %p763 = pneg %p344
        $region78: #{tpu_custom_call.1} parent=51 // pred_check_branch
          %765 = sbr.rel (%p763) target = $region80
        $region79: #{tpu_custom_call.1} parent=51 // pred_region
          %p766 = scmp.lt.s32.totalorder %s84, 1
          %s767 = scalar_select %p766, %s84, 1
          %s768 = smul.addr %s767, 4
          %s769 = smul.addr %s768, 4
          %s770 = scalar_lea.vmem %s21, %s769
        $region80: #{tpu_custom_call.1} parent=51 // pred_fallthru
          _
        // Predicated region
        $region81: #{tpu_custom_call.1} parent=51 // pred_check
          %p771 = pneg %p370
        $region82: #{tpu_custom_call.1} parent=51 // pred_check_branch
          %773 = sbr.rel (%p771) target = $region84
        $region83: #{tpu_custom_call.1} parent=51 // pred_region
          %s774 = sand.u32 %s84, 1
          %s775 = scalar_lea.sflag [#allocation10], %s774
          %s776 = sand.u32 %s360, 1
          %s777 = scalar_lea.vmem [#allocation11], %s776
          %779 = vsyncadd %s775, 0
          %s780 = scalar_lea.hbm %s23, %s84
          %s782 = sshll.u32 %s780, 4
          %s783 = int_to_ptr.hbm [resolvable:$true] %s782
          %s784 = sshll.u32 %s777, 4
          %s785 = int_to_ptr.vmem [resolvable:$true] %s784
          %787 = dma.hbm_to_vmem [thread:$0]  %s783, 16, %s785, %s775
        $region84: #{tpu_custom_call.1} parent=51 // pred_fallthru
          _
        // Predicated region
        $region85: #{tpu_custom_call.1} parent=51 // pred_check
          %p788 = pneg %p396
        $region86: #{tpu_custom_call.1} parent=51 // pred_check_branch
          %790 = sbr.rel (%p788) target = $region88
        $region87: #{tpu_custom_call.1} parent=51 // pred_region
          %p791 = scmp.lt.s32.totalorder %s84, 1
          %s792 = scalar_select %p791, %s84, 1
          %s793 = smul.addr %s792, 8
          %s794 = smul.addr %s793, 4
          %s795 = scalar_lea.vmem %s25, %s794
        $region88: #{tpu_custom_call.1} parent=51 // pred_fallthru
          _
        // Predicated region
        $region89: #{tpu_custom_call.1} parent=51 // pred_check
          %p796 = pneg %p422
        $region90: #{tpu_custom_call.1} parent=51 // pred_check_branch
          %798 = sbr.rel (%p796) target = $region92
        $region91: #{tpu_custom_call.1} parent=51 // pred_region
          %s799 = sand.u32 %s84, 1
          %s800 = scalar_lea.sflag [#allocation13], %s799
          %s801 = sand.u32 %s412, 1
          %s802 = scalar_lea.vmem [#allocation12], %s801
          %804 = vsyncadd %s800, 0
          %s805 = scalar_lea.hbm %s27, %s84
          %s807 = sshll.u32 %s805, 4
          %s808 = int_to_ptr.hbm [resolvable:$true] %s807
          %s809 = sshll.u32 %s802, 4
          %s810 = int_to_ptr.vmem [resolvable:$true] %s809
          %812 = dma.hbm_to_vmem [thread:$0]  %s808, 16, %s810, %s800
        $region92: #{tpu_custom_call.1} parent=51 // pred_fallthru
          _
        // Predicated region
        $region93: #{tpu_custom_call.1} parent=51 // pred_check
          %p813 = pneg %p448
        $region94: #{tpu_custom_call.1} parent=51 // pred_check_branch
          %815 = sbr.rel (%p813) target = $region96
        $region95: #{tpu_custom_call.1} parent=51 // pred_region
          %s816 = sand.u32 %s84, 1
          %s817 = scalar_lea.sflag [#allocation13], %s816
          %s818 = sand.u32 %s438, 1
          %s819 = scalar_lea.vmem [#allocation14], %s818
          %821 = vsyncadd %s817, 0
          %s822 = scalar_lea.hbm %s29, %s84
          %s824 = sshll.u32 %s822, 4
          %s825 = int_to_ptr.hbm [resolvable:$true] %s824
          %s826 = sshll.u32 %s819, 4
          %s827 = int_to_ptr.vmem [resolvable:$true] %s826
          %829 = dma.hbm_to_vmem [thread:$0]  %s825, 16, %s827, %s817
        $region96: #{tpu_custom_call.1} parent=51 // pred_fallthru
          _
        // Predicated region
        $region97: #{tpu_custom_call.1} parent=51 // pred_check
          %p830 = pneg %p474
        $region98: #{tpu_custom_call.1} parent=51 // pred_check_branch
          %832 = sbr.rel (%p830) target = $region100
        $region99: #{tpu_custom_call.1} parent=51 // pred_region
          %s833 = sand.u32 %s84, 1
          %s834 = scalar_lea.sflag [#allocation16], %s833
          %s835 = sand.u32 %s464, 1
          %s836 = scalar_lea.vmem [#allocation15], %s835
          %838 = vsyncadd %s834, 0
          %s839 = scalar_lea.hbm %s31, %s84
          %s841 = sshll.u32 %s839, 4
          %s842 = int_to_ptr.hbm [resolvable:$true] %s841
          %s843 = sshll.u32 %s836, 4
          %s844 = int_to_ptr.vmem [resolvable:$true] %s843
          %846 = dma.hbm_to_vmem [thread:$0]  %s842, 16, %s844, %s834
        $region100: #{tpu_custom_call.1} parent=51 // pred_fallthru
          _
      $region52: #{tpu_custom_call.1} parent=5 // pred_fallthru
        _
      %p847 = scmp.le.s32.totalorder 1, %s84
      %p848 = scmp.lt.s32.totalorder %s84, 3
      %p849 = pnand %p847, %p848
      %p850 = pneg %p849
      // Predicated region
      $region101: #{tpu_custom_call.1} parent=5 // pred_check
        _
      $region102: #{tpu_custom_call.1} parent=5 // pred_check_branch
        %852 = sbr.rel (%p849) target = $region104
      $region103: #{tpu_custom_call.1} parent=5 // pred_region
        %s853 = ssub.s32 %s84, 1
        %s854 = sand.u32 %s207, 1
        %s855 = scalar_lea.sflag [#allocation4], %s854
        %s856 = sand.u32 %s207, 1
        %s857 = scalar_lea.vmem [#allocation3], %s856
        // Predicated region
        $region105: #{tpu_custom_call.1} parent=103 // pred_check
          %p858 = pneg %p220
        $region106: #{tpu_custom_call.1} parent=103 // pred_check_branch
          %860 = sbr.rel (%p858) target = $region108
        $region107: #{tpu_custom_call.1} parent=103 // pred_region
          %862 = dma.done %s855, 16
        $region108: #{tpu_custom_call.1} parent=103 // pred_fallthru
          _
        %s863 = sand.u32 %s89, 1
        %s864 = scalar_lea.sflag [#allocation7], %s863
        %s865 = sand.u32 %s259, 1
        %s866 = scalar_lea.vmem [#allocation6], %s865
        // Predicated region
        $region109: #{tpu_custom_call.1} parent=103 // pred_check
          %p867 = pneg %p272
        $region110: #{tpu_custom_call.1} parent=103 // pred_check_branch
          %869 = sbr.rel (%p867) target = $region112
        $region111: #{tpu_custom_call.1} parent=103 // pred_region
          %871 = dma.done %s864, 16
        $region112: #{tpu_custom_call.1} parent=103 // pred_fallthru
          _
        %s872 = sand.u32 %s89, 1
        %s873 = scalar_lea.sflag [#allocation7], %s872
        %s874 = sand.u32 %s285, 1
        %s875 = scalar_lea.vmem [#allocation8], %s874
        // Predicated region
        $region113: #{tpu_custom_call.1} parent=103 // pred_check
          %p876 = pneg %p298
        $region114: #{tpu_custom_call.1} parent=103 // pred_check_branch
          %878 = sbr.rel (%p876) target = $region116
        $region115: #{tpu_custom_call.1} parent=103 // pred_region
          %880 = dma.done %s873, 16
        $region116: #{tpu_custom_call.1} parent=103 // pred_fallthru
          _
        %s881 = sand.u32 %s89, 1
        %s882 = scalar_lea.sflag [#allocation10], %s881
        %s883 = sand.u32 %s311, 1
        %s884 = scalar_lea.vmem [#allocation9], %s883
        // Predicated region
        $region117: #{tpu_custom_call.1} parent=103 // pred_check
          %p885 = pneg %p324
        $region118: #{tpu_custom_call.1} parent=103 // pred_check_branch
          %887 = sbr.rel (%p885) target = $region120
        $region119: #{tpu_custom_call.1} parent=103 // pred_region
          %889 = dma.done %s882, 16
        $region120: #{tpu_custom_call.1} parent=103 // pred_fallthru
          _
        %s890 = sand.u32 %s89, 1
        %s891 = scalar_lea.sflag [#allocation10], %s890
        %s892 = sand.u32 %s363, 1
        %s893 = scalar_lea.vmem [#allocation11], %s892
        // Predicated region
        $region121: #{tpu_custom_call.1} parent=103 // pred_check
          %p894 = pneg %p376
        $region122: #{tpu_custom_call.1} parent=103 // pred_check_branch
          %896 = sbr.rel (%p894) target = $region124
        $region123: #{tpu_custom_call.1} parent=103 // pred_region
          %898 = dma.done %s891, 16
        $region124: #{tpu_custom_call.1} parent=103 // pred_fallthru
          _
        %s899 = sand.u32 %s89, 1
        %s900 = scalar_lea.sflag [#allocation13], %s899
        %s901 = sand.u32 %s415, 1
        %s902 = scalar_lea.vmem [#allocation12], %s901
        // Predicated region
        $region125: #{tpu_custom_call.1} parent=103 // pred_check
          %p903 = pneg %p428
        $region126: #{tpu_custom_call.1} parent=103 // pred_check_branch
          %905 = sbr.rel (%p903) target = $region128
        $region127: #{tpu_custom_call.1} parent=103 // pred_region
          %907 = dma.done %s900, 16
        $region128: #{tpu_custom_call.1} parent=103 // pred_fallthru
          _
        %s908 = sand.u32 %s89, 1
        %s909 = scalar_lea.sflag [#allocation13], %s908
        %s910 = sand.u32 %s441, 1
        %s911 = scalar_lea.vmem [#allocation14], %s910
        // Predicated region
        $region129: #{tpu_custom_call.1} parent=103 // pred_check
          %p912 = pneg %p454
        $region130: #{tpu_custom_call.1} parent=103 // pred_check_branch
          %914 = sbr.rel (%p912) target = $region132
        $region131: #{tpu_custom_call.1} parent=103 // pred_region
          %916 = dma.done %s909, 16
        $region132: #{tpu_custom_call.1} parent=103 // pred_fallthru
          _
        %s917 = sand.u32 %s89, 1
        %s918 = scalar_lea.sflag [#allocation16], %s917
        %s919 = sand.u32 %s467, 1
        %s920 = scalar_lea.vmem [#allocation15], %s919
        // Predicated region
        $region133: #{tpu_custom_call.1} parent=103 // pred_check
          %p921 = pneg %p480
        $region134: #{tpu_custom_call.1} parent=103 // pred_check_branch
          %923 = sbr.rel (%p921) target = $region136
        $region135: #{tpu_custom_call.1} parent=103 // pred_region
          %925 = dma.done %s918, 16
        $region136: #{tpu_custom_call.1} parent=103 // pred_fallthru
          _
        // Predicated region
        $region137: #{tpu_custom_call.1} parent=103 // pred_check
          %p926 = pneg %p522
        $region138: #{tpu_custom_call.1} parent=103 // pred_check_branch
          %928 = sbr.rel (%p926) target = $region140
        $region139: #{tpu_custom_call.1} parent=103 // pred_region
          %930 = dma.done [#allocation16], 16
        $region140: #{tpu_custom_call.1} parent=103 // pred_fallthru
          _
        // Predicated region
        $region141: #{tpu_custom_call.1} parent=103 // pred_check
          %p931 = pneg %p543
        $region142: #{tpu_custom_call.1} parent=103 // pred_check_branch
          %933 = sbr.rel (%p931) target = $region144
        $region143: #{tpu_custom_call.1} parent=103 // pred_region
          %935 = dma.done [#allocation19], 16
        $region144: #{tpu_custom_call.1} parent=103 // pred_fallthru
          _
        // Predicated region
        $region145: #{tpu_custom_call.1} parent=103 // pred_check
          %p936 = pneg %p564
        $region146: #{tpu_custom_call.1} parent=103 // pred_check_branch
          %938 = sbr.rel (%p936) target = $region148
        $region147: #{tpu_custom_call.1} parent=103 // pred_region
          %940 = dma.done [#allocation19], 16
        $region148: #{tpu_custom_call.1} parent=103 // pred_fallthru
          _
        %p941 = pneg %p105
        %p942 = pneg %p102
        %p943 = pneg %p126
        %p944 = pneg %p123
        %p945 = pneg %p147
        %p946 = pneg %p144
        %p947 = pneg %p168
        %p948 = pneg %p165
        %p949 = scmp.lt.s32.totalorder %s89, 1
        %s950 = scalar_select %p949, %s89, 1
        %s951 = smul.addr %s950, 4
        %s952 = smul.addr %s951, 4
        %s953 = scalar_lea.vmem %s9, %s952
        %p954 = pneg %p194
        %p955 = pneg %p191
        %s956 = sand.u32 %s207, 1
        %s957 = scalar_lea.sflag [#allocation4], %s956
        %s958 = sand.u32 %s207, 1
        %s959 = scalar_lea.vmem [#allocation3], %s958
        %p960 = pneg %p220
        %p961 = pneg %p217
        %p962 = scmp.lt.s32.totalorder %s89, 1
        %s963 = scalar_select %p962, %s89, 1
        %s964 = smul.addr %s963, 4
        %s965 = smul.addr %s964, 4
        %s966 = scalar_lea.vmem %s13, %s965
        %p967 = pneg %p246
        %p968 = pneg %p243
        %s969 = sand.u32 %s89, 1
        %s970 = scalar_lea.sflag [#allocation7], %s969
        %s971 = sand.u32 %s259, 1
        %s972 = scalar_lea.vmem [#allocation6], %s971
        %p973 = pneg %p272
        %p974 = pneg %p269
        %s975 = sand.u32 %s89, 1
        %s976 = scalar_lea.sflag [#allocation7], %s975
        %s977 = sand.u32 %s285, 1
        %s978 = scalar_lea.vmem [#allocation8], %s977
        %p979 = pneg %p298
        %p980 = pneg %p295
        %s981 = sand.u32 %s89, 1
        %s982 = scalar_lea.sflag [#allocation10], %s981
        %s983 = sand.u32 %s311, 1
        %s984 = scalar_lea.vmem [#allocation9], %s983
        %p985 = pneg %p324
        %p986 = pneg %p321
        %p987 = scmp.lt.s32.totalorder %s89, 1
        %s988 = scalar_select %p987, %s89, 1
        %s989 = smul.addr %s988, 4
        %s990 = smul.addr %s989, 4
        %s991 = scalar_lea.vmem %s21, %s990
        %p992 = pneg %p350
        %p993 = pneg %p347
        %s994 = sand.u32 %s89, 1
        %s995 = scalar_lea.sflag [#allocation10], %s994
        %s996 = sand.u32 %s363, 1
        %s997 = scalar_lea.vmem [#allocation11], %s996
        %p998 = pneg %p376
        %p999 = pneg %p373
        %p1000 = scmp.lt.s32.totalorder %s89, 1
        %s1001 = scalar_select %p1000, %s89, 1
        %s1002 = smul.addr %s1001, 8
        %s1003 = smul.addr %s1002, 4
        %s1004 = scalar_lea.vmem %s25, %s1003
        %p1005 = pneg %p402
        %p1006 = pneg %p399
        %s1007 = sand.u32 %s89, 1
        %s1008 = scalar_lea.sflag [#allocation13], %s1007
        %s1009 = sand.u32 %s415, 1
        %s1010 = scalar_lea.vmem [#allocation12], %s1009
        %p1011 = pneg %p428
        %p1012 = pneg %p425
        %s1013 = sand.u32 %s89, 1
        %s1014 = scalar_lea.sflag [#allocation13], %s1013
        %s1015 = sand.u32 %s441, 1
        %s1016 = scalar_lea.vmem [#allocation14], %s1015
        %p1017 = pneg %p454
        %p1018 = pneg %p451
        %s1019 = sand.u32 %s89, 1
        %s1020 = scalar_lea.sflag [#allocation16], %s1019
        %s1021 = sand.u32 %s467, 1
        %s1022 = scalar_lea.vmem [#allocation15], %s1021
        %p1023 = pneg %p480
        %p1024 = pneg %p477
        %p1025 = pneg %p501
        %p1026 = pneg %p498
        %p1027 = pneg %p522
        %p1028 = pneg %p519
        %p1029 = pneg %p543
        %p1030 = pneg %p540
        %p1031 = pneg %p564
        %p1032 = pneg %p561
        %p1033 = pneg %p585
        %p1034 = pneg %p582
        %p1035 = pneg %p606
        %p1036 = pneg %p603
        %p1037 = scmp.lt.s32.totalorder %s89, 1
        %s1038 = scalar_select %p1037, %s89, 1
        %s1039 = smul.addr %s1038, 4
        %s1040 = smul.addr %s1039, 4
        %s1041 = scalar_lea.vmem %s9, %s1040
        %p1042 = scmp.lt.s32.totalorder %s89, 1
        %s1043 = scalar_select %p1042, %s89, 1
        %s1044 = smul.addr %s1043, 4
        %s1045 = smul.addr %s1044, 4
        %s1046 = scalar_lea.vmem %s13, %s1045
        %p1047 = scmp.lt.s32.totalorder %s89, 1
        %s1048 = scalar_select %p1047, %s89, 1
        %s1049 = smul.addr %s1048, 4
        %s1050 = smul.addr %s1049, 4
        %s1051 = scalar_lea.vmem %s21, %s1050
        %p1052 = scmp.lt.s32.totalorder %s89, 1
        %s1053 = scalar_select %p1052, %s89, 1
        %s1054 = smul.addr %s1053, 8
        %s1055 = smul.addr %s1054, 4
        %s1056 = scalar_lea.vmem %s25, %s1055
        %p1058 = scmp.eq.s32.totalorder %s89, 0
        // Predicated region
        $region149: #{tpu_custom_call.1} parent=103 // pred_check
          %p1059 = pneg %p1058
        $region150: #{tpu_custom_call.1} parent=103 // pred_check_branch
          %1061 = sbr.rel (%p1059) target = $region152
        $region151: #{tpu_custom_call.1} parent=103 // pred_region
          %v1062 = vld [vmem:[%s1] sm:$0xf]
          %v1063 = vld [vmem:[%s1 + $0x4] sm:$0xf]
          %v1064 = vld [vmem:[%s3] sm:$0x7]
          %v1067 = vunpack.c.l.b16 %v1062
          %v1068 = vunpack.c.l.b16 %v1063
          %v1069 = vpack.c.b16 %v1068, %v1067
          %vm1070 = vcmask 48128
          %v1072 = vsel %vm1070, %v1069, 0
          %vm1074 = vcmask 1042432
          %v1076 = vsel %vm1074, %v1064, 0
          %1078 = vmatpush.bf16.msra.mxu0 0
          %1079 = vmatpush.bf16.msra.mxu0 0
          %1080 = vmatpush.bf16.msra.mxu0 0
          %1081 = vmatpush.bf16.msra.mxu0 0
          %1082 = vmatpush.bf16.msra.mxu0 0
          %1083 = vmatpush.bf16.msra.mxu0 0
          %1084 = vmatpush.bf16.msra.mxu0 0
          %1085 = vmatpush.bf16.msra.mxu0 %v1076
          %1086 = vmatmul.bf16.gmra.mxu0 %v1072
          %v1087 = vpop.f32.mrf.mxu0
          %v1088 = vadd.f32 0.0, %v1087
          %v1089 = vpop.f32.mrf.mxu0
          %v1090 = vadd.f32 0.0, %v1089
          %1091 = vdwg.mxu0
          %vm1092 = vcmask 261120
          %1093 = vst.msk [vmem:[#allocation2] sm:$0xff] %vm1092, %v1088
          %1094 = vst.msk [vmem:[#allocation2 + $0x8] sm:$0xff] %vm1092, %v1090
        $region152: #{tpu_custom_call.1} parent=103 // pred_fallthru
          _
        %v1095 = vld [vmem:[#allocation2] sm:$0xff]
        %v1096 = vld [vmem:[#allocation2 + $0x8] sm:$0xff]
        %v1097 = vpack.c.bf16 %v1096, %v1095
        %v1098 = vld [vmem:[%s1041] sm:$0xf]
        %v1099 = vld [vmem:[%s1041 + $0x4] sm:$0xf]
        %v1100 = vld [vmem:[%s1041 + $0x8] sm:$0xf]
        %v1101 = vld [vmem:[%s1041 + $0xc] sm:$0xf]
        %v1102 = vld [vmem:[%s857] sm:$0x1]
        %v1104 = vperm.slane %v1102, 0
        %v1110 = vunpack.c.l.b16 %v1098
        %v1111 = vunpack.c.l.b16 %v1099
        %v1112 = vunpack.c.l.b16 %v1100
        %v1113 = vunpack.c.l.b16 %v1101
        %v1114 = vpack.c.b16 %v1111, %v1110
        %v1115 = vpack.c.b16 %v1113, %v1112
        %vm1118 = vcmask 261120
        %v1120 = vsel %vm1118, %v1097, 0
        %1122 = vmatpush.bf16.msra.mxu0 0
        %1123 = vmatpush.bf16.msra.mxu0 0
        %1124 = vmatpush.bf16.msra.mxu0 0
        %1125 = vmatpush.bf16.msra.mxu0 0
        %1126 = vmatpush.bf16.msra.mxu0 0
        %1127 = vmatpush.bf16.msra.mxu0 0
        %1128 = vmatpush.bf16.msra.mxu0 %v1115
        %1129 = vmatpush.bf16.msra.mxu0 %v1114
        %1130 = vmatmul.bf16.gmra.mxu0 %v1120
        %v1131 = vpop.f32.mrf.mxu0
        %v1132 = vadd.f32 %v1104, %v1131
        %v1133 = vpop.f32.mrf.mxu0
        %v1134 = vadd.f32 %v1104, %v1133
        %1135 = vdwg.mxu0
        %v1136 = vld [vmem:[%s5] sm:$0x1]
        %v1137 = vld [vmem:[%s5 + $0x1] sm:$0x1]
        %v1138 = vld [vmem:[%s7] sm:$0xf]
        %v1139 = vld [vmem:[%s7 + $0x4] sm:$0xf]
        %v1140 = vunpack.c.l.bf16 %v1138
        %v1141 = vunpack.c.l.bf16 %v1139
        %v1142 = vpack.c.bf16 %v1132, %v1132
        %v1143 = vpack.c.bf16 %v1134, %v1134
        %v1145 = vunpack.c.l.b16 %v1142
        %v1146 = vpack.c.b16 %v1145, %v1145
        %1147 = vrot.lane.b32.xlu0 %v1146, 96
        %v1148 = vpop.permute.xlu0 %1147
        %vm1149 = vcmask 64512
        %v1151 = vsel %vm1149, %v1142, 0
        %v1154 = vsel %vm1149, %v1148, 0
        %1156 = vmatpush.bf16.xpose.msra.mxu0 0
        %1157 = vmatpush.bf16.xpose.msra.mxu0 0
        %1158 = vmatpush.bf16.xpose.msra.mxu0 0
        %1159 = vmatpush.bf16.xpose.msra.mxu0 0
        %1160 = vmatpush.bf16.xpose.msra.mxu0 0
        %1161 = vmatpush.bf16.xpose.msra.mxu0 0
        %1162 = vmatpush.bf16.xpose.msra.mxu0 0
        %1163 = vmatpush.bf16.xpose.msra.mxu0 %v1154
        %1164 = vmatmul.bf16.gmra.mxu0 %v1151
        %v1165 = vpop.f32.mrf.mxu0
        %v1166 = vadd.f32 0.0, %v1165
        %v1167 = vpop.f32.mrf.mxu0
        %1168 = vdwg.mxu0
        %v1170 = vunpack.c.l.b16 %v1143
        %v1171 = vpack.c.b16 %v1170, %v1170
        %1172 = vrot.lane.b32.xlu0 %v1171, 96
        %v1173 = vpop.permute.xlu0 %1172
        %v1175 = vsel %vm1149, %v1143, 0
        %v1178 = vsel %vm1149, %v1173, 0
        %1180 = vmatpush.bf16.xpose.msra.mxu0 0
        %1181 = vmatpush.bf16.xpose.msra.mxu0 0
        %1182 = vmatpush.bf16.xpose.msra.mxu0 0
        %1183 = vmatpush.bf16.xpose.msra.mxu0 0
        %1184 = vmatpush.bf16.xpose.msra.mxu0 0
        %1185 = vmatpush.bf16.xpose.msra.mxu0 0
        %1186 = vmatpush.bf16.xpose.msra.mxu0 0
        %1187 = vmatpush.bf16.xpose.msra.mxu0 %v1178
        %1188 = vmatmul.bf16.gmra.mxu0 %v1175
        %v1189 = vpop.f32.mrf.mxu0
        %v1190 = vadd.f32 0.0, %v1189
        %v1191 = vpop.f32.mrf.mxu0
        %1192 = vdwg.mxu0
        %v1193 = vmul.f32 %v1166, 0.35355338
        %v1194 = vmul.f32 %v1190, 0.35355338
        %v1197 = vperm.slane %v1136, 0
        %v1198 = vperm.slane %v1137, 0
        %v1201 = vadd.f32 %v1193, %v1197
        %v1202 = vadd.f32 %v1194, %v1198
        %v1203 = vsel %vm1149, %v1201, -inf
        %1204 = vmax.xlane.f32.xlu0 %v1203
        %v1205 = vpop.xlane.xlu0 %1204
        %v1206 = vsel %vm1149, %v1202, -inf
        %1207 = vmax.xlane.f32.xlu0 %v1206
        %v1208 = vpop.xlane.xlu0 %1207
        %v1209 = vsub.f32 %v1201, %v1205
        %v1210 = vsub.f32 %v1202, %v1208
        %v1211 = vmul.f32 %v1209, 1.442695
        %v1212 = vpow.pop %v1211
        %v1213 = vmul.f32 %v1210, 1.442695
        %v1214 = vpow.pop %v1213
        %v1215 = vmul.f32 %v1212, %v1140
        %v1216 = vmul.f32 %v1214, %v1141
        %v1217 = vsel %vm1149, %v1215, 0.0
        %1218 = vadd.xlane.f32.xlu0 %v1217
        %v1219 = vpop.xlane.xlu0 %1218
        %v1220 = vsel %vm1149, %v1216, 0.0
        %1221 = vadd.xlane.f32.xlu0 %v1220
        %v1222 = vpop.xlane.xlu0 %1221
        %v1223 = vadd.f32 %v1219, 1e-06
        %v1224 = vadd.f32 %v1222, 1e-06
        %v1225 = vrcp.pop %v1223
        %v1226 = vmul.f32 %v1223, %v1225
        %v1227 = vsub.f32 1.0, %v1226
        %v1228 = vmul.f32 %v1225, %v1227
        %v1229 = vadd.f32 %v1225, %v1228
        %vm1230 = vweird.f32 %v1223
        %vm1231 = vweird.f32 %v1225
        %vm1232 = vmor %vm1230, %vm1231
        %v1233 = vsel %vm1232, %v1225, %v1229
        %v1234 = vand.u32 2147483647, %v1223
        %vm1235 = vcmp.eq.f32.partialorder %v1234, 8.507059e+37
        %v1236 = vand.u32 %v1223, 2147483648
        %v1237 = vor.u32 1.1754944e-38, %v1236
        %v1238 = vsel %vm1235, %v1237, %v1233
        %v1239 = vrcp.pop %v1224
        %v1240 = vmul.f32 %v1224, %v1239
        %v1241 = vsub.f32 1.0, %v1240
        %v1242 = vmul.f32 %v1239, %v1241
        %v1243 = vadd.f32 %v1239, %v1242
        %vm1244 = vweird.f32 %v1224
        %vm1245 = vweird.f32 %v1239
        %vm1246 = vmor %vm1244, %vm1245
        %v1247 = vsel %vm1246, %v1239, %v1243
        %v1248 = vand.u32 2147483647, %v1224
        %vm1249 = vcmp.eq.f32.partialorder %v1248, 8.507059e+37
        %v1250 = vand.u32 %v1224, 2147483648
        %v1251 = vor.u32 1.1754944e-38, %v1250
        %v1252 = vsel %vm1249, %v1251, %v1247
        %v1253 = vmul.f32 %v1215, %v1238
        %v1254 = vmul.f32 %v1216, %v1252
        %v1255 = vpack.c.bf16 %v1253, %v1253
        %v1256 = vpack.c.bf16 %v1254, %v1254
        %1257 = vrot.lane.b32.xlu0 %v1146, 64
        %v1258 = vpop.permute.xlu0 %1257
        %v1260 = vsel %vm1149, %v1255, 0
        %vm1262 = vcmask 1043456
        %v1264 = vsel %vm1262, %v1258, 0
        %1266 = vmatpush.bf16.msra.mxu0 0
        %1267 = vmatpush.bf16.msra.mxu0 0
        %1268 = vmatpush.bf16.msra.mxu0 0
        %1269 = vmatpush.bf16.msra.mxu0 0
        %1270 = vmatpush.bf16.msra.mxu0 0
        %1271 = vmatpush.bf16.msra.mxu0 0
        %1272 = vmatpush.bf16.msra.mxu0 0
        %1273 = vmatpush.bf16.msra.mxu0 %v1264
        %1274 = vmatmul.bf16.gmra.mxu0 %v1260
        %v1275 = vpop.f32.mrf.mxu0
        %v1276 = vadd.f32 0.0, %v1275
        %v1277 = vpop.f32.mrf.mxu0
        %1278 = vdwg.mxu0
        %1279 = vrot.lane.b32.xlu0 %v1171, 64
        %v1280 = vpop.permute.xlu0 %1279
        %v1282 = vsel %vm1149, %v1256, 0
        %v1285 = vsel %vm1262, %v1280, 0
        %1287 = vmatpush.bf16.msra.mxu0 0
        %1288 = vmatpush.bf16.msra.mxu0 0
        %1289 = vmatpush.bf16.msra.mxu0 0
        %1290 = vmatpush.bf16.msra.mxu0 0
        %1291 = vmatpush.bf16.msra.mxu0 0
        %1292 = vmatpush.bf16.msra.mxu0 0
        %1293 = vmatpush.bf16.msra.mxu0 0
        %1294 = vmatpush.bf16.msra.mxu0 %v1285
        %1295 = vmatmul.bf16.gmra.mxu0 %v1282
        %v1296 = vpop.f32.mrf.mxu0
        %v1297 = vadd.f32 0.0, %v1296
        %v1298 = vpop.f32.mrf.mxu0
        %1299 = vdwg.mxu0
        %v1300 = vpack.c.bf16 %v1297, %v1276
        %v1301 = vld [vmem:[%s1046] sm:$0xf]
        %1302 = vrot.lane.b32.xlu0 %v1146, 120
        %v1303 = vpop.permute.xlu0 %1302
        %1304 = vrot.lane.b32.xlu0 %v1146, 88
        %v1305 = vpop.permute.xlu0 %1304
        %v1307 = vsel %vm1149, %v1303, 0
        %v1310 = vsel %vm1149, %v1305, 0
        %1312 = vmatpush.bf16.xpose.msra.mxu0 0
        %1313 = vmatpush.bf16.xpose.msra.mxu0 0
        %1314 = vmatpush.bf16.xpose.msra.mxu0 0
        %1315 = vmatpush.bf16.xpose.msra.mxu0 0
        %1316 = vmatpush.bf16.xpose.msra.mxu0 0
        %1317 = vmatpush.bf16.xpose.msra.mxu0 0
        %1318 = vmatpush.bf16.xpose.msra.mxu0 0
        %1319 = vmatpush.bf16.xpose.msra.mxu0 %v1310
        %1320 = vmatmul.bf16.gmra.mxu0 %v1307
        %v1321 = vpop.f32.mrf.mxu0
        %v1322 = vadd.f32 0.0, %v1321
        %v1323 = vpop.f32.mrf.mxu0
        %1324 = vdwg.mxu0
        %1325 = vrot.lane.b32.xlu0 %v1171, 120
        %v1326 = vpop.permute.xlu0 %1325
        %1327 = vrot.lane.b32.xlu0 %v1171, 88
        %v1328 = vpop.permute.xlu0 %1327
        %v1330 = vsel %vm1149, %v1326, 0
        %v1333 = vsel %vm1149, %v1328, 0
        %1335 = vmatpush.bf16.xpose.msra.mxu0 0
        %1336 = vmatpush.bf16.xpose.msra.mxu0 0
        %1337 = vmatpush.bf16.xpose.msra.mxu0 0
        %1338 = vmatpush.bf16.xpose.msra.mxu0 0
        %1339 = vmatpush.bf16.xpose.msra.mxu0 0
        %1340 = vmatpush.bf16.xpose.msra.mxu0 0
        %1341 = vmatpush.bf16.xpose.msra.mxu0 0
        %1342 = vmatpush.bf16.xpose.msra.mxu0 %v1333
        %1343 = vmatmul.bf16.gmra.mxu0 %v1330
        %v1344 = vpop.f32.mrf.mxu0
        %v1345 = vadd.f32 0.0, %v1344
        %v1346 = vpop.f32.mrf.mxu0
        %1347 = vdwg.mxu0
        %v1348 = vmul.f32 %v1322, 0.35355338
        %v1349 = vmul.f32 %v1345, 0.35355338
        %v1350 = vadd.f32 %v1348, %v1197
        %v1351 = vadd.f32 %v1349, %v1198
        %v1352 = vsel %vm1149, %v1350, -inf
        %1353 = vmax.xlane.f32.xlu0 %v1352
        %v1354 = vpop.xlane.xlu0 %1353
        %v1355 = vsel %vm1149, %v1351, -inf
        %1356 = vmax.xlane.f32.xlu0 %v1355
        %v1357 = vpop.xlane.xlu0 %1356
        %v1358 = vsub.f32 %v1350, %v1354
        %v1359 = vsub.f32 %v1351, %v1357
        %v1360 = vmul.f32 %v1358, 1.442695
        %v1361 = vpow.pop %v1360
        %v1362 = vmul.f32 %v1359, 1.442695
        %v1363 = vpow.pop %v1362
        %v1364 = vmul.f32 %v1361, %v1140
        %v1365 = vmul.f32 %v1363, %v1141
        %v1366 = vsel %vm1149, %v1364, 0.0
        %1367 = vadd.xlane.f32.xlu0 %v1366
        %v1368 = vpop.xlane.xlu0 %1367
        %v1369 = vsel %vm1149, %v1365, 0.0
        %1370 = vadd.xlane.f32.xlu0 %v1369
        %v1371 = vpop.xlane.xlu0 %1370
        %v1372 = vadd.f32 %v1368, 1e-06
        %v1373 = vadd.f32 %v1371, 1e-06
        %v1374 = vrcp.pop %v1372
        %v1375 = vmul.f32 %v1372, %v1374
        %v1376 = vsub.f32 1.0, %v1375
        %v1377 = vmul.f32 %v1374, %v1376
        %v1378 = vadd.f32 %v1374, %v1377
        %vm1379 = vweird.f32 %v1372
        %vm1380 = vweird.f32 %v1374
        %vm1381 = vmor %vm1379, %vm1380
        %v1382 = vsel %vm1381, %v1374, %v1378
        %v1383 = vand.u32 2147483647, %v1372
        %vm1384 = vcmp.eq.f32.partialorder %v1383, 8.507059e+37
        %v1385 = vand.u32 %v1372, 2147483648
        %v1386 = vor.u32 1.1754944e-38, %v1385
        %v1387 = vsel %vm1384, %v1386, %v1382
        %v1388 = vrcp.pop %v1373
        %v1389 = vmul.f32 %v1373, %v1388
        %v1390 = vsub.f32 1.0, %v1389
        %v1391 = vmul.f32 %v1388, %v1390
        %v1392 = vadd.f32 %v1388, %v1391
        %vm1393 = vweird.f32 %v1373
        %vm1394 = vweird.f32 %v1388
        %vm1395 = vmor %vm1393, %vm1394
        %v1396 = vsel %vm1395, %v1388, %v1392
        %v1397 = vand.u32 2147483647, %v1373
        %vm1398 = vcmp.eq.f32.partialorder %v1397, 8.507059e+37
        %v1399 = vand.u32 %v1373, 2147483648
        %v1400 = vor.u32 1.1754944e-38, %v1399
        %v1401 = vsel %vm1398, %v1400, %v1396
        %v1402 = vmul.f32 %v1364, %v1387
        %v1403 = vmul.f32 %v1365, %v1401
        %v1404 = vpack.c.bf16 %v1402, %v1402
        %v1405 = vpack.c.bf16 %v1403, %v1403
        %1406 = vrot.lane.b32.xlu0 %v1146, 56
        %v1407 = vpop.permute.xlu0 %1406
        %v1409 = vsel %vm1149, %v1404, 0
        %v1412 = vsel %vm1262, %v1407, 0
        %1414 = vmatpush.bf16.msra.mxu0 0
        %1415 = vmatpush.bf16.msra.mxu0 0
        %1416 = vmatpush.bf16.msra.mxu0 0
        %1417 = vmatpush.bf16.msra.mxu0 0
        %1418 = vmatpush.bf16.msra.mxu0 0
        %1419 = vmatpush.bf16.msra.mxu0 0
        %1420 = vmatpush.bf16.msra.mxu0 0
        %1421 = vmatpush.bf16.msra.mxu0 %v1412
        %1422 = vmatmul.bf16.gmra.mxu0 %v1409
        %v1423 = vpop.f32.mrf.mxu0
        %v1424 = vadd.f32 0.0, %v1423
        %v1425 = vpop.f32.mrf.mxu0
        %1426 = vdwg.mxu0
        %1427 = vrot.lane.b32.xlu0 %v1171, 56
        %v1428 = vpop.permute.xlu0 %1427
        %v1430 = vsel %vm1149, %v1405, 0
        %v1433 = vsel %vm1262, %v1428, 0
        %1435 = vmatpush.bf16.msra.mxu0 0
        %1436 = vmatpush.bf16.msra.mxu0 0
        %1437 = vmatpush.bf16.msra.mxu0 0
        %1438 = vmatpush.bf16.msra.mxu0 0
        %1439 = vmatpush.bf16.msra.mxu0 0
        %1440 = vmatpush.bf16.msra.mxu0 0
        %1441 = vmatpush.bf16.msra.mxu0 0
        %1442 = vmatpush.bf16.msra.mxu0 %v1433
        %1443 = vmatmul.bf16.gmra.mxu0 %v1430
        %v1444 = vpop.f32.mrf.mxu0
        %v1445 = vadd.f32 0.0, %v1444
        %v1446 = vpop.f32.mrf.mxu0
        %1447 = vdwg.mxu0
        %v1448 = vpack.c.bf16 %v1445, %v1424
        %s1449 = scalar_lea.vmem %s1046, 4
        %v1450 = vld [vmem:[%s1449] sm:$0xf]
        %v1452 = vsel %vm1149, %v1448, 0
        %v1455 = vsel %vm1262, %v1450, 0
        %1457 = vmatpush.bf16.msra.mxu0 0
        %1458 = vmatpush.bf16.msra.mxu0 0
        %1459 = vmatpush.bf16.msra.mxu0 0
        %1460 = vmatpush.bf16.msra.mxu0 0
        %1461 = vmatpush.bf16.msra.mxu0 0
        %1462 = vmatpush.bf16.msra.mxu0 0
        %1463 = vmatpush.bf16.msra.mxu0 0
        %1464 = vmatpush.bf16.msra.mxu0 %v1455
        %1465 = vmatmul.bf16.gmra.mxu0 %v1452
        %v1466 = vpop.f32.mrf.mxu0
        %v1467 = vadd.f32 0.0, %v1466
        %v1468 = vpop.f32.mrf.mxu0
        %v1469 = vadd.f32 0.0, %v1468
        %1470 = vdwg.mxu0
        %v1472 = vsel %vm1149, %v1300, 0
        %v1475 = vsel %vm1262, %v1301, 0
        %1477 = vmatpush.bf16.msra.mxu0 0
        %1478 = vmatpush.bf16.msra.mxu0 0
        %1479 = vmatpush.bf16.msra.mxu0 0
        %1480 = vmatpush.bf16.msra.mxu0 0
        %1481 = vmatpush.bf16.msra.mxu0 0
        %1482 = vmatpush.bf16.msra.mxu0 0
        %1483 = vmatpush.bf16.msra.mxu0 0
        %1484 = vmatpush.bf16.msra.mxu0 %v1475
        %1485 = vmatmul.bf16.gmra.mxu0 %v1472
        %v1486 = vpop.f32.mrf.mxu0
        %v1487 = vadd.f32 %v1467, %v1486
        %v1488 = vpop.f32.mrf.mxu0
        %v1489 = vadd.f32 %v1469, %v1488
        %1490 = vdwg.mxu0
        %1491 = vrot.lane.b32.xlu0 %v1146, 112
        %v1492 = vpop.permute.xlu0 %1491
        %1493 = vrot.lane.b32.xlu0 %v1146, 80
        %v1494 = vpop.permute.xlu0 %1493
        %v1496 = vsel %vm1149, %v1492, 0
        %v1499 = vsel %vm1149, %v1494, 0
        %1501 = vmatpush.bf16.xpose.msra.mxu0 0
        %1502 = vmatpush.bf16.xpose.msra.mxu0 0
        %1503 = vmatpush.bf16.xpose.msra.mxu0 0
        %1504 = vmatpush.bf16.xpose.msra.mxu0 0
        %1505 = vmatpush.bf16.xpose.msra.mxu0 0
        %1506 = vmatpush.bf16.xpose.msra.mxu0 0
        %1507 = vmatpush.bf16.xpose.msra.mxu0 0
        %1508 = vmatpush.bf16.xpose.msra.mxu0 %v1499
        %1509 = vmatmul.bf16.gmra.mxu0 %v1496
        %v1510 = vpop.f32.mrf.mxu0
        %v1511 = vadd.f32 0.0, %v1510
        %v1512 = vpop.f32.mrf.mxu0
        %1513 = vdwg.mxu0
        %1514 = vrot.lane.b32.xlu0 %v1171, 112
        %v1515 = vpop.permute.xlu0 %1514
        %1516 = vrot.lane.b32.xlu0 %v1171, 80
        %v1517 = vpop.permute.xlu0 %1516
        %v1519 = vsel %vm1149, %v1515, 0
        %v1522 = vsel %vm1149, %v1517, 0
        %1524 = vmatpush.bf16.xpose.msra.mxu0 0
        %1525 = vmatpush.bf16.xpose.msra.mxu0 0
        %1526 = vmatpush.bf16.xpose.msra.mxu0 0
        %1527 = vmatpush.bf16.xpose.msra.mxu0 0
        %1528 = vmatpush.bf16.xpose.msra.mxu0 0
        %1529 = vmatpush.bf16.xpose.msra.mxu0 0
        %1530 = vmatpush.bf16.xpose.msra.mxu0 0
        %1531 = vmatpush.bf16.xpose.msra.mxu0 %v1522
        %1532 = vmatmul.bf16.gmra.mxu0 %v1519
        %v1533 = vpop.f32.mrf.mxu0
        %v1534 = vadd.f32 0.0, %v1533
        %v1535 = vpop.f32.mrf.mxu0
        %1536 = vdwg.mxu0
        %v1537 = vmul.f32 %v1511, 0.35355338
        %v1538 = vmul.f32 %v1534, 0.35355338
        %v1539 = vadd.f32 %v1537, %v1197
        %v1540 = vadd.f32 %v1538, %v1198
        %v1541 = vsel %vm1149, %v1539, -inf
        %1542 = vmax.xlane.f32.xlu0 %v1541
        %v1543 = vpop.xlane.xlu0 %1542
        %v1544 = vsel %vm1149, %v1540, -inf
        %1545 = vmax.xlane.f32.xlu0 %v1544
        %v1546 = vpop.xlane.xlu0 %1545
        %v1547 = vsub.f32 %v1539, %v1543
        %v1548 = vsub.f32 %v1540, %v1546
        %v1549 = vmul.f32 %v1547, 1.442695
        %v1550 = vpow.pop %v1549
        %v1551 = vmul.f32 %v1548, 1.442695
        %v1552 = vpow.pop %v1551
        %v1553 = vmul.f32 %v1550, %v1140
        %v1554 = vmul.f32 %v1552, %v1141
        %v1555 = vsel %vm1149, %v1553, 0.0
        %1556 = vadd.xlane.f32.xlu0 %v1555
        %v1557 = vpop.xlane.xlu0 %1556
        %v1558 = vsel %vm1149, %v1554, 0.0
        %1559 = vadd.xlane.f32.xlu0 %v1558
        %v1560 = vpop.xlane.xlu0 %1559
        %v1561 = vadd.f32 %v1557, 1e-06
        %v1562 = vadd.f32 %v1560, 1e-06
        %v1563 = vrcp.pop %v1561
        %v1564 = vmul.f32 %v1561, %v1563
        %v1565 = vsub.f32 1.0, %v1564
        %v1566 = vmul.f32 %v1563, %v1565
        %v1567 = vadd.f32 %v1563, %v1566
        %vm1568 = vweird.f32 %v1561
        %vm1569 = vweird.f32 %v1563
        %vm1570 = vmor %vm1568, %vm1569
        %v1571 = vsel %vm1570, %v1563, %v1567
        %v1572 = vand.u32 2147483647, %v1561
        %vm1573 = vcmp.eq.f32.partialorder %v1572, 8.507059e+37
        %v1574 = vand.u32 %v1561, 2147483648
        %v1575 = vor.u32 1.1754944e-38, %v1574
        %v1576 = vsel %vm1573, %v1575, %v1571
        %v1577 = vrcp.pop %v1562
        %v1578 = vmul.f32 %v1562, %v1577
        %v1579 = vsub.f32 1.0, %v1578
        %v1580 = vmul.f32 %v1577, %v1579
        %v1581 = vadd.f32 %v1577, %v1580
        %vm1582 = vweird.f32 %v1562
        %vm1583 = vweird.f32 %v1577
        %vm1584 = vmor %vm1582, %vm1583
        %v1585 = vsel %vm1584, %v1577, %v1581
        %v1586 = vand.u32 2147483647, %v1562
        %vm1587 = vcmp.eq.f32.partialorder %v1586, 8.507059e+37
        %v1588 = vand.u32 %v1562, 2147483648
        %v1589 = vor.u32 1.1754944e-38, %v1588
        %v1590 = vsel %vm1587, %v1589, %v1585
        %v1591 = vmul.f32 %v1553, %v1576
        %v1592 = vmul.f32 %v1554, %v1590
        %v1593 = vpack.c.bf16 %v1591, %v1591
        %v1594 = vpack.c.bf16 %v1592, %v1592
        %1595 = vrot.lane.b32.xlu0 %v1146, 48
        %v1596 = vpop.permute.xlu0 %1595
        %v1598 = vsel %vm1149, %v1593, 0
        %v1601 = vsel %vm1262, %v1596, 0
        %1603 = vmatpush.bf16.msra.mxu0 0
        %1604 = vmatpush.bf16.msra.mxu0 0
        %1605 = vmatpush.bf16.msra.mxu0 0
        %1606 = vmatpush.bf16.msra.mxu0 0
        %1607 = vmatpush.bf16.msra.mxu0 0
        %1608 = vmatpush.bf16.msra.mxu0 0
        %1609 = vmatpush.bf16.msra.mxu0 0
        %1610 = vmatpush.bf16.msra.mxu0 %v1601
        %1611 = vmatmul.bf16.gmra.mxu0 %v1598
        %v1612 = vpop.f32.mrf.mxu0
        %v1613 = vadd.f32 0.0, %v1612
        %v1614 = vpop.f32.mrf.mxu0
        %1615 = vdwg.mxu0
        %1616 = vrot.lane.b32.xlu0 %v1171, 48
        %v1617 = vpop.permute.xlu0 %1616
        %v1619 = vsel %vm1149, %v1594, 0
        %v1622 = vsel %vm1262, %v1617, 0
        %1624 = vmatpush.bf16.msra.mxu0 0
        %1625 = vmatpush.bf16.msra.mxu0 0
        %1626 = vmatpush.bf16.msra.mxu0 0
        %1627 = vmatpush.bf16.msra.mxu0 0
        %1628 = vmatpush.bf16.msra.mxu0 0
        %1629 = vmatpush.bf16.msra.mxu0 0
        %1630 = vmatpush.bf16.msra.mxu0 0
        %1631 = vmatpush.bf16.msra.mxu0 %v1622
        %1632 = vmatmul.bf16.gmra.mxu0 %v1619
        %v1633 = vpop.f32.mrf.mxu0
        %v1634 = vadd.f32 0.0, %v1633
        %v1635 = vpop.f32.mrf.mxu0
        %1636 = vdwg.mxu0
        %v1637 = vpack.c.bf16 %v1634, %v1613
        %s1638 = scalar_lea.vmem %s1046, 8
        %v1639 = vld [vmem:[%s1638] sm:$0xf]
        %v1641 = vsel %vm1149, %v1637, 0
        %v1644 = vsel %vm1262, %v1639, 0
        %1646 = vmatpush.bf16.msra.mxu0 0
        %1647 = vmatpush.bf16.msra.mxu0 0
        %1648 = vmatpush.bf16.msra.mxu0 0
        %1649 = vmatpush.bf16.msra.mxu0 0
        %1650 = vmatpush.bf16.msra.mxu0 0
        %1651 = vmatpush.bf16.msra.mxu0 0
        %1652 = vmatpush.bf16.msra.mxu0 0
        %1653 = vmatpush.bf16.msra.mxu0 %v1644
        %1654 = vmatmul.bf16.gmra.mxu0 %v1641
        %v1655 = vpop.f32.mrf.mxu0
        %v1656 = vadd.f32 0.0, %v1655
        %v1657 = vpop.f32.mrf.mxu0
        %v1658 = vadd.f32 0.0, %v1657
        %1659 = vdwg.mxu0
        %v1660 = vadd.f32 %v1487, %v1656
        %v1661 = vadd.f32 %v1489, %v1658
        %1662 = vrot.lane.b32.xlu0 %v1146, 104
        %v1663 = vpop.permute.xlu0 %1662
        %1664 = vrot.lane.b32.xlu0 %v1146, 72
        %v1665 = vpop.permute.xlu0 %1664
        %v1667 = vsel %vm1149, %v1663, 0
        %v1670 = vsel %vm1149, %v1665, 0
        %1672 = vmatpush.bf16.xpose.msra.mxu0 0
        %1673 = vmatpush.bf16.xpose.msra.mxu0 0
        %1674 = vmatpush.bf16.xpose.msra.mxu0 0
        %1675 = vmatpush.bf16.xpose.msra.mxu0 0
        %1676 = vmatpush.bf16.xpose.msra.mxu0 0
        %1677 = vmatpush.bf16.xpose.msra.mxu0 0
        %1678 = vmatpush.bf16.xpose.msra.mxu0 0
        %1679 = vmatpush.bf16.xpose.msra.mxu0 %v1670
        %1680 = vmatmul.bf16.gmra.mxu0 %v1667
        %v1681 = vpop.f32.mrf.mxu0
        %v1682 = vadd.f32 0.0, %v1681
        %v1683 = vpop.f32.mrf.mxu0
        %1684 = vdwg.mxu0
        %1685 = vrot.lane.b32.xlu0 %v1171, 104
        %v1686 = vpop.permute.xlu0 %1685
        %1687 = vrot.lane.b32.xlu0 %v1171, 72
        %v1688 = vpop.permute.xlu0 %1687
        %v1690 = vsel %vm1149, %v1686, 0
        %v1693 = vsel %vm1149, %v1688, 0
        %1695 = vmatpush.bf16.xpose.msra.mxu0 0
        %1696 = vmatpush.bf16.xpose.msra.mxu0 0
        %1697 = vmatpush.bf16.xpose.msra.mxu0 0
        %1698 = vmatpush.bf16.xpose.msra.mxu0 0
        %1699 = vmatpush.bf16.xpose.msra.mxu0 0
        %1700 = vmatpush.bf16.xpose.msra.mxu0 0
        %1701 = vmatpush.bf16.xpose.msra.mxu0 0
        %1702 = vmatpush.bf16.xpose.msra.mxu0 %v1693
        %1703 = vmatmul.bf16.gmra.mxu0 %v1690
        %v1704 = vpop.f32.mrf.mxu0
        %v1705 = vadd.f32 0.0, %v1704
        %v1706 = vpop.f32.mrf.mxu0
        %1707 = vdwg.mxu0
        %v1708 = vmul.f32 %v1682, 0.35355338
        %v1709 = vmul.f32 %v1705, 0.35355338
        %v1710 = vadd.f32 %v1708, %v1197
        %v1711 = vadd.f32 %v1709, %v1198
        %v1712 = vsel %vm1149, %v1710, -inf
        %1713 = vmax.xlane.f32.xlu0 %v1712
        %v1714 = vpop.xlane.xlu0 %1713
        %v1715 = vsel %vm1149, %v1711, -inf
        %1716 = vmax.xlane.f32.xlu0 %v1715
        %v1717 = vpop.xlane.xlu0 %1716
        %v1718 = vsub.f32 %v1710, %v1714
        %v1719 = vsub.f32 %v1711, %v1717
        %v1720 = vmul.f32 %v1718, 1.442695
        %v1721 = vpow.pop %v1720
        %v1722 = vmul.f32 %v1719, 1.442695
        %v1723 = vpow.pop %v1722
        %v1724 = vmul.f32 %v1721, %v1140
        %v1725 = vmul.f32 %v1723, %v1141
        %v1726 = vsel %vm1149, %v1724, 0.0
        %1727 = vadd.xlane.f32.xlu0 %v1726
        %v1728 = vpop.xlane.xlu0 %1727
        %v1729 = vsel %vm1149, %v1725, 0.0
        %1730 = vadd.xlane.f32.xlu0 %v1729
        %v1731 = vpop.xlane.xlu0 %1730
        %v1732 = vadd.f32 %v1728, 1e-06
        %v1733 = vadd.f32 %v1731, 1e-06
        %v1734 = vrcp.pop %v1732
        %v1735 = vmul.f32 %v1732, %v1734
        %v1736 = vsub.f32 1.0, %v1735
        %v1737 = vmul.f32 %v1734, %v1736
        %v1738 = vadd.f32 %v1734, %v1737
        %vm1739 = vweird.f32 %v1732
        %vm1740 = vweird.f32 %v1734
        %vm1741 = vmor %vm1739, %vm1740
        %v1742 = vsel %vm1741, %v1734, %v1738
        %v1743 = vand.u32 2147483647, %v1732
        %vm1744 = vcmp.eq.f32.partialorder %v1743, 8.507059e+37
        %v1745 = vand.u32 %v1732, 2147483648
        %v1746 = vor.u32 1.1754944e-38, %v1745
        %v1747 = vsel %vm1744, %v1746, %v1742
        %v1748 = vrcp.pop %v1733
        %v1749 = vmul.f32 %v1733, %v1748
        %v1750 = vsub.f32 1.0, %v1749
        %v1751 = vmul.f32 %v1748, %v1750
        %v1752 = vadd.f32 %v1748, %v1751
        %vm1753 = vweird.f32 %v1733
        %vm1754 = vweird.f32 %v1748
        %vm1755 = vmor %vm1753, %vm1754
        %v1756 = vsel %vm1755, %v1748, %v1752
        %v1757 = vand.u32 2147483647, %v1733
        %vm1758 = vcmp.eq.f32.partialorder %v1757, 8.507059e+37
        %v1759 = vand.u32 %v1733, 2147483648
        %v1760 = vor.u32 1.1754944e-38, %v1759
        %v1761 = vsel %vm1758, %v1760, %v1756
        %v1762 = vmul.f32 %v1724, %v1747
        %v1763 = vmul.f32 %v1725, %v1761
        %v1764 = vpack.c.bf16 %v1762, %v1762
        %v1765 = vpack.c.bf16 %v1763, %v1763
        %1766 = vrot.lane.b32.xlu0 %v1146, 40
        %v1767 = vpop.permute.xlu0 %1766
        %v1769 = vsel %vm1149, %v1764, 0
        %v1772 = vsel %vm1262, %v1767, 0
        %1774 = vmatpush.bf16.msra.mxu0 0
        %1775 = vmatpush.bf16.msra.mxu0 0
        %1776 = vmatpush.bf16.msra.mxu0 0
        %1777 = vmatpush.bf16.msra.mxu0 0
        %1778 = vmatpush.bf16.msra.mxu0 0
        %1779 = vmatpush.bf16.msra.mxu0 0
        %1780 = vmatpush.bf16.msra.mxu0 0
        %1781 = vmatpush.bf16.msra.mxu0 %v1772
        %1782 = vmatmul.bf16.gmra.mxu0 %v1769
        %v1783 = vpop.f32.mrf.mxu0
        %v1784 = vadd.f32 0.0, %v1783
        %v1785 = vpop.f32.mrf.mxu0
        %1786 = vdwg.mxu0
        %1787 = vrot.lane.b32.xlu0 %v1171, 40
        %v1788 = vpop.permute.xlu0 %1787
        %v1790 = vsel %vm1149, %v1765, 0
        %v1793 = vsel %vm1262, %v1788, 0
        %1795 = vmatpush.bf16.msra.mxu0 0
        %1796 = vmatpush.bf16.msra.mxu0 0
        %1797 = vmatpush.bf16.msra.mxu0 0
        %1798 = vmatpush.bf16.msra.mxu0 0
        %1799 = vmatpush.bf16.msra.mxu0 0
        %1800 = vmatpush.bf16.msra.mxu0 0
        %1801 = vmatpush.bf16.msra.mxu0 0
        %1802 = vmatpush.bf16.msra.mxu0 %v1793
        %1803 = vmatmul.bf16.gmra.mxu0 %v1790
        %v1804 = vpop.f32.mrf.mxu0
        %v1805 = vadd.f32 0.0, %v1804
        %v1806 = vpop.f32.mrf.mxu0
        %1807 = vdwg.mxu0
        %v1808 = vpack.c.bf16 %v1805, %v1784
        %s1809 = scalar_lea.vmem %s1046, 12
        %v1810 = vld [vmem:[%s1809] sm:$0xf]
        %v1812 = vsel %vm1149, %v1808, 0
        %v1815 = vsel %vm1262, %v1810, 0
        %1817 = vmatpush.bf16.msra.mxu0 0
        %1818 = vmatpush.bf16.msra.mxu0 0
        %1819 = vmatpush.bf16.msra.mxu0 0
        %1820 = vmatpush.bf16.msra.mxu0 0
        %1821 = vmatpush.bf16.msra.mxu0 0
        %1822 = vmatpush.bf16.msra.mxu0 0
        %1823 = vmatpush.bf16.msra.mxu0 0
        %1824 = vmatpush.bf16.msra.mxu0 %v1815
        %1825 = vmatmul.bf16.gmra.mxu0 %v1812
        %v1826 = vpop.f32.mrf.mxu0
        %v1827 = vadd.f32 0.0, %v1826
        %v1828 = vpop.f32.mrf.mxu0
        %v1829 = vadd.f32 0.0, %v1828
        %1830 = vdwg.mxu0
        %v1831 = vadd.f32 %v1660, %v1827
        %v1832 = vadd.f32 %v1661, %v1829
        %v1833 = vld [vmem:[%s866] sm:$0x1]
        %v1835 = vperm.slane %v1833, 0
        %v1837 = vadd.f32 %v1831, %v1835
        %v1838 = vadd.f32 %v1832, %v1835
        %v1839 = vadd.f32 %v1095, %v1837
        %v1840 = vadd.f32 %v1096, %v1838
        %v1841 = vld [vmem:[%s875] sm:$0x1]
        %v1842 = vld [vmem:[%s884] sm:$0x1]
        %v1843 = vsel %vm1118, %v1839, 0.0
        %1844 = vadd.xlane.f32.xlu0 %v1843
        %v1845 = vpop.xlane.xlu0 %1844
        %v1846 = vsel %vm1118, %v1840, 0.0
        %1847 = vadd.xlane.f32.xlu0 %v1846
        %v1848 = vpop.xlane.xlu0 %1847
        %v1849 = vrcp.pop 32.0
        %v1850 = vmul.f32 32.0, %v1849
        %v1851 = vsub.f32 1.0, %v1850
        %v1852 = vmul.f32 %v1849, %v1851
        %v1853 = vadd.f32 %v1849, %v1852
        %vm1854 = vweird.f32 %v1849
        %v1855 = vsel %vm1854, %v1849, %v1853
        %v1856 = vmul.f32 %v1845, %v1855
        %v1857 = vmul.f32 %v1848, %v1855
        %v1858 = vsub.f32 %v1839, %v1856
        %v1859 = vsub.f32 %v1840, %v1857
        %v1860 = vmul.f32 %v1858, %v1858
        %v1861 = vmul.f32 %v1859, %v1859
        %v1862 = vsel %vm1118, %v1860, 0.0
        %1863 = vadd.xlane.f32.xlu0 %v1862
        %v1864 = vpop.xlane.xlu0 %1863
        %v1865 = vsel %vm1118, %v1861, 0.0
        %1866 = vadd.xlane.f32.xlu0 %v1865
        %v1867 = vpop.xlane.xlu0 %1866
        %v1868 = vmul.f32 %v1864, %v1855
        %v1869 = vmul.f32 %v1867, %v1855
        %v1870 = vadd.f32 %v1868, 1e-05
        %v1871 = vadd.f32 %v1869, 1e-05
        %v1872 = vrsqrt.pop %v1870
        %v1873 = vmul.f32 %v1872, %v1870
        %v1874 = vmul.f32 %v1873, %v1872
        %v1875 = vmul.f32 0.5, %v1874
        %v1876 = vsub.f32 1.5, %v1875
        %v1877 = vmul.f32 %v1872, %v1876
        %vm1878 = vweird.f32 %v1870
        %vm1879 = vweird.f32 %v1872
        %vm1880 = vmor %vm1878, %vm1879
        %v1881 = vsel %vm1880, %v1872, %v1877
        %v1882 = vrsqrt.pop %v1871
        %v1883 = vmul.f32 %v1882, %v1871
        %v1884 = vmul.f32 %v1883, %v1882
        %v1885 = vmul.f32 0.5, %v1884
        %v1886 = vsub.f32 1.5, %v1885
        %v1887 = vmul.f32 %v1882, %v1886
        %vm1888 = vweird.f32 %v1871
        %vm1889 = vweird.f32 %v1882
        %vm1890 = vmor %vm1888, %vm1889
        %v1891 = vsel %vm1890, %v1882, %v1887
        %v1892 = vmul.f32 %v1858, %v1881
        %v1893 = vmul.f32 %v1859, %v1891
        %v1895 = vperm.slane %v1841, 0
        %v1897 = vmul.f32 %v1892, %v1895
        %v1898 = vmul.f32 %v1893, %v1895
        %v1900 = vperm.slane %v1842, 0
        %v1902 = vadd.f32 %v1897, %v1900
        %v1903 = vadd.f32 %v1898, %v1900
        %v1904 = vpack.c.bf16 %v1903, %v1902
        %v1905 = vld [vmem:[%s1051] sm:$0xf]
        %v1906 = vld [vmem:[%s1051 + $0x4] sm:$0xf]
        %v1907 = vld [vmem:[%s1051 + $0x8] sm:$0xf]
        %v1908 = vld [vmem:[%s1051 + $0xc] sm:$0xf]
        %v1909 = vld [vmem:[%s893] sm:$0x1]
        %v1911 = vperm.slane %v1909, 0
        %v1917 = vunpack.c.l.b16 %v1905
        %v1918 = vunpack.c.l.b16 %v1906
        %v1919 = vunpack.c.l.b16 %v1907
        %v1920 = vunpack.c.l.b16 %v1908
        %v1921 = vpack.c.b16 %v1918, %v1917
        %v1922 = vpack.c.b16 %v1920, %v1919
        %v1926 = vsel %vm1118, %v1904, 0
        %1928 = vmatpush.bf16.msra.mxu0 0
        %1929 = vmatpush.bf16.msra.mxu0 0
        %1930 = vmatpush.bf16.msra.mxu0 0
        %1931 = vmatpush.bf16.msra.mxu0 0
        %1932 = vmatpush.bf16.msra.mxu0 0
        %1933 = vmatpush.bf16.msra.mxu0 0
        %1934 = vmatpush.bf16.msra.mxu0 %v1922
        %1935 = vmatpush.bf16.msra.mxu0 %v1921
        %1936 = vmatmul.bf16.gmra.mxu0 %v1926
        %v1937 = vpop.f32.mrf.mxu0
        %v1938 = vadd.f32 %v1911, %v1937
        %v1939 = vpop.f32.mrf.mxu0
        %v1940 = vadd.f32 %v1911, %v1939
        %1941 = vdwg.mxu0
        %v1942 = vmax.f32 %v1938, 0.0
        %v1943 = vmax.f32 %v1940, 0.0
        %v1944 = vpack.c.bf16 %v1943, %v1942
        %v1945 = vld [vmem:[%s1056] sm:$0xf]
        %v1946 = vld [vmem:[%s1056 + $0x4] sm:$0xf]
        %v1947 = vld [vmem:[%s1056 + $0x8] sm:$0xf]
        %v1948 = vld [vmem:[%s1056 + $0xc] sm:$0xf]
        %v1949 = vld [vmem:[%s1056 + $0x10] sm:$0xf]
        %v1950 = vld [vmem:[%s1056 + $0x14] sm:$0xf]
        %v1951 = vld [vmem:[%s1056 + $0x18] sm:$0xf]
        %v1952 = vld [vmem:[%s1056 + $0x1c] sm:$0xf]
        %v1953 = vld [vmem:[%s902] sm:$0x1]
        %v1955 = vperm.slane %v1953, 0
        %v1965 = vunpack.c.l.b16 %v1945
        %v1966 = vunpack.c.l.b16 %v1946
        %v1967 = vunpack.c.l.b16 %v1947
        %v1968 = vunpack.c.l.b16 %v1948
        %v1969 = vunpack.c.l.b16 %v1949
        %v1970 = vunpack.c.l.b16 %v1950
        %v1971 = vunpack.c.l.b16 %v1951
        %v1972 = vunpack.c.l.b16 %v1952
        %v1973 = vpack.c.b16 %v1966, %v1965
        %v1974 = vpack.c.b16 %v1968, %v1967
        %v1975 = vpack.c.b16 %v1970, %v1969
        %v1976 = vpack.c.b16 %v1972, %v1971
        %vm1981 = vcmask 523264
        %v1983 = vsel %vm1981, %v1944, 0
        %1985 = vmatpush.bf16.msra.mxu0 0
        %1986 = vmatpush.bf16.msra.mxu0 0
        %1987 = vmatpush.bf16.msra.mxu0 0
        %1988 = vmatpush.bf16.msra.mxu0 0
        %1989 = vmatpush.bf16.msra.mxu0 %v1976
        %1990 = vmatpush.bf16.msra.mxu0 %v1975
        %1991 = vmatpush.bf16.msra.mxu0 %v1974
        %1992 = vmatpush.bf16.msra.mxu0 %v1973
        %1993 = vmatmul.bf16.gmra.mxu0 %v1983
        %v1994 = vpop.f32.mrf.mxu0
        %v1995 = vadd.f32 %v1955, %v1994
        %v1996 = vpop.f32.mrf.mxu0
        %v1997 = vadd.f32 %v1955, %v1996
        %1998 = vdwg.mxu0
        %v1999 = vadd.f32 %v1902, %v1995
        %v2000 = vadd.f32 %v1903, %v1997
        %v2001 = vld [vmem:[%s911] sm:$0x1]
        %v2002 = vld [vmem:[%s920] sm:$0x1]
        %v2003 = vsel %vm1118, %v1999, 0.0
        %2004 = vadd.xlane.f32.xlu0 %v2003
        %v2005 = vpop.xlane.xlu0 %2004
        %v2006 = vsel %vm1118, %v2000, 0.0
        %2007 = vadd.xlane.f32.xlu0 %v2006
        %v2008 = vpop.xlane.xlu0 %2007
        %v2009 = vmul.f32 %v2005, %v1855
        %v2010 = vmul.f32 %v2008, %v1855
        %v2011 = vsub.f32 %v1999, %v2009
        %v2012 = vsub.f32 %v2000, %v2010
        %v2013 = vmul.f32 %v2011, %v2011
        %v2014 = vmul.f32 %v2012, %v2012
        %v2015 = vsel %vm1118, %v2013, 0.0
        %2016 = vadd.xlane.f32.xlu0 %v2015
        %v2017 = vpop.xlane.xlu0 %2016
        %v2018 = vsel %vm1118, %v2014, 0.0
        %2019 = vadd.xlane.f32.xlu0 %v2018
        %v2020 = vpop.xlane.xlu0 %2019
        %v2021 = vmul.f32 %v2017, %v1855
        %v2022 = vmul.f32 %v2020, %v1855
        %v2023 = vadd.f32 %v2021, 1e-05
        %v2024 = vadd.f32 %v2022, 1e-05
        %v2025 = vrsqrt.pop %v2023
        %v2026 = vmul.f32 %v2025, %v2023
        %v2027 = vmul.f32 %v2026, %v2025
        %v2028 = vmul.f32 0.5, %v2027
        %v2029 = vsub.f32 1.5, %v2028
        %v2030 = vmul.f32 %v2025, %v2029
        %vm2031 = vweird.f32 %v2023
        %vm2032 = vweird.f32 %v2025
        %vm2033 = vmor %vm2031, %vm2032
        %v2034 = vsel %vm2033, %v2025, %v2030
        %v2035 = vrsqrt.pop %v2024
        %v2036 = vmul.f32 %v2035, %v2024
        %v2037 = vmul.f32 %v2036, %v2035
        %v2038 = vmul.f32 0.5, %v2037
        %v2039 = vsub.f32 1.5, %v2038
        %v2040 = vmul.f32 %v2035, %v2039
        %vm2041 = vweird.f32 %v2024
        %vm2042 = vweird.f32 %v2035
        %vm2043 = vmor %vm2041, %vm2042
        %v2044 = vsel %vm2043, %v2035, %v2040
        %v2045 = vmul.f32 %v2011, %v2034
        %v2046 = vmul.f32 %v2012, %v2044
        %v2048 = vperm.slane %v2001, 0
        %v2050 = vmul.f32 %v2045, %v2048
        %v2051 = vmul.f32 %v2046, %v2048
        %v2053 = vperm.slane %v2002, 0
        %v2055 = vadd.f32 %v2050, %v2053
        %v2056 = vadd.f32 %v2051, %v2053
        %2057 = vst.msk [vmem:[#allocation2] sm:$0xff] %vm1118, %v2055
        %2058 = vst.msk [vmem:[#allocation2 + $0x8] sm:$0xff] %vm1118, %v2056
        %p2059 = scmp.eq.s32.totalorder %s89, 1
        // Predicated region
        $region153: #{tpu_custom_call.1} parent=103 // pred_check
          %p2060 = pneg %p2059
        $region154: #{tpu_custom_call.1} parent=103 // pred_check_branch
          %2062 = sbr.rel (%p2060) target = $region156
        $region155: #{tpu_custom_call.1} parent=103 // pred_region
          %v2063 = vpack.c.bf16 %v2056, %v2055
          $region157: #{tpu_custom_call.1} parent=155
            #allocation22 [shape = 'u8[4096]{0}', space=vmem, size = 0x1000, scoped, tag = 'scoped memory for tpu_custom_call.1']
            #allocation23 [shape = 'u8[4096]{0}', space=vmem, size = 0x1000, scoped, tag = 'scoped memory for tpu_custom_call.1']
            #allocation24 [shape = 'u8[4096]{0}', space=vmem, size = 0x1000, scoped, tag = 'scoped memory for tpu_custom_call.1']
            #allocation25 [shape = 'u8[8192]{0}', space=vmem, size = 0x2000, scoped, tag = 'scoped memory for tpu_custom_call.1']
            #allocation26 [shape = 'u8[8192]{0}', space=vmem, size = 0x2000, scoped, tag = 'scoped memory for tpu_custom_call.1']
            #allocation27 [shape = 'u8[8192]{0}', space=vmem, size = 0x2000, scoped, tag = 'scoped memory for tpu_custom_call.1']
            #allocation28 [shape = 'u8[512]{0}', space=vmem, size = 0x400, scoped, tag = 'scoped memory for tpu_custom_call.1']
            #allocation29 [shape = 'u8[8192]{0}', space=vmem, size = 0x2000, scoped, tag = 'scoped memory for tpu_custom_call.1']
            #allocation30 [shape = 'u8[8192]{0}', space=vmem, size = 0x2000, scoped, tag = 'scoped memory for tpu_custom_call.1']
            #allocation31 [shape = 's32[9]{0}', space=sflag, size = 0x24, scoped, tag = 'scoped memory for tpu_custom_call.1']
            // Predicated region
            $region158: #{tpu_custom_call.1} parent=157 // pred_check
              _
            $region159: #{tpu_custom_call.1} parent=157 // pred_check_branch
              %2065 = sbr.rel target = $region161
            $region160: #{tpu_custom_call.1} parent=157 // pred_region
              %2066 = sst [smem:[#allocation34]] [#allocation33]
              %2067 = sst [smem:[#allocation35]] [#allocation32]
            $region161: #{tpu_custom_call.1} parent=157 // pred_fallthru
              _
            %2069 = shalt.err (0)
            %s2071 = sshll.u32 %s43, 4
            %s2072 = int_to_ptr.hbm [resolvable:$true] %s2071
            %s2073 = sshll.u32 [#allocation22], 4
            %s2074 = int_to_ptr.vmem [resolvable:$true] %s2073
            %2076 = dma.hbm_to_vmem [thread:$0]  %s2072, 128, %s2074, [#allocation31]
            %s2077 = scalar_lea.sflag [#allocation31], 1
            // Predicated region
            $region162: #{tpu_custom_call.1} parent=157 // pred_check
              _
            $region163: #{tpu_custom_call.1} parent=157 // pred_check_branch
              %2079 = sbr.rel target = $region165
            $region164: #{tpu_custom_call.1} parent=157 // pred_region
              %2080 = sst [smem:[#allocation34]] [#allocation37]
              %2081 = sst [smem:[#allocation35]] [#allocation36]
            $region165: #{tpu_custom_call.1} parent=157 // pred_fallthru
              _
            %2083 = shalt.err (0)
            %s2085 = sshll.u32 %s45, 4
            %s2086 = int_to_ptr.hbm [resolvable:$true] %s2085
            %s2087 = sshll.u32 [#allocation23], 4
            %s2088 = int_to_ptr.vmem [resolvable:$true] %s2087
            %2090 = dma.hbm_to_vmem [thread:$0]  %s2086, 128, %s2088, %s2077
            %s2091 = scalar_lea.sflag [#allocation31], 2
            // Predicated region
            $region166: #{tpu_custom_call.1} parent=157 // pred_check
              _
            $region167: #{tpu_custom_call.1} parent=157 // pred_check_branch
              %2093 = sbr.rel target = $region169
            $region168: #{tpu_custom_call.1} parent=157 // pred_region
              %2094 = sst [smem:[#allocation34]] [#allocation39]
              %2095 = sst [smem:[#allocation35]] [#allocation38]
            $region169: #{tpu_custom_call.1} parent=157 // pred_fallthru
              _
            %2097 = shalt.err (0)
            %s2099 = sshll.u32 %s47, 4
            %s2100 = int_to_ptr.hbm [resolvable:$true] %s2099
            %s2101 = sshll.u32 [#allocation24], 4
            %s2102 = int_to_ptr.vmem [resolvable:$true] %s2101
            %2104 = dma.hbm_to_vmem [thread:$0]  %s2100, 128, %s2102, %s2091
            %s2105 = scalar_lea.sflag [#allocation31], 3
            // Predicated region
            $region170: #{tpu_custom_call.1} parent=157 // pred_check
              _
            $region171: #{tpu_custom_call.1} parent=157 // pred_check_branch
              %2107 = sbr.rel (0) target = $region173
            $region172: #{tpu_custom_call.1} parent=157 // pred_region
              loop: start=0, step=1, limit=1
              $region174: #{tpu_custom_call.1} parent=172 // loop_pre_header
                _
              $region175: #{tpu_custom_call.1} parent=172 // loop_header
                %s2109 = sphi 0, %s2113
                %p2110 = scmp.ge.s32.totalorder %s2109, 1
                %s2114 = sphi %s49, %s49
                %s2115 = sphi [#allocation25], [#allocation25]
              $region176: #{tpu_custom_call.1} parent=172 // loop_header_branch
                %2112 = sbr.rel (%p2110) target = $region180
              $region177: #{tpu_custom_call.1} parent=172 // loop_body
                %v2116 = vld [vmem:[%s2114] sm:$0xff]
                %2117 = vst [vmem:[%s2115] sm:$0xff] %v2116
                %v2118 = vld [vmem:[%s2114 + $0x8] sm:$0xff]
                %2119 = vst [vmem:[%s2115 + $0x8] sm:$0xff] %v2118
              $region178: #{tpu_custom_call.1} parent=172 // loop_footer
                %s2113 = sadd.s32 1, %s2109
              $region179: #{tpu_custom_call.1} parent=172 // loop_footer_branch
                %2108 = sbr.rel target = $region175
              $region180: #{tpu_custom_call.1} parent=172 // loop_exit
                _
            $region173: #{tpu_custom_call.1} parent=157 // pred_fallthru
              _
            // Predicated region
            $region181: #{tpu_custom_call.1} parent=157 // pred_check
              _
            $region182: #{tpu_custom_call.1} parent=157 // pred_check_branch
              %2121 = sbr.rel target = $region184
            $region183: #{tpu_custom_call.1} parent=157 // pred_region
              _
            $region184: #{tpu_custom_call.1} parent=157 // pred_fallthru
              _
            // Predicated region
            $region185: #{tpu_custom_call.1} parent=157 // pred_check
              _
            $region186: #{tpu_custom_call.1} parent=157 // pred_check_branch
              %2124 = sbr.rel (0) target = $region188
            $region187: #{tpu_custom_call.1} parent=157 // pred_region
              %2125 = vsyncadd %s2105, 256
            $region188: #{tpu_custom_call.1} parent=157 // pred_fallthru
              _
            %s2126 = scalar_lea.sflag [#allocation31], 4
            // Predicated region
            $region189: #{tpu_custom_call.1} parent=157 // pred_check
              _
            $region190: #{tpu_custom_call.1} parent=157 // pred_check_branch
              %2128 = sbr.rel target = $region192
            $region191: #{tpu_custom_call.1} parent=157 // pred_region
              %2129 = sst [smem:[#allocation34]] [#allocation42]
              %2130 = sst [smem:[#allocation35]] [#allocation41]
            $region192: #{tpu_custom_call.1} parent=157 // pred_fallthru
              _
            %2132 = shalt.err (0)
            %s2134 = sshll.u32 %s51, 4
            %s2135 = int_to_ptr.hbm [resolvable:$true] %s2134
            %s2136 = sshll.u32 [#allocation26], 4
            %s2137 = int_to_ptr.vmem [resolvable:$true] %s2136
            %2139 = dma.hbm_to_vmem [thread:$0]  %s2135, 256, %s2137, %s2126
            %s2140 = scalar_lea.sflag [#allocation31], 5
            // Predicated region
            $region193: #{tpu_custom_call.1} parent=157 // pred_check
              _
            $region194: #{tpu_custom_call.1} parent=157 // pred_check_branch
              %2142 = sbr.rel target = $region196
            $region195: #{tpu_custom_call.1} parent=157 // pred_region
              %2143 = sst [smem:[#allocation34]] [#allocation44]
              %2144 = sst [smem:[#allocation35]] [#allocation43]
            $region196: #{tpu_custom_call.1} parent=157 // pred_fallthru
              _
            %2146 = shalt.err (0)
            %s2148 = sshll.u32 %s53, 4
            %s2149 = int_to_ptr.hbm [resolvable:$true] %s2148
            %s2150 = sshll.u32 [#allocation27], 4
            %s2151 = int_to_ptr.vmem [resolvable:$true] %s2150
            %2153 = dma.hbm_to_vmem [thread:$0]  %s2149, 256, %s2151, %s2140
            %s2154 = scalar_lea.sflag [#allocation31], 6
            // Predicated region
            $region197: #{tpu_custom_call.1} parent=157 // pred_check
              _
            $region198: #{tpu_custom_call.1} parent=157 // pred_check_branch
              %2156 = sbr.rel target = $region200
            $region199: #{tpu_custom_call.1} parent=157 // pred_region
              // Predicated region
              $region212: #{tpu_custom_call.1} parent=199 // pred_check
                _
              $region213: #{tpu_custom_call.1} parent=199 // pred_check_branch
                %2172 = sbr.rel (0) target = $region215
              $region214: #{tpu_custom_call.1} parent=199 // pred_region
                %s2174 = ssub.s32 2, 1
                loop: start=0, step=1, limit=1
                $region216: #{tpu_custom_call.1} parent=214 // loop_pre_header
                  _
                $region217: #{tpu_custom_call.1} parent=214 // loop_header
                  %s2176 = sphi 0, %s2180
                  %p2177 = scmp.ge.s32.totalorder %s2176, 1
                  %s2181 = sphi %s55, %s55
                  %s2182 = sphi [#allocation28], [#allocation28]
                $region218: #{tpu_custom_call.1} parent=214 // loop_header_branch
                  %2179 = sbr.rel (%p2177) target = $region222
                $region219: #{tpu_custom_call.1} parent=214 // loop_body
                  %v2183 = vld [vmem:[%s2181] sm:%s2174]
                  %2184 = vst [vmem:[%s2182] sm:%s2174] %v2183
                $region220: #{tpu_custom_call.1} parent=214 // loop_footer
                  %s2180 = sadd.s32 1, %s2176
                $region221: #{tpu_custom_call.1} parent=214 // loop_footer_branch
                  %2175 = sbr.rel target = $region217
                $region222: #{tpu_custom_call.1} parent=214 // loop_exit
                  _
              $region215: #{tpu_custom_call.1} parent=199 // pred_fallthru
                _
            $region200: #{tpu_custom_call.1} parent=157 // pred_fallthru
              _
            // Predicated region
            $region201: #{tpu_custom_call.1} parent=157 // pred_check
              _
            $region202: #{tpu_custom_call.1} parent=157 // pred_check_branch
              %2158 = sbr.rel (0) target = $region204
            $region203: #{tpu_custom_call.1} parent=157 // pred_region
              %s2160 = ssub.s32 2, 1
              loop: start=0, step=1, limit=1
              $region205: #{tpu_custom_call.1} parent=203 // loop_pre_header
                _
              $region206: #{tpu_custom_call.1} parent=203 // loop_header
                %s2162 = sphi 0, %s2166
                %p2163 = scmp.ge.s32.totalorder %s2162, 1
                %s2167 = sphi %s55, %s55
                %s2168 = sphi [#allocation28], [#allocation28]
              $region207: #{tpu_custom_call.1} parent=203 // loop_header_branch
                %2165 = sbr.rel (%p2163) target = $region211
              $region208: #{tpu_custom_call.1} parent=203 // loop_body
                %v2169 = vld [vmem:[%s2167] sm:%s2160]
                %2170 = vst [vmem:[%s2168] sm:%s2160] %v2169
              $region209: #{tpu_custom_call.1} parent=203 // loop_footer
                %s2166 = sadd.s32 1, %s2162
              $region210: #{tpu_custom_call.1} parent=203 // loop_footer_branch
                %2161 = sbr.rel target = $region206
              $region211: #{tpu_custom_call.1} parent=203 // loop_exit
                _
            $region204: #{tpu_custom_call.1} parent=157 // pred_fallthru
              _
            // Predicated region
            $region223: #{tpu_custom_call.1} parent=157 // pred_check
              _
            $region224: #{tpu_custom_call.1} parent=157 // pred_check_branch
              %2187 = sbr.rel (0) target = $region226
            $region225: #{tpu_custom_call.1} parent=157 // pred_region
              %2188 = vsyncadd %s2154, 16
            $region226: #{tpu_custom_call.1} parent=157 // pred_fallthru
              _
            %s2189 = scalar_lea.sflag [#allocation31], 7
            // Predicated region
            $region227: #{tpu_custom_call.1} parent=157 // pred_check
              _
            $region228: #{tpu_custom_call.1} parent=157 // pred_check_branch
              %2191 = sbr.rel target = $region230
            $region229: #{tpu_custom_call.1} parent=157 // pred_region
              %2192 = sst [smem:[#allocation34]] [#allocation47]
              %2193 = sst [smem:[#allocation35]] [#allocation46]
            $region230: #{tpu_custom_call.1} parent=157 // pred_fallthru
              _
            %2195 = shalt.err (0)
            %s2197 = sshll.u32 %s57, 4
            %s2198 = int_to_ptr.hbm [resolvable:$true] %s2197
            %s2199 = sshll.u32 [#allocation29], 4
            %s2200 = int_to_ptr.vmem [resolvable:$true] %s2199
            %2202 = dma.hbm_to_vmem [thread:$0]  %s2198, 256, %s2200, %s2189
            %s2203 = scalar_lea.sflag [#allocation31], 8
            // Predicated region
            $region231: #{tpu_custom_call.1} parent=157 // pred_check
              _
            $region232: #{tpu_custom_call.1} parent=157 // pred_check_branch
              %2205 = sbr.rel target = $region234
            $region233: #{tpu_custom_call.1} parent=157 // pred_region
              %2206 = sst [smem:[#allocation34]] [#allocation49]
              %2207 = sst [smem:[#allocation35]] [#allocation48]
            $region234: #{tpu_custom_call.1} parent=157 // pred_fallthru
              _
            %2209 = shalt.err (0)
            %s2211 = sshll.u32 %s59, 4
            %s2212 = int_to_ptr.hbm [resolvable:$true] %s2211
            %s2213 = sshll.u32 [#allocation30], 4
            %s2214 = int_to_ptr.vmem [resolvable:$true] %s2213
            %2216 = dma.hbm_to_vmem [thread:$0]  %s2212, 256, %s2214, %s2203
            %s2217 = smul.u32 4, 2
            %s2218 = smul.u32 %s2217, 1
            %s2219 = sshll.u32 %s2218, 4
            %2220 = dma.done [#allocation31], %s2219
            %s2221 = sshll.u32 %s2218, 4
            %2222 = dma.done %s2077, %s2221
            %s2223 = sshll.u32 %s2218, 4
            %2224 = dma.done %s2091, %s2223
            %s2225 = smul.u32 4, 4
            %s2226 = smul.u32 %s2225, 1
            %s2227 = sshll.u32 %s2226, 4
            %2228 = dma.done %s2105, %s2227
            %s2229 = sshll.u32 %s2226, 4
            %2230 = dma.done %s2126, %s2229
            %s2231 = sshll.u32 %s2226, 4
            %2232 = dma.done %s2140, %s2231
            %s2233 = smul.u32 1, 1
            %s2234 = sshll.u32 %s2233, 4
            %2235 = dma.done %s2154, %s2234
            %s2236 = sshll.u32 %s2226, 4
            %2237 = dma.done %s2189, %s2236
            %s2238 = sshll.u32 %s2226, 4
            %2239 = dma.done %s2203, %s2238
            %v2240 = vld [vmem:[#allocation22] sm:$0xf]
            %v2241 = vld [vmem:[#allocation22 + $0x4] sm:$0xf]
            %v2244 = vunpack.c.l.b16 %v2240
            %v2245 = vunpack.c.l.b16 %v2241
            %v2246 = vpack.c.b16 %v2245, %v2244
            %vm2247 = vcmask 130048
            %v2249 = vsel %vm2247, %v2246, 0
            %2251 = vmatpush.bf16.msra.mxu0 0
            %2252 = vmatpush.bf16.msra.mxu0 0
            %2253 = vmatpush.bf16.msra.mxu0 0
            %2254 = vmatpush.bf16.msra.mxu0 0
            %2255 = vmatpush.bf16.msra.mxu0 0
            %2256 = vmatpush.bf16.msra.mxu0 0
            %2257 = vmatpush.bf16.msra.mxu0 0
            %2258 = vmatpush.bf16.msra.mxu0 %v2063
            %2259 = vmatmul.bf16.gmra.mxu0 %v2249
            %v2260 = vpop.f32.mrf.mxu0
            %v2261 = vadd.f32 0.0, %v2260
            %v2262 = vpop.f32.mrf.mxu0
            %v2263 = vadd.f32 0.0, %v2262
            %2264 = vdwg.mxu0
            %v2265 = vpack.c.bf16 %v2263, %v2261
            %v2266 = vld [vmem:[#allocation25] sm:$0xf]
            %v2267 = vld [vmem:[#allocation25 + $0x4] sm:$0xf]
            %v2268 = vld [vmem:[#allocation25 + $0x8] sm:$0xf]
            %v2269 = vld [vmem:[#allocation25 + $0xc] sm:$0xf]
            %v2274 = vunpack.c.l.b16 %v2266
            %v2275 = vunpack.c.l.b16 %v2267
            %v2276 = vunpack.c.l.b16 %v2268
            %v2277 = vunpack.c.l.b16 %v2269
            %v2278 = vpack.c.b16 %v2275, %v2274
            %v2279 = vpack.c.b16 %v2277, %v2276
            %v2283 = vsel %vm1118, %v2265, 0
            %2285 = vmatpush.bf16.msra.mxu0 0
            %2286 = vmatpush.bf16.msra.mxu0 0
            %2287 = vmatpush.bf16.msra.mxu0 0
            %2288 = vmatpush.bf16.msra.mxu0 0
            %2289 = vmatpush.bf16.msra.mxu0 0
            %2290 = vmatpush.bf16.msra.mxu0 0
            %2291 = vmatpush.bf16.msra.mxu0 %v2279
            %2292 = vmatpush.bf16.msra.mxu0 %v2278
            %2293 = vmatmul.bf16.gmra.mxu0 %v2283
            %v2294 = vpop.f32.mrf.mxu0
            %v2295 = vadd.f32 0.0, %v2294
            %v2296 = vpop.f32.mrf.mxu0
            %v2297 = vadd.f32 0.0, %v2296
            %2298 = vdwg.mxu0
            %v2299 = vld [vmem:[#allocation24] sm:$0xf]
            %v2300 = vld [vmem:[#allocation24 + $0x4] sm:$0xf]
            %v2301 = vpack.c.bf16 %v2297, %v2295
            %v2302 = vld [vmem:[%s33] sm:$0x1]
            %v2304 = vperm.slane %v2302, 0
            %v2308 = vunpack.c.l.b16 %v2299
            %v2309 = vunpack.c.l.b16 %v2300
            %v2310 = vpack.c.b16 %v2309, %v2308
            %v2312 = vsel %vm2247, %v2310, 0
            %2314 = vmatpush.bf16.msra.mxu0 0
            %2315 = vmatpush.bf16.msra.mxu0 0
            %2316 = vmatpush.bf16.msra.mxu0 0
            %2317 = vmatpush.bf16.msra.mxu0 0
            %2318 = vmatpush.bf16.msra.mxu0 0
            %2319 = vmatpush.bf16.msra.mxu0 0
            %2320 = vmatpush.bf16.msra.mxu0 0
            %2321 = vmatpush.bf16.msra.mxu0 %v2301
            %2322 = vmatmul.bf16.gmra.mxu0 %v2312
            %v2323 = vpop.f32.mrf.mxu0
            %v2324 = vadd.f32 %v2304, %v2323
            %v2325 = vpop.f32.mrf.mxu0
            %v2326 = vadd.f32 %v2304, %v2325
            %2327 = vdwg.mxu0
            %v2328 = vmax.f32 %v2324, 0.0
            %v2329 = vmax.f32 %v2326, 0.0
            %v2330 = vld [vmem:[#allocation23] sm:$0xf]
            %v2331 = vld [vmem:[#allocation23 + $0x4] sm:$0xf]
            %v2332 = vpack.c.bf16 %v2329, %v2328
            %v2335 = vunpack.c.l.b16 %v2330
            %v2336 = vunpack.c.l.b16 %v2331
            %v2337 = vpack.c.b16 %v2336, %v2335
            %v2339 = vsel %vm2247, %v2337, 0
            %2341 = vmatpush.bf16.msra.mxu0 0
            %2342 = vmatpush.bf16.msra.mxu0 0
            %2343 = vmatpush.bf16.msra.mxu0 0
            %2344 = vmatpush.bf16.msra.mxu0 0
            %2345 = vmatpush.bf16.msra.mxu0 0
            %2346 = vmatpush.bf16.msra.mxu0 0
            %2347 = vmatpush.bf16.msra.mxu0 0
            %2348 = vmatpush.bf16.msra.mxu0 %v2332
            %2349 = vmatmul.bf16.gmra.mxu0 %v2339
            %v2350 = vpop.f32.mrf.mxu0
            %v2351 = vadd.f32 0.0, %v2350
            %v2352 = vpop.f32.mrf.mxu0
            %v2353 = vadd.f32 0.0, %v2352
            %2354 = vdwg.mxu0
            %v2355 = vld [vmem:[#allocation26] sm:$0xf]
            %v2356 = vld [vmem:[#allocation26 + $0x4] sm:$0xf]
            %v2357 = vld [vmem:[#allocation26 + $0x8] sm:$0xf]
            %v2358 = vld [vmem:[#allocation26 + $0xc] sm:$0xf]
            %v2359 = vpack.c.bf16 %v2353, %v2351
            %v2360 = vld [vmem:[#allocation27] sm:$0xf]
            %v2361 = vld [vmem:[#allocation27 + $0x4] sm:$0xf]
            %v2362 = vld [vmem:[#allocation27 + $0x8] sm:$0xf]
            %v2363 = vld [vmem:[#allocation27 + $0xc] sm:$0xf]
            %v2368 = vunpack.c.l.b16 %v2360
            %v2369 = vunpack.c.l.b16 %v2361
            %v2370 = vunpack.c.l.b16 %v2362
            %v2371 = vunpack.c.l.b16 %v2363
            %v2372 = vpack.c.b16 %v2369, %v2368
            %v2373 = vpack.c.b16 %v2371, %v2370
            %v2377 = vsel %vm1118, %v2359, 0
            %2379 = vmatpush.bf16.msra.mxu0 0
            %2380 = vmatpush.bf16.msra.mxu0 0
            %2381 = vmatpush.bf16.msra.mxu0 0
            %2382 = vmatpush.bf16.msra.mxu0 0
            %2383 = vmatpush.bf16.msra.mxu0 0
            %2384 = vmatpush.bf16.msra.mxu0 0
            %2385 = vmatpush.bf16.msra.mxu0 %v2373
            %2386 = vmatpush.bf16.msra.mxu0 %v2372
            %2387 = vmatmul.bf16.gmra.mxu0 %v2377
            %v2388 = vpop.f32.mrf.mxu0
            %v2389 = vadd.f32 0.0, %v2388
            %v2390 = vpop.f32.mrf.mxu0
            %v2391 = vadd.f32 0.0, %v2390
            %2392 = vdwg.mxu0
            %v2397 = vunpack.c.l.b16 %v2355
            %v2398 = vunpack.c.l.b16 %v2356
            %v2399 = vunpack.c.l.b16 %v2357
            %v2400 = vunpack.c.l.b16 %v2358
            %v2401 = vpack.c.b16 %v2398, %v2397
            %v2402 = vpack.c.b16 %v2400, %v2399
            %v2406 = vsel %vm1118, %v2063, 0
            %2408 = vmatpush.bf16.msra.mxu0 0
            %2409 = vmatpush.bf16.msra.mxu0 0
            %2410 = vmatpush.bf16.msra.mxu0 0
            %2411 = vmatpush.bf16.msra.mxu0 0
            %2412 = vmatpush.bf16.msra.mxu0 0
            %2413 = vmatpush.bf16.msra.mxu0 0
            %2414 = vmatpush.bf16.msra.mxu0 %v2402
            %2415 = vmatpush.bf16.msra.mxu0 %v2401
            %2416 = vmatmul.bf16.gmra.mxu0 %v2406
            %v2417 = vpop.f32.mrf.mxu0
            %v2418 = vadd.f32 %v2389, %v2417
            %v2419 = vpop.f32.mrf.mxu0
            %v2420 = vadd.f32 %v2391, %v2419
            %2421 = vdwg.mxu0
            %v2422 = vld [vmem:[#allocation17] sm:$0x1]
            %v2424 = vperm.slane %v2422, 0
            %v2426 = vadd.f32 %v2418, %v2424
            %v2427 = vadd.f32 %v2420, %v2424
            %v2428 = vld [vmem:[#allocation28] sm:$0x1]
            %v2429 = vpack.c.bf16 %v2427, %v2426
            %v2431 = vsel %vm2247, %v2428, 0
            %2433 = vmatpush.bf16.msra.mxu0 0
            %2434 = vmatpush.bf16.msra.mxu0 0
            %2435 = vmatpush.bf16.msra.mxu0 0
            %2436 = vmatpush.bf16.msra.mxu0 0
            %2437 = vmatpush.bf16.msra.mxu0 0
            %2438 = vmatpush.bf16.msra.mxu0 0
            %2439 = vmatpush.bf16.msra.mxu0 0
            %2440 = vmatpush.bf16.msra.mxu0 %v2429
            %2441 = vmatmul.bf16.gmra.mxu0 %v2431
            %v2442 = vpop.f32.mrf.mxu0
            %v2443 = vadd.f32 0.0, %v2442
            %v2444 = vpop.f32.mrf.mxu0
            %2445 = vdwg.mxu0
            %v2446 = vld [vmem:[%s41] sm:$0x3]
            %2448 = vset.pattern.permute.xlu0 0
            %2449 = vperm.xlu0 %2448, %v2446
            %v2450 = vpop.permute.xlu0 %2449
            %v2452 = vmul.f32 %v2443, %v2450
            %v2453 = vpack.c.bf16 %v2452, %v2452
            %v2454 = vld [vmem:[#allocation29] sm:$0xf]
            %v2455 = vld [vmem:[#allocation29 + $0x4] sm:$0xf]
            %v2456 = vld [vmem:[#allocation29 + $0x8] sm:$0xf]
            %v2457 = vld [vmem:[#allocation29 + $0xc] sm:$0xf]
            %v2458 = vld [vmem:[#allocation18] sm:$0x1]
            %v2460 = vperm.slane %v2458, 0
            %v2466 = vunpack.c.l.b16 %v2454
            %v2467 = vunpack.c.l.b16 %v2455
            %v2468 = vunpack.c.l.b16 %v2456
            %v2469 = vunpack.c.l.b16 %v2457
            %v2470 = vpack.c.b16 %v2467, %v2466
            %v2471 = vpack.c.b16 %v2469, %v2468
            %v2475 = vsel %vm1118, %v2453, 0
            %2477 = vmatpush.bf16.msra.mxu0 0
            %2478 = vmatpush.bf16.msra.mxu0 0
            %2479 = vmatpush.bf16.msra.mxu0 0
            %2480 = vmatpush.bf16.msra.mxu0 0
            %2481 = vmatpush.bf16.msra.mxu0 0
            %2482 = vmatpush.bf16.msra.mxu0 0
            %2483 = vmatpush.bf16.msra.mxu0 %v2471
            %2484 = vmatpush.bf16.msra.mxu0 %v2470
            %2485 = vmatmul.bf16.gmra.mxu0 %v2475
            %v2486 = vpop.f32.mrf.mxu0
            %v2487 = vadd.f32 %v2460, %v2486
            %v2488 = vpop.f32.mrf.mxu0
            %2489 = vdwg.mxu0
            %vm2490 = vcmp.gt.f32.partialorder %v2487, 0.0
            %v2491 = vmul.f32 %v2487, 0.01
            %v2492 = vsel %vm2490, %v2487, %v2491
            %v2493 = vpack.c.bf16 %v2492, %v2492
            %v2494 = vld [vmem:[#allocation30] sm:$0xf]
            %v2495 = vld [vmem:[#allocation30 + $0x4] sm:$0xf]
            %v2496 = vld [vmem:[#allocation30 + $0x8] sm:$0xf]
            %v2497 = vld [vmem:[#allocation30 + $0xc] sm:$0xf]
            %v2498 = vld [vmem:[#allocation20] sm:$0x1]
            %v2500 = vperm.slane %v2498, 0
            %v2506 = vunpack.c.l.b16 %v2494
            %v2507 = vunpack.c.l.b16 %v2495
            %v2508 = vunpack.c.l.b16 %v2496
            %v2509 = vunpack.c.l.b16 %v2497
            %v2510 = vpack.c.b16 %v2507, %v2506
            %v2511 = vpack.c.b16 %v2509, %v2508
            %v2515 = vsel %vm1118, %v2493, 0
            %2517 = vmatpush.bf16.msra.mxu0 0
            %2518 = vmatpush.bf16.msra.mxu0 0
            %2519 = vmatpush.bf16.msra.mxu0 0
            %2520 = vmatpush.bf16.msra.mxu0 0
            %2521 = vmatpush.bf16.msra.mxu0 0
            %2522 = vmatpush.bf16.msra.mxu0 0
            %2523 = vmatpush.bf16.msra.mxu0 %v2511
            %2524 = vmatpush.bf16.msra.mxu0 %v2510
            %2525 = vmatmul.bf16.gmra.mxu0 %v2515
            %v2526 = vpop.f32.mrf.mxu0
            %v2527 = vadd.f32 %v2500, %v2526
            %v2528 = vpop.f32.mrf.mxu0
            %2529 = vdwg.mxu0
            %2530 = vst [vmem:[#allocation21] sm:$0x3] %v2527
        $region156: #{tpu_custom_call.1} parent=103 // pred_fallthru
          _
        // Predicated region
        $region235: #{tpu_custom_call.1} parent=103 // pred_check
          %p2531 = pneg %p603
        $region236: #{tpu_custom_call.1} parent=103 // pred_check_branch
          %2533 = sbr.rel (%p2531) target = $region238
        $region237: #{tpu_custom_call.1} parent=103 // pred_region
          %2535 = vsyncadd [#allocation5], 0
          %s2537 = sshll.u32 [#allocation21], 4
          %s2538 = int_to_ptr.vmem [resolvable:$true] %s2537
          %s2539 = sshll.u32 %s61, 4
          %s2540 = int_to_ptr.hbm [resolvable:$true] %s2539
          %2542 = dma.vmem_to_hbm [thread:$0]  %s2538, 32, %s2540, [#allocation5]
        $region238: #{tpu_custom_call.1} parent=103 // pred_fallthru
          _
        // Predicated region
        $region239: #{tpu_custom_call.1} parent=103 // pred_check
          %p2543 = pneg %p603
        $region240: #{tpu_custom_call.1} parent=103 // pred_check_branch
          %2545 = sbr.rel (%p2543) target = $region242
        $region241: #{tpu_custom_call.1} parent=103 // pred_region
          %2547 = dma.done [#allocation5], 32
        $region242: #{tpu_custom_call.1} parent=103 // pred_fallthru
          _
      $region104: #{tpu_custom_call.1} parent=5 // pred_fallthru
        _
      %p2548 = scmp.le.s32.totalorder 2, %s84
      // Predicated region
      $region243: #{tpu_custom_call.1} parent=5 // pred_check
        %p2549 = pneg %p2548
      $region244: #{tpu_custom_call.1} parent=5 // pred_check_branch
        %2551 = sbr.rel (%p2549) target = $region246
      $region245: #{tpu_custom_call.1} parent=5 // pred_region
        %s2552 = ssub.s32 %s84, 2
      $region246: #{tpu_custom_call.1} parent=5 // pred_fallthru
        _
    $region6: #{tpu_custom_call.1} parent=1 // loop_footer
      %s88 = sadd.s32 1, %s84
    $region7: #{tpu_custom_call.1} parent=1 // loop_footer_branch
      %83 = sbr.rel target = $region3
    $region8: #{tpu_custom_call.1} parent=1 // loop_exit
      _
    %2553 = vsyncpa [#allocation4], 1
    %s2554 = scalar_lea.sflag [#allocation4], 1
    %2555 = vsyncpa %s2554, 1
    %2556 = vsyncpa [#allocation7], 1
    %s2557 = scalar_lea.sflag [#allocation7], 1
    %2558 = vsyncpa %s2557, 1
    %2559 = vsyncpa [#allocation10], 1
    %s2560 = scalar_lea.sflag [#allocation10], 1
    %2561 = vsyncpa %s2560, 1
    %2562 = vsyncpa [#allocation13], 1
    %s2563 = scalar_lea.sflag [#allocation13], 1
    %2564 = vsyncpa %s2563, 1
    %2565 = vsyncpa [#allocation16], 1
    %s2566 = scalar_lea.sflag [#allocation16], 1
    %2567 = vsyncpa %s2566, 1
    %2568 = vsyncpa [#allocation19], 1
    %2569 = vsyncpa [#allocation5], 1
    %s2570 = scalar_lea.sflag [#allocation5], 1
    %2571 = vsyncpa %s2570, 1

</llo_original>
